<compile_context>
chip_gen: v6e
topology: v6e:2x2x1
jax: 0.10.0
libtpu: 0.0.40
codegen_flags: <defaults>
</compile_context>

<pallas_src>
import functools

import jax
import jax.numpy as jnp
from jax.experimental import pallas as pl
from jax.experimental.pallas import tpu as pltpu  # noqa: F401


def _bf(x):
    return x.astype(jnp.bfloat16)


def _lstm_cell(gates, c_prev, H):
    """gates: (Bp, 4H) f32 pre-activations; c_prev None == zeros (first step)."""
    sg = jax.nn.sigmoid(gates)       # one EUP pass over the full 4H lane tile
    tg = jnp.tanh(gates)
    i = sg[:, 0 * H:1 * H]
    f = sg[:, 1 * H:2 * H]
    g = tg[:, 2 * H:3 * H]
    o = sg[:, 3 * H:4 * H]
    c = i * g if c_prev is None else f * c_prev + i * g
    h = o * jnp.tanh(c)
    return h, c


# ----------------------------- Pallas kernel ---------------------------------

def _fused_lstm_fc_kernel(*refs, T, B, Bp, H, V, num_layers, bidirectional):
    NG = 4 * H
    it = iter(refs)

    tok_ref = next(it)          # (T*Bp, 1) int32  (time-major, sublane padded)
    emb_ref = next(it)          # (V, E)    bf16

    # ---- embedding lookup as an exact one-hot matmul (single MXU push) -----
    toks = tok_ref[...]
    iota_v = jax.lax.broadcasted_iota(jnp.int32, (1, V), 1)
    onehot = (toks == iota_v).astype(jnp.bfloat16)                # (T*Bp, V)
    x_bf = _bf(jnp.dot(onehot, emb_ref[...],
                       preferred_element_type=jnp.float32))       # (T*Bp, E)

    prev_f = None     # per-timestep lists of (Bp, H) f32 hiddens of layer below
    prev_b = None
    feat_f = None
    feat_b = None

    for l in range(num_layers):
        last = (l == num_layers - 1)

        if bidirectional:
            if l == 0:
                wih_cat = next(it)[...]                           # (E, 8H) bf16
                whh_f = next(it)[...]                             # (H, 4H) bf16
                whh_b = next(it)[...]                             # (H, 4H) bf16
                b_cat = next(it)[...]                             # (1, 8H) f32
                gx = jnp.dot(x_bf, wih_cat,
                             preferred_element_type=jnp.float32) + b_cat
                gxs_f = [gx[t * Bp:(t + 1) * Bp, 0:NG] for t in range(T)]
                gxs_b = [gx[t * Bp:(t + 1) * Bp, NG:2 * NG] for t in range(T)]
            else:
                wih_fh = next(it)[...]                            # (H, 8H) bf16
                wih_bh = next(it)[...]                            # (H, 8H) bf16
                whh_f = next(it)[...]
                whh_b = next(it)[...]
                b_cat = next(it)[...]
                # Per-step direction-split projection: no sequence concat, the
                # extra tiny dots are off the recurrence's critical path.
                gxs_f, gxs_b = [], []
                for t in range(T):
                    g = (jnp.dot(_bf(prev_f[t]), wih_fh,
                                 preferred_element_type=jnp.float32)
                         + jnp.dot(_bf(prev_b[t]), wih_bh,
                                   preferred_element_type=jnp.float32)
                         + b_cat)                                 # (Bp, 8H)
                    gxs_f.append(g[:, 0:NG])
                    gxs_b.append(g[:, NG:2 * NG])

            if last:
                # Forward chain over all T steps (for h_{T-1}); the backward
                # direction contributes only its FIRST processed step
                # (x_{T-1} with zero state) to lstm_out[:, -1].
                h_f = c_f = None
                for t in range(T):
                    g = gxs_f[t]
                    if h_f is not None:
                        g = g + jnp.dot(_bf(h_f), whh_f,
                                        preferred_element_type=jnp.float32)
                    h_f, c_f = _lstm_cell(g, c_f, H)
                feat_f = h_f
                feat_b, _ = _lstm_cell(gxs_b[T - 1], None, H)
            else:
                # Lockstep the two independent direction chains so their
                # per-step MXU/EUP latencies overlap.
                h_f = c_f = h_b = c_b = None
                seq_f = [None] * T
                seq_b = [None] * T
                for s in range(T):
                    tf, tb = s, T - 1 - s
                    gf = gxs_f[tf]
                    gb = gxs_b[tb]
                    if h_f is not None:
                        gf = gf + jnp.dot(_bf(h_f), whh_f,
                                          preferred_element_type=jnp.float32)
                        gb = gb + jnp.dot(_bf(h_b), whh_b,
                                          preferred_element_type=jnp.float32)
                    h_f, c_f = _lstm_cell(gf, c_f, H)
                    h_b, c_b = _lstm_cell(gb, c_b, H)
                    seq_f[tf] = h_f
                    seq_b[tb] = h_b
                prev_f, prev_b = seq_f, seq_b

        else:  # unidirectional
            wih = next(it)[...]                                   # (Din, 4H)
            whh = next(it)[...]                                   # (H, 4H)
            b = next(it)[...]                                     # (1, 4H)
            if l == 0:
                gx = jnp.dot(x_bf, wih,
                             preferred_element_type=jnp.float32) + b
                gxs = [gx[t * Bp:(t + 1) * Bp, :] for t in range(T)]
            else:
                gxs = [jnp.dot(_bf(prev_f[t]), wih,
                               preferred_element_type=jnp.float32) + b
                       for t in range(T)]
            h = c = None
            seq = [None] * T
            for t in range(T):
                g = gxs[t]
                if h is not None:
                    g = g + jnp.dot(_bf(h), whh,
                                    preferred_element_type=jnp.float32)
                h, c = _lstm_cell(g, c, H)
                seq[t] = h
            if last:
                feat_f = h
            else:
                prev_f = seq

    # ---- final FC, direction-split so no lane concat is needed -------------
    fc_wf = next(it)[...]                                         # (H, C) bf16
    fc_wb = next(it)[...] if bidirectional else None
    fc_b = next(it)[...]                                          # (1, C) f32
    o_ref = next(it)

    logits = jnp.dot(_bf(feat_f), fc_wf, preferred_element_type=jnp.float32)
    if bidirectional:
        logits = logits + jnp.dot(_bf(feat_b), fc_wb,
                                  preferred_element_type=jnp.float32)
    logits = logits + fc_b
    o_ref[...] = logits[0:B, :].astype(o_ref.dtype)   # only real batch rows


# ------------------------------- wrappers -------------------------------------

def prepare_params(params, *, num_layers, bidirectional):
    """One-time host-side weight prep (transpose / fuse / cast), hoisted out of
    the jitted forward so no per-call XLA glue surrounds the kernel."""
    H = params["lstm"][0]["w_hh"].shape[1]
    C = params["fc_w"].shape[0]
    prepped = {"emb": _bf(params["embedding"])}

    layers = []
    for l, lp in enumerate(params["lstm"]):
        wih_f = jnp.transpose(lp["w_ih"])                         # (Din, 4H)
        whh_f = _bf(jnp.transpose(lp["w_hh"]))                    # (H, 4H)
        b_f = (lp["b_ih"] + lp["b_hh"]).reshape(1, 4 * H).astype(jnp.float32)
        if bidirectional:
            wih_b = jnp.transpose(lp["w_ih_rev"])
            whh_b = _bf(jnp.transpose(lp["w_hh_rev"]))
            b_b = (lp["b_ih_rev"] + lp["b_hh_rev"]).reshape(1, 4 * H).astype(jnp.float32)
            wih_cat = _bf(jnp.concatenate([wih_f, wih_b], axis=1))  # (Din, 8H)
            b_cat = jnp.concatenate([b_f, b_b], axis=1)             # (1, 8H)
            if l == 0:
                layers.append((wih_cat, whh_f, whh_b, b_cat))
            else:
                # Din == 2H: split rows into previous-layer fwd / bwd halves.
                layers.append((wih_cat[:H, :], wih_cat[H:, :],
                               whh_f, whh_b, b_cat))
        else:
            layers.append((_bf(wih_f), whh_f, b_f))
    prepped["layers"] = tuple(layers)

    fc_wt = jnp.transpose(params["fc_w"])                         # (H*dir, C)
    fc_b = params["fc_b"].reshape(1, C).astype(jnp.float32)
    if bidirectional:
        prepped["fc"] = (_bf(fc_wt[:H, :]), _bf(fc_wt[H:, :]), fc_b)
    else:
        prepped["fc"] = (_bf(fc_wt), fc_b)
    return prepped


def lstm_classifier_forward(prepped, tokens, *, num_layers, bidirectional):
    B, T = tokens.shape
    V, E = prepped["emb"].shape
    H = prepped["layers"][0][1].shape[0]       # whh_f is (H, 4H)
    C = prepped["fc"][-1].shape[1]
    Bp = ((B + 7) // 8) * 8                    # pad batch to a full sublane tile

    # Tiny token-id layout prep (time-major, sublane padded); the heavy
    # embedding gather happens inside the kernel as a one-hot matmul.
    tok_tm = jnp.transpose(tokens).astype(jnp.int32)              # (T, B)
    tok_pad = jnp.pad(tok_tm, ((0, 0), (0, Bp - B)))              # (T, Bp)
    tok_col = tok_pad.reshape(T * Bp, 1)

    args = [tok_col, prepped["emb"]]
    for layer_arrs in prepped["layers"]:
        args.extend(layer_arrs)
    args.extend(prepped["fc"])

    nd = 2 if bidirectional else 1
    flops = 2 * T * Bp * V * E                       # one-hot embedding matmul
    flops += 2 * T * Bp * E * (4 * H * nd)           # layer-0 input projection
    flops += (num_layers - 1) * 2 * T * Bp * (H * nd) * (4 * H * nd)
    flops += num_layers * nd * T * 2 * Bp * H * (4 * H)   # recurrent matmuls
    flops += 2 * Bp * (H * nd) * C                   # fc
    trans = num_layers * nd * T * Bp * (8 * H + 2 * H)    # sigmoid/tanh passes
    bytes_accessed = int(sum(a.size * a.dtype.itemsize for a in args) + B * C * 4)

    kernel = functools.partial(
        _fused_lstm_fc_kernel, T=T, B=B, Bp=Bp, H=H, V=V,
        num_layers=num_layers, bidirectional=bidirectional)

    # Gridless call: the whole model (~100 KB of weights + activations) stays
    # resident in VMEM; the only HBM write is the (B, C) logits.
    return pl.pallas_call(
        kernel,
        out_shape=jax.ShapeDtypeStruct((B, C), jnp.float32),
        cost_estimate=pl.CostEstimate(flops=flops, transcendentals=trans,
                                      bytes_accessed=bytes_accessed),
    )(*args)


# --------------------------- reference (pure JAX) ----------------------------

def _ref_lstm_dir(x_tbd, w_ih, w_hh, b_ih, b_hh):
    T, B, _ = x_tbd.shape
    H = w_hh.shape[1]

    def step(carry, xt):
        h, c = carry
        gates = xt @ w_ih.T + h @ w_hh.T + b_ih + b_hh
        i, f, g, o = jnp.split(gates, 4, axis=-1)
        c = jax.nn.sigmoid(f) * c + jax.nn.sigmoid(i) * jnp.tanh(g)
        h = jax.nn.sigmoid(o) * jnp.tanh(c)
        return (h, c), h

    _, hs = jax.lax.scan(step, (jnp.zeros((B, H)), jnp.zeros((B, H))), x_tbd)
    return hs


def ref_forward(params, tokens, *, num_layers, bidirectional):
    emb = jnp.take(params["embedding"], tokens, axis=0)
    x = jnp.transpose(emb, (1, 0, 2)).astype(jnp.float32)
    for layer in range(num_layers):
        lp = params["lstm"][layer]
        fwd = _ref_lstm_dir(x, lp["w_ih"], lp["w_hh"], lp["b_ih"], lp["b_hh"])
        if bidirectional:
            bwd = _ref_lstm_dir(x[::-1], lp["w_ih_rev"], lp["w_hh_rev"],
                                lp["b_ih_rev"], lp["b_hh_rev"])[::-1]
            x = jnp.concatenate([fwd, bwd], axis=-1)
        else:
            x = fwd
    return x[-1] @ params["fc_w"].T + params["fc_b"]


# --------------------------------- main ---------------------------------------

def init_params(key, vocab_size, embedding_dim, hidden_dim, num_layers,
                num_classes, bidirectional):
    num_dir = 2 if bidirectional else 1
    k = 1.0 / jnp.sqrt(hidden_dim)

    def uni(key, shape):
        return jax.random.uniform(key, shape, jnp.float32, -k, k)

    keys = iter(jax.random.split(key, 64))
    params = {
        "embedding": jax.random.normal(next(keys),
                                       (vocab_size, embedding_dim), jnp.float32),
        "lstm": [],
        "fc_w": uni(next(keys), (num_classes, hidden_dim * num_dir)),
        "fc_b": uni(next(keys), (num_classes,)),
    }
    for layer in range(num_layers):
        d_in = embedding_dim if layer == 0 else hidden_dim * num_dir
        lp = {
            "w_ih": uni(next(keys), (4 * hidden_dim, d_in)),
            "w_hh": uni(next(keys), (4 * hidden_dim, hidden_dim)),
            "b_ih": uni(next(keys), (4 * hidden_dim,)),
            "b_hh": uni(next(keys), (4 * hidden_dim,)),
        }
        if bidirectional:
            lp.update({
                "w_ih_rev": uni(next(keys), (4 * hidden_dim, d_in)),
                "w_hh_rev": uni(next(keys), (4 * hidden_dim, hidden_dim)),
                "b_ih_rev": uni(next(keys), (4 * hidden_dim,)),
                "b_hh_rev": uni(next(keys), (4 * hidden_dim,)),
            })
        params["lstm"].append(lp)
    return params


if __name__ == "__main__":
    # Module hyper-parameters (small, consistent with the PyTorch __init__).
    VOCAB, EMB, HIDDEN = 32, 16, 32
    NUM_LAYERS, NUM_CLASSES = 2, 4
    BIDIRECTIONAL, DROPOUT = True, 0.0   # dropout identity at inference
    B, T = 2, 8

    key = jax.random.PRNGKey(0)
    k_tok, k_par = jax.random.split(key)
    tokens = jax.random.randint(k_tok, (B, T), 0, VOCAB, dtype=jnp.int32)
    params = init_params(k_par, VOCAB, EMB, HIDDEN, NUM_LAYERS,
                         NUM_CLASSES, BIDIRECTIONAL)

    # One-time weight prep outside the jitted forward (perf item: no per-call
    # transposes / bias sums / casts around the microsecond-scale kernel).
    prepped = prepare_params(params, num_layers=NUM_LAYERS,
                             bidirectional=BIDIRECTIONAL)

    fwd = jax.jit(functools.partial(lstm_classifier_forward,
                                    num_layers=NUM_LAYERS,
                                    bidirectional=BIDIRECTIONAL))
    logits = fwd(prepped, tokens)
    logits = jax.block_until_ready(logits)

    ref = ref_forward(params, tokens,
                      num_layers=NUM_LAYERS, bidirectional=BIDIRECTIONAL)
    assert logits.shape == (B, NUM_CLASSES)
    assert jnp.allclose(logits, ref, atol=2e-2, rtol=2e-2), (logits, ref)

    print("KERNEL_OK")
</pallas_src>

<mosaic_0001>
module attributes {stable_mosaic.version = 11 : i64} {
  func.func @_fused_lstm_fc_kernel(%arg0: memref<64x1xi32, #tpu.memory_space<vmem>>, %arg1: memref<32x16xbf16, #tpu.memory_space<vmem>>, %arg2: memref<16x256xbf16, #tpu.memory_space<vmem>>, %arg3: memref<32x128xbf16, #tpu.memory_space<vmem>>, %arg4: memref<32x128xbf16, #tpu.memory_space<vmem>>, %arg5: memref<1x256xf32, #tpu.memory_space<vmem>>, %arg6: memref<32x256xbf16, #tpu.memory_space<vmem>>, %arg7: memref<32x256xbf16, #tpu.memory_space<vmem>>, %arg8: memref<32x128xbf16, #tpu.memory_space<vmem>>, %arg9: memref<32x128xbf16, #tpu.memory_space<vmem>>, %arg10: memref<1x256xf32, #tpu.memory_space<vmem>>, %arg11: memref<32x4xbf16, #tpu.memory_space<vmem>>, %arg12: memref<32x4xbf16, #tpu.memory_space<vmem>>, %arg13: memref<1x4xf32, #tpu.memory_space<vmem>>, %arg14: memref<2x4xf32, #tpu.memory_space<vmem>>) attributes {dimension_semantics = [], scalar_prefetch = 0 : i64, scratch_operands = 0 : i64, tpu.core_type = #tpu.core_type<tc>} {
    %c0 = arith.constant 0 : index
    %c0_0 = arith.constant 0 : index
    %0 = vector.load %arg0[%c0, %c0_0] : memref<64x1xi32, #tpu.memory_space<vmem>>, vector<64x1xi32>
    %1 = tpu.iota {dimensions = array<i32: 1>} : vector<1x32xi32>
    %2 = vector.broadcast %0 : vector<64x1xi32> to vector<64x32xi32>
    %3 = vector.broadcast %1 : vector<1x32xi32> to vector<64x32xi32>
    %4 = arith.cmpi eq, %2, %3 : vector<64x32xi32>
    %5 = arith.extui %4 : vector<64x32xi1> to vector<64x32xi32>
    %6 = arith.sitofp %5 : vector<64x32xi32> to vector<64x32xf32>
    %7 = arith.truncf %6 : vector<64x32xf32> to vector<64x32xbf16>
    %c0_1 = arith.constant 0 : index
    %c0_2 = arith.constant 0 : index
    %8 = vector.load %arg1[%c0_1, %c0_2] : memref<32x16xbf16, #tpu.memory_space<vmem>>, vector<32x16xbf16>
    %cst = arith.constant dense<0.000000e+00> : vector<64x16xf32>
    %9 = tpu.matmul %7, %8, %cst {dimension_numbers = #tpu.dot_dimension_numbers<[1], [0], [0], [1], [0, 0, 1, 1], [], []>} : vector<64x32xbf16>, vector<32x16xbf16>, vector<64x16xf32> -> vector<64x16xf32>
    %10 = arith.truncf %9 : vector<64x16xf32> to vector<64x16xbf16>
    %c0_3 = arith.constant 0 : index
    %c0_4 = arith.constant 0 : index
    %11 = vector.load %arg2[%c0_3, %c0_4] : memref<16x256xbf16, #tpu.memory_space<vmem>>, vector<16x256xbf16>
    %c0_5 = arith.constant 0 : index
    %c0_6 = arith.constant 0 : index
    %12 = vector.load %arg3[%c0_5, %c0_6] : memref<32x128xbf16, #tpu.memory_space<vmem>>, vector<32x128xbf16>
    %c0_7 = arith.constant 0 : index
    %c0_8 = arith.constant 0 : index
    %13 = vector.load %arg4[%c0_7, %c0_8] : memref<32x128xbf16, #tpu.memory_space<vmem>>, vector<32x128xbf16>
    %c0_9 = arith.constant 0 : index
    %c0_10 = arith.constant 0 : index
    %14 = vector.load %arg5[%c0_9, %c0_10] : memref<1x256xf32, #tpu.memory_space<vmem>>, vector<1x256xf32>
    %cst_11 = arith.constant dense<0.000000e+00> : vector<64x256xf32>
    %15 = tpu.matmul %10, %11, %cst_11 {dimension_numbers = #tpu.dot_dimension_numbers<[1], [0], [0], [1], [0, 0, 1, 1], [], []>} : vector<64x16xbf16>, vector<16x256xbf16>, vector<64x256xf32> -> vector<64x256xf32>
    %16 = vector.broadcast %14 : vector<1x256xf32> to vector<64x256xf32>
    %17 = arith.addf %15, %16 : vector<64x256xf32>
    %18 = vector.extract_strided_slice %17 {offsets = [0, 0], sizes = [8, 128], strides = [1, 1]} : vector<64x256xf32> to vector<8x128xf32>
    %19 = vector.extract_strided_slice %17 {offsets = [8, 0], sizes = [8, 128], strides = [1, 1]} : vector<64x256xf32> to vector<8x128xf32>
    %20 = vector.extract_strided_slice %17 {offsets = [16, 0], sizes = [8, 128], strides = [1, 1]} : vector<64x256xf32> to vector<8x128xf32>
    %21 = vector.extract_strided_slice %17 {offsets = [24, 0], sizes = [8, 128], strides = [1, 1]} : vector<64x256xf32> to vector<8x128xf32>
    %22 = vector.extract_strided_slice %17 {offsets = [32, 0], sizes = [8, 128], strides = [1, 1]} : vector<64x256xf32> to vector<8x128xf32>
    %23 = vector.extract_strided_slice %17 {offsets = [40, 0], sizes = [8, 128], strides = [1, 1]} : vector<64x256xf32> to vector<8x128xf32>
    %24 = vector.extract_strided_slice %17 {offsets = [48, 0], sizes = [8, 128], strides = [1, 1]} : vector<64x256xf32> to vector<8x128xf32>
    %25 = vector.extract_strided_slice %17 {offsets = [56, 0], sizes = [8, 128], strides = [1, 1]} : vector<64x256xf32> to vector<8x128xf32>
    %26 = vector.extract_strided_slice %17 {offsets = [0, 128], sizes = [8, 128], strides = [1, 1]} : vector<64x256xf32> to vector<8x128xf32>
    %27 = vector.extract_strided_slice %17 {offsets = [8, 128], sizes = [8, 128], strides = [1, 1]} : vector<64x256xf32> to vector<8x128xf32>
    %28 = vector.extract_strided_slice %17 {offsets = [16, 128], sizes = [8, 128], strides = [1, 1]} : vector<64x256xf32> to vector<8x128xf32>
    %29 = vector.extract_strided_slice %17 {offsets = [24, 128], sizes = [8, 128], strides = [1, 1]} : vector<64x256xf32> to vector<8x128xf32>
    %30 = vector.extract_strided_slice %17 {offsets = [32, 128], sizes = [8, 128], strides = [1, 1]} : vector<64x256xf32> to vector<8x128xf32>
    %31 = vector.extract_strided_slice %17 {offsets = [40, 128], sizes = [8, 128], strides = [1, 1]} : vector<64x256xf32> to vector<8x128xf32>
    %32 = vector.extract_strided_slice %17 {offsets = [48, 128], sizes = [8, 128], strides = [1, 1]} : vector<64x256xf32> to vector<8x128xf32>
    %33 = vector.extract_strided_slice %17 {offsets = [56, 128], sizes = [8, 128], strides = [1, 1]} : vector<64x256xf32> to vector<8x128xf32>
    %34 = arith.negf %18 : vector<8x128xf32>
    %35 = math.exp %34 : vector<8x128xf32>
    %cst_12 = arith.constant 1.000000e+00 : f32
    %36 = vector.broadcast %cst_12 : f32 to vector<8x128xf32>
    %37 = arith.addf %36, %35 : vector<8x128xf32>
    %38 = arith.divf %36, %37 : vector<8x128xf32>
    %39 = math.tanh %18 : vector<8x128xf32>
    %40 = vector.extract_strided_slice %38 {offsets = [0, 0], sizes = [8, 32], strides = [1, 1]} : vector<8x128xf32> to vector<8x32xf32>
    %41 = vector.extract_strided_slice %39 {offsets = [0, 64], sizes = [8, 32], strides = [1, 1]} : vector<8x128xf32> to vector<8x32xf32>
    %42 = vector.extract_strided_slice %38 {offsets = [0, 96], sizes = [8, 32], strides = [1, 1]} : vector<8x128xf32> to vector<8x32xf32>
    %43 = arith.mulf %40, %41 : vector<8x32xf32>
    %44 = math.tanh %43 : vector<8x32xf32>
    %45 = arith.mulf %42, %44 : vector<8x32xf32>
    %46 = arith.negf %33 : vector<8x128xf32>
    %47 = math.exp %46 : vector<8x128xf32>
    %cst_13 = arith.constant 1.000000e+00 : f32
    %48 = vector.broadcast %cst_13 : f32 to vector<8x128xf32>
    %49 = arith.addf %48, %47 : vector<8x128xf32>
    %50 = arith.divf %48, %49 : vector<8x128xf32>
    %51 = math.tanh %33 : vector<8x128xf32>
    %52 = vector.extract_strided_slice %50 {offsets = [0, 0], sizes = [8, 32], strides = [1, 1]} : vector<8x128xf32> to vector<8x32xf32>
    %53 = vector.extract_strided_slice %51 {offsets = [0, 64], sizes = [8, 32], strides = [1, 1]} : vector<8x128xf32> to vector<8x32xf32>
    %54 = vector.extract_strided_slice %50 {offsets = [0, 96], sizes = [8, 32], strides = [1, 1]} : vector<8x128xf32> to vector<8x32xf32>
    %55 = arith.mulf %52, %53 : vector<8x32xf32>
    %56 = math.tanh %55 : vector<8x32xf32>
    %57 = arith.mulf %54, %56 : vector<8x32xf32>
    %58 = arith.truncf %45 : vector<8x32xf32> to vector<8x32xbf16>
    %cst_14 = arith.constant dense<0.000000e+00> : vector<8x128xf32>
    %59 = tpu.matmul %58, %12, %cst_14 {dimension_numbers = #tpu.dot_dimension_numbers<[1], [0], [0], [1], [0, 0, 1, 1], [], []>} : vector<8x32xbf16>, vector<32x128xbf16>, vector<8x128xf32> -> vector<8x128xf32>
    %60 = arith.addf %19, %59 : vector<8x128xf32>
    %61 = arith.truncf %57 : vector<8x32xf32> to vector<8x32xbf16>
    %cst_15 = arith.constant dense<0.000000e+00> : vector<8x128xf32>
    %62 = tpu.matmul %61, %13, %cst_15 {dimension_numbers = #tpu.dot_dimension_numbers<[1], [0], [0], [1], [0, 0, 1, 1], [], []>} : vector<8x32xbf16>, vector<32x128xbf16>, vector<8x128xf32> -> vector<8x128xf32>
    %63 = arith.addf %32, %62 : vector<8x128xf32>
    %64 = arith.negf %60 : vector<8x128xf32>
    %65 = math.exp %64 : vector<8x128xf32>
    %cst_16 = arith.constant 1.000000e+00 : f32
    %66 = vector.broadcast %cst_16 : f32 to vector<8x128xf32>
    %67 = arith.addf %66, %65 : vector<8x128xf32>
    %68 = arith.divf %66, %67 : vector<8x128xf32>
    %69 = math.tanh %60 : vector<8x128xf32>
    %70 = vector.extract_strided_slice %68 {offsets = [0, 0], sizes = [8, 32], strides = [1, 1]} : vector<8x128xf32> to vector<8x32xf32>
    %71 = vector.extract_strided_slice %68 {offsets = [0, 32], sizes = [8, 32], strides = [1, 1]} : vector<8x128xf32> to vector<8x32xf32>
    %72 = vector.extract_strided_slice %69 {offsets = [0, 64], sizes = [8, 32], strides = [1, 1]} : vector<8x128xf32> to vector<8x32xf32>
    %73 = vector.extract_strided_slice %68 {offsets = [0, 96], sizes = [8, 32], strides = [1, 1]} : vector<8x128xf32> to vector<8x32xf32>
    %74 = arith.mulf %71, %43 : vector<8x32xf32>
    %75 = arith.mulf %70, %72 : vector<8x32xf32>
    %76 = arith.addf %74, %75 : vector<8x32xf32>
    %77 = math.tanh %76 : vector<8x32xf32>
    %78 = arith.mulf %73, %77 : vector<8x32xf32>
    %79 = arith.negf %63 : vector<8x128xf32>
    %80 = math.exp %79 : vector<8x128xf32>
    %cst_17 = arith.constant 1.000000e+00 : f32
    %81 = vector.broadcast %cst_17 : f32 to vector<8x128xf32>
    %82 = arith.addf %81, %80 : vector<8x128xf32>
    %83 = arith.divf %81, %82 : vector<8x128xf32>
    %84 = math.tanh %63 : vector<8x128xf32>
    %85 = vector.extract_strided_slice %83 {offsets = [0, 0], sizes = [8, 32], strides = [1, 1]} : vector<8x128xf32> to vector<8x32xf32>
    %86 = vector.extract_strided_slice %83 {offsets = [0, 32], sizes = [8, 32], strides = [1, 1]} : vector<8x128xf32> to vector<8x32xf32>
    %87 = vector.extract_strided_slice %84 {offsets = [0, 64], sizes = [8, 32], strides = [1, 1]} : vector<8x128xf32> to vector<8x32xf32>
    %88 = vector.extract_strided_slice %83 {offsets = [0, 96], sizes = [8, 32], strides = [1, 1]} : vector<8x128xf32> to vector<8x32xf32>
    %89 = arith.mulf %86, %55 : vector<8x32xf32>
    %90 = arith.mulf %85, %87 : vector<8x32xf32>
    %91 = arith.addf %89, %90 : vector<8x32xf32>
    %92 = math.tanh %91 : vector<8x32xf32>
    %93 = arith.mulf %88, %92 : vector<8x32xf32>
    %94 = arith.truncf %78 : vector<8x32xf32> to vector<8x32xbf16>
    %cst_18 = arith.constant dense<0.000000e+00> : vector<8x128xf32>
    %95 = tpu.matmul %94, %12, %cst_18 {dimension_numbers = #tpu.dot_dimension_numbers<[1], [0], [0], [1], [0, 0, 1, 1], [], []>} : vector<8x32xbf16>, vector<32x128xbf16>, vector<8x128xf32> -> vector<8x128xf32>
    %96 = arith.addf %20, %95 : vector<8x128xf32>
    %97 = arith.truncf %93 : vector<8x32xf32> to vector<8x32xbf16>
    %cst_19 = arith.constant dense<0.000000e+00> : vector<8x128xf32>
    %98 = tpu.matmul %97, %13, %cst_19 {dimension_numbers = #tpu.dot_dimension_numbers<[1], [0], [0], [1], [0, 0, 1, 1], [], []>} : vector<8x32xbf16>, vector<32x128xbf16>, vector<8x128xf32> -> vector<8x128xf32>
    %99 = arith.addf %31, %98 : vector<8x128xf32>
    %100 = arith.negf %96 : vector<8x128xf32>
    %101 = math.exp %100 : vector<8x128xf32>
    %cst_20 = arith.constant 1.000000e+00 : f32
    %102 = vector.broadcast %cst_20 : f32 to vector<8x128xf32>
    %103 = arith.addf %102, %101 : vector<8x128xf32>
    %104 = arith.divf %102, %103 : vector<8x128xf32>
    %105 = math.tanh %96 : vector<8x128xf32>
    %106 = vector.extract_strided_slice %104 {offsets = [0, 0], sizes = [8, 32], strides = [1, 1]} : vector<8x128xf32> to vector<8x32xf32>
    %107 = vector.extract_strided_slice %104 {offsets = [0, 32], sizes = [8, 32], strides = [1, 1]} : vector<8x128xf32> to vector<8x32xf32>
    %108 = vector.extract_strided_slice %105 {offsets = [0, 64], sizes = [8, 32], strides = [1, 1]} : vector<8x128xf32> to vector<8x32xf32>
    %109 = vector.extract_strided_slice %104 {offsets = [0, 96], sizes = [8, 32], strides = [1, 1]} : vector<8x128xf32> to vector<8x32xf32>
    %110 = arith.mulf %107, %76 : vector<8x32xf32>
    %111 = arith.mulf %106, %108 : vector<8x32xf32>
    %112 = arith.addf %110, %111 : vector<8x32xf32>
    %113 = math.tanh %112 : vector<8x32xf32>
    %114 = arith.mulf %109, %113 : vector<8x32xf32>
    %115 = arith.negf %99 : vector<8x128xf32>
    %116 = math.exp %115 : vector<8x128xf32>
    %cst_21 = arith.constant 1.000000e+00 : f32
    %117 = vector.broadcast %cst_21 : f32 to vector<8x128xf32>
    %118 = arith.addf %117, %116 : vector<8x128xf32>
    %119 = arith.divf %117, %118 : vector<8x128xf32>
    %120 = math.tanh %99 : vector<8x128xf32>
    %121 = vector.extract_strided_slice %119 {offsets = [0, 0], sizes = [8, 32], strides = [1, 1]} : vector<8x128xf32> to vector<8x32xf32>
    %122 = vector.extract_strided_slice %119 {offsets = [0, 32], sizes = [8, 32], strides = [1, 1]} : vector<8x128xf32> to vector<8x32xf32>
    %123 = vector.extract_strided_slice %120 {offsets = [0, 64], sizes = [8, 32], strides = [1, 1]} : vector<8x128xf32> to vector<8x32xf32>
    %124 = vector.extract_strided_slice %119 {offsets = [0, 96], sizes = [8, 32], strides = [1, 1]} : vector<8x128xf32> to vector<8x32xf32>
    %125 = arith.mulf %122, %91 : vector<8x32xf32>
    %126 = arith.mulf %121, %123 : vector<8x32xf32>
    %127 = arith.addf %125, %126 : vector<8x32xf32>
    %128 = math.tanh %127 : vector<8x32xf32>
    %129 = arith.mulf %124, %128 : vector<8x32xf32>
    %130 = arith.truncf %114 : vector<8x32xf32> to vector<8x32xbf16>
    %cst_22 = arith.constant dense<0.000000e+00> : vector<8x128xf32>
    %131 = tpu.matmul %130, %12, %cst_22 {dimension_numbers = #tpu.dot_dimension_numbers<[1], [0], [0], [1], [0, 0, 1, 1], [], []>} : vector<8x32xbf16>, vector<32x128xbf16>, vector<8x128xf32> -> vector<8x128xf32>
    %132 = arith.addf %21, %131 : vector<8x128xf32>
    %133 = arith.truncf %129 : vector<8x32xf32> to vector<8x32xbf16>
    %cst_23 = arith.constant dense<0.000000e+00> : vector<8x128xf32>
    %134 = tpu.matmul %133, %13, %cst_23 {dimension_numbers = #tpu.dot_dimension_numbers<[1], [0], [0], [1], [0, 0, 1, 1], [], []>} : vector<8x32xbf16>, vector<32x128xbf16>, vector<8x128xf32> -> vector<8x128xf32>
    %135 = arith.addf %30, %134 : vector<8x128xf32>
    %136 = arith.negf %132 : vector<8x128xf32>
    %137 = math.exp %136 : vector<8x128xf32>
    %cst_24 = arith.constant 1.000000e+00 : f32
    %138 = vector.broadcast %cst_24 : f32 to vector<8x128xf32>
    %139 = arith.addf %138, %137 : vector<8x128xf32>
    %140 = arith.divf %138, %139 : vector<8x128xf32>
    %141 = math.tanh %132 : vector<8x128xf32>
    %142 = vector.extract_strided_slice %140 {offsets = [0, 0], sizes = [8, 32], strides = [1, 1]} : vector<8x128xf32> to vector<8x32xf32>
    %143 = vector.extract_strided_slice %140 {offsets = [0, 32], sizes = [8, 32], strides = [1, 1]} : vector<8x128xf32> to vector<8x32xf32>
    %144 = vector.extract_strided_slice %141 {offsets = [0, 64], sizes = [8, 32], strides = [1, 1]} : vector<8x128xf32> to vector<8x32xf32>
    %145 = vector.extract_strided_slice %140 {offsets = [0, 96], sizes = [8, 32], strides = [1, 1]} : vector<8x128xf32> to vector<8x32xf32>
    %146 = arith.mulf %143, %112 : vector<8x32xf32>
    %147 = arith.mulf %142, %144 : vector<8x32xf32>
    %148 = arith.addf %146, %147 : vector<8x32xf32>
    %149 = math.tanh %148 : vector<8x32xf32>
    %150 = arith.mulf %145, %149 : vector<8x32xf32>
    %151 = arith.negf %135 : vector<8x128xf32>
    %152 = math.exp %151 : vector<8x128xf32>
    %cst_25 = arith.constant 1.000000e+00 : f32
    %153 = vector.broadcast %cst_25 : f32 to vector<8x128xf32>
    %154 = arith.addf %153, %152 : vector<8x128xf32>
    %155 = arith.divf %153, %154 : vector<8x128xf32>
    %156 = math.tanh %135 : vector<8x128xf32>
    %157 = vector.extract_strided_slice %155 {offsets = [0, 0], sizes = [8, 32], strides = [1, 1]} : vector<8x128xf32> to vector<8x32xf32>
    %158 = vector.extract_strided_slice %155 {offsets = [0, 32], sizes = [8, 32], strides = [1, 1]} : vector<8x128xf32> to vector<8x32xf32>
    %159 = vector.extract_strided_slice %156 {offsets = [0, 64], sizes = [8, 32], strides = [1, 1]} : vector<8x128xf32> to vector<8x32xf32>
    %160 = vector.extract_strided_slice %155 {offsets = [0, 96], sizes = [8, 32], strides = [1, 1]} : vector<8x128xf32> to vector<8x32xf32>
    %161 = arith.mulf %158, %127 : vector<8x32xf32>
    %162 = arith.mulf %157, %159 : vector<8x32xf32>
    %163 = arith.addf %161, %162 : vector<8x32xf32>
    %164 = math.tanh %163 : vector<8x32xf32>
    %165 = arith.mulf %160, %164 : vector<8x32xf32>
    %166 = arith.truncf %150 : vector<8x32xf32> to vector<8x32xbf16>
    %cst_26 = arith.constant dense<0.000000e+00> : vector<8x128xf32>
    %167 = tpu.matmul %166, %12, %cst_26 {dimension_numbers = #tpu.dot_dimension_numbers<[1], [0], [0], [1], [0, 0, 1, 1], [], []>} : vector<8x32xbf16>, vector<32x128xbf16>, vector<8x128xf32> -> vector<8x128xf32>
    %168 = arith.addf %22, %167 : vector<8x128xf32>
    %169 = arith.truncf %165 : vector<8x32xf32> to vector<8x32xbf16>
    %cst_27 = arith.constant dense<0.000000e+00> : vector<8x128xf32>
    %170 = tpu.matmul %169, %13, %cst_27 {dimension_numbers = #tpu.dot_dimension_numbers<[1], [0], [0], [1], [0, 0, 1, 1], [], []>} : vector<8x32xbf16>, vector<32x128xbf16>, vector<8x128xf32> -> vector<8x128xf32>
    %171 = arith.addf %29, %170 : vector<8x128xf32>
    %172 = arith.negf %168 : vector<8x128xf32>
    %173 = math.exp %172 : vector<8x128xf32>
    %cst_28 = arith.constant 1.000000e+00 : f32
    %174 = vector.broadcast %cst_28 : f32 to vector<8x128xf32>
    %175 = arith.addf %174, %173 : vector<8x128xf32>
    %176 = arith.divf %174, %175 : vector<8x128xf32>
    %177 = math.tanh %168 : vector<8x128xf32>
    %178 = vector.extract_strided_slice %176 {offsets = [0, 0], sizes = [8, 32], strides = [1, 1]} : vector<8x128xf32> to vector<8x32xf32>
    %179 = vector.extract_strided_slice %176 {offsets = [0, 32], sizes = [8, 32], strides = [1, 1]} : vector<8x128xf32> to vector<8x32xf32>
    %180 = vector.extract_strided_slice %177 {offsets = [0, 64], sizes = [8, 32], strides = [1, 1]} : vector<8x128xf32> to vector<8x32xf32>
    %181 = vector.extract_strided_slice %176 {offsets = [0, 96], sizes = [8, 32], strides = [1, 1]} : vector<8x128xf32> to vector<8x32xf32>
    %182 = arith.mulf %179, %148 : vector<8x32xf32>
    %183 = arith.mulf %178, %180 : vector<8x32xf32>
    %184 = arith.addf %182, %183 : vector<8x32xf32>
    %185 = math.tanh %184 : vector<8x32xf32>
    %186 = arith.mulf %181, %185 : vector<8x32xf32>
    %187 = arith.negf %171 : vector<8x128xf32>
    %188 = math.exp %187 : vector<8x128xf32>
    %cst_29 = arith.constant 1.000000e+00 : f32
    %189 = vector.broadcast %cst_29 : f32 to vector<8x128xf32>
    %190 = arith.addf %189, %188 : vector<8x128xf32>
    %191 = arith.divf %189, %190 : vector<8x128xf32>
    %192 = math.tanh %171 : vector<8x128xf32>
    %193 = vector.extract_strided_slice %191 {offsets = [0, 0], sizes = [8, 32], strides = [1, 1]} : vector<8x128xf32> to vector<8x32xf32>
    %194 = vector.extract_strided_slice %191 {offsets = [0, 32], sizes = [8, 32], strides = [1, 1]} : vector<8x128xf32> to vector<8x32xf32>
    %195 = vector.extract_strided_slice %192 {offsets = [0, 64], sizes = [8, 32], strides = [1, 1]} : vector<8x128xf32> to vector<8x32xf32>
    %196 = vector.extract_strided_slice %191 {offsets = [0, 96], sizes = [8, 32], strides = [1, 1]} : vector<8x128xf32> to vector<8x32xf32>
    %197 = arith.mulf %194, %163 : vector<8x32xf32>
    %198 = arith.mulf %193, %195 : vector<8x32xf32>
    %199 = arith.addf %197, %198 : vector<8x32xf32>
    %200 = math.tanh %199 : vector<8x32xf32>
    %201 = arith.mulf %196, %200 : vector<8x32xf32>
    %202 = arith.truncf %186 : vector<8x32xf32> to vector<8x32xbf16>
    %cst_30 = arith.constant dense<0.000000e+00> : vector<8x128xf32>
    %203 = tpu.matmul %202, %12, %cst_30 {dimension_numbers = #tpu.dot_dimension_numbers<[1], [0], [0], [1], [0, 0, 1, 1], [], []>} : vector<8x32xbf16>, vector<32x128xbf16>, vector<8x128xf32> -> vector<8x128xf32>
    %204 = arith.addf %23, %203 : vector<8x128xf32>
    %205 = arith.truncf %201 : vector<8x32xf32> to vector<8x32xbf16>
    %cst_31 = arith.constant dense<0.000000e+00> : vector<8x128xf32>
    %206 = tpu.matmul %205, %13, %cst_31 {dimension_numbers = #tpu.dot_dimension_numbers<[1], [0], [0], [1], [0, 0, 1, 1], [], []>} : vector<8x32xbf16>, vector<32x128xbf16>, vector<8x128xf32> -> vector<8x128xf32>
    %207 = arith.addf %28, %206 : vector<8x128xf32>
    %208 = arith.negf %204 : vector<8x128xf32>
    %209 = math.exp %208 : vector<8x128xf32>
    %cst_32 = arith.constant 1.000000e+00 : f32
    %210 = vector.broadcast %cst_32 : f32 to vector<8x128xf32>
    %211 = arith.addf %210, %209 : vector<8x128xf32>
    %212 = arith.divf %210, %211 : vector<8x128xf32>
    %213 = math.tanh %204 : vector<8x128xf32>
    %214 = vector.extract_strided_slice %212 {offsets = [0, 0], sizes = [8, 32], strides = [1, 1]} : vector<8x128xf32> to vector<8x32xf32>
    %215 = vector.extract_strided_slice %212 {offsets = [0, 32], sizes = [8, 32], strides = [1, 1]} : vector<8x128xf32> to vector<8x32xf32>
    %216 = vector.extract_strided_slice %213 {offsets = [0, 64], sizes = [8, 32], strides = [1, 1]} : vector<8x128xf32> to vector<8x32xf32>
    %217 = vector.extract_strided_slice %212 {offsets = [0, 96], sizes = [8, 32], strides = [1, 1]} : vector<8x128xf32> to vector<8x32xf32>
    %218 = arith.mulf %215, %184 : vector<8x32xf32>
    %219 = arith.mulf %214, %216 : vector<8x32xf32>
    %220 = arith.addf %218, %219 : vector<8x32xf32>
    %221 = math.tanh %220 : vector<8x32xf32>
    %222 = arith.mulf %217, %221 : vector<8x32xf32>
    %223 = arith.negf %207 : vector<8x128xf32>
    %224 = math.exp %223 : vector<8x128xf32>
    %cst_33 = arith.constant 1.000000e+00 : f32
    %225 = vector.broadcast %cst_33 : f32 to vector<8x128xf32>
    %226 = arith.addf %225, %224 : vector<8x128xf32>
    %227 = arith.divf %225, %226 : vector<8x128xf32>
    %228 = math.tanh %207 : vector<8x128xf32>
    %229 = vector.extract_strided_slice %227 {offsets = [0, 0], sizes = [8, 32], strides = [1, 1]} : vector<8x128xf32> to vector<8x32xf32>
    %230 = vector.extract_strided_slice %227 {offsets = [0, 32], sizes = [8, 32], strides = [1, 1]} : vector<8x128xf32> to vector<8x32xf32>
    %231 = vector.extract_strided_slice %228 {offsets = [0, 64], sizes = [8, 32], strides = [1, 1]} : vector<8x128xf32> to vector<8x32xf32>
    %232 = vector.extract_strided_slice %227 {offsets = [0, 96], sizes = [8, 32], strides = [1, 1]} : vector<8x128xf32> to vector<8x32xf32>
    %233 = arith.mulf %230, %199 : vector<8x32xf32>
    %234 = arith.mulf %229, %231 : vector<8x32xf32>
    %235 = arith.addf %233, %234 : vector<8x32xf32>
    %236 = math.tanh %235 : vector<8x32xf32>
    %237 = arith.mulf %232, %236 : vector<8x32xf32>
    %238 = arith.truncf %222 : vector<8x32xf32> to vector<8x32xbf16>
    %cst_34 = arith.constant dense<0.000000e+00> : vector<8x128xf32>
    %239 = tpu.matmul %238, %12, %cst_34 {dimension_numbers = #tpu.dot_dimension_numbers<[1], [0], [0], [1], [0, 0, 1, 1], [], []>} : vector<8x32xbf16>, vector<32x128xbf16>, vector<8x128xf32> -> vector<8x128xf32>
    %240 = arith.addf %24, %239 : vector<8x128xf32>
    %241 = arith.truncf %237 : vector<8x32xf32> to vector<8x32xbf16>
    %cst_35 = arith.constant dense<0.000000e+00> : vector<8x128xf32>
    %242 = tpu.matmul %241, %13, %cst_35 {dimension_numbers = #tpu.dot_dimension_numbers<[1], [0], [0], [1], [0, 0, 1, 1], [], []>} : vector<8x32xbf16>, vector<32x128xbf16>, vector<8x128xf32> -> vector<8x128xf32>
    %243 = arith.addf %27, %242 : vector<8x128xf32>
    %244 = arith.negf %240 : vector<8x128xf32>
    %245 = math.exp %244 : vector<8x128xf32>
    %cst_36 = arith.constant 1.000000e+00 : f32
    %246 = vector.broadcast %cst_36 : f32 to vector<8x128xf32>
    %247 = arith.addf %246, %245 : vector<8x128xf32>
    %248 = arith.divf %246, %247 : vector<8x128xf32>
    %249 = math.tanh %240 : vector<8x128xf32>
    %250 = vector.extract_strided_slice %248 {offsets = [0, 0], sizes = [8, 32], strides = [1, 1]} : vector<8x128xf32> to vector<8x32xf32>
    %251 = vector.extract_strided_slice %248 {offsets = [0, 32], sizes = [8, 32], strides = [1, 1]} : vector<8x128xf32> to vector<8x32xf32>
    %252 = vector.extract_strided_slice %249 {offsets = [0, 64], sizes = [8, 32], strides = [1, 1]} : vector<8x128xf32> to vector<8x32xf32>
    %253 = vector.extract_strided_slice %248 {offsets = [0, 96], sizes = [8, 32], strides = [1, 1]} : vector<8x128xf32> to vector<8x32xf32>
    %254 = arith.mulf %251, %220 : vector<8x32xf32>
    %255 = arith.mulf %250, %252 : vector<8x32xf32>
    %256 = arith.addf %254, %255 : vector<8x32xf32>
    %257 = math.tanh %256 : vector<8x32xf32>
    %258 = arith.mulf %253, %257 : vector<8x32xf32>
    %259 = arith.negf %243 : vector<8x128xf32>
    %260 = math.exp %259 : vector<8x128xf32>
    %cst_37 = arith.constant 1.000000e+00 : f32
    %261 = vector.broadcast %cst_37 : f32 to vector<8x128xf32>
    %262 = arith.addf %261, %260 : vector<8x128xf32>
    %263 = arith.divf %261, %262 : vector<8x128xf32>
    %264 = math.tanh %243 : vector<8x128xf32>
    %265 = vector.extract_strided_slice %263 {offsets = [0, 0], sizes = [8, 32], strides = [1, 1]} : vector<8x128xf32> to vector<8x32xf32>
    %266 = vector.extract_strided_slice %263 {offsets = [0, 32], sizes = [8, 32], strides = [1, 1]} : vector<8x128xf32> to vector<8x32xf32>
    %267 = vector.extract_strided_slice %264 {offsets = [0, 64], sizes = [8, 32], strides = [1, 1]} : vector<8x128xf32> to vector<8x32xf32>
    %268 = vector.extract_strided_slice %263 {offsets = [0, 96], sizes = [8, 32], strides = [1, 1]} : vector<8x128xf32> to vector<8x32xf32>
    %269 = arith.mulf %266, %235 : vector<8x32xf32>
    %270 = arith.mulf %265, %267 : vector<8x32xf32>
    %271 = arith.addf %269, %270 : vector<8x32xf32>
    %272 = math.tanh %271 : vector<8x32xf32>
    %273 = arith.mulf %268, %272 : vector<8x32xf32>
    %274 = arith.truncf %258 : vector<8x32xf32> to vector<8x32xbf16>
    %cst_38 = arith.constant dense<0.000000e+00> : vector<8x128xf32>
    %275 = tpu.matmul %274, %12, %cst_38 {dimension_numbers = #tpu.dot_dimension_numbers<[1], [0], [0], [1], [0, 0, 1, 1], [], []>} : vector<8x32xbf16>, vector<32x128xbf16>, vector<8x128xf32> -> vector<8x128xf32>
    %276 = arith.addf %25, %275 : vector<8x128xf32>
    %277 = arith.truncf %273 : vector<8x32xf32> to vector<8x32xbf16>
    %cst_39 = arith.constant dense<0.000000e+00> : vector<8x128xf32>
    %278 = tpu.matmul %277, %13, %cst_39 {dimension_numbers = #tpu.dot_dimension_numbers<[1], [0], [0], [1], [0, 0, 1, 1], [], []>} : vector<8x32xbf16>, vector<32x128xbf16>, vector<8x128xf32> -> vector<8x128xf32>
    %279 = arith.addf %26, %278 : vector<8x128xf32>
    %280 = arith.negf %276 : vector<8x128xf32>
    %281 = math.exp %280 : vector<8x128xf32>
    %cst_40 = arith.constant 1.000000e+00 : f32
    %282 = vector.broadcast %cst_40 : f32 to vector<8x128xf32>
    %283 = arith.addf %282, %281 : vector<8x128xf32>
    %284 = arith.divf %282, %283 : vector<8x128xf32>
    %285 = math.tanh %276 : vector<8x128xf32>
    %286 = vector.extract_strided_slice %284 {offsets = [0, 0], sizes = [8, 32], strides = [1, 1]} : vector<8x128xf32> to vector<8x32xf32>
    %287 = vector.extract_strided_slice %284 {offsets = [0, 32], sizes = [8, 32], strides = [1, 1]} : vector<8x128xf32> to vector<8x32xf32>
    %288 = vector.extract_strided_slice %285 {offsets = [0, 64], sizes = [8, 32], strides = [1, 1]} : vector<8x128xf32> to vector<8x32xf32>
    %289 = vector.extract_strided_slice %284 {offsets = [0, 96], sizes = [8, 32], strides = [1, 1]} : vector<8x128xf32> to vector<8x32xf32>
    %290 = arith.mulf %287, %256 : vector<8x32xf32>
    %291 = arith.mulf %286, %288 : vector<8x32xf32>
    %292 = arith.addf %290, %291 : vector<8x32xf32>
    %293 = math.tanh %292 : vector<8x32xf32>
    %294 = arith.mulf %289, %293 : vector<8x32xf32>
    %295 = arith.negf %279 : vector<8x128xf32>
    %296 = math.exp %295 : vector<8x128xf32>
    %cst_41 = arith.constant 1.000000e+00 : f32
    %297 = vector.broadcast %cst_41 : f32 to vector<8x128xf32>
    %298 = arith.addf %297, %296 : vector<8x128xf32>
    %299 = arith.divf %297, %298 : vector<8x128xf32>
    %300 = math.tanh %279 : vector<8x128xf32>
    %301 = vector.extract_strided_slice %299 {offsets = [0, 0], sizes = [8, 32], strides = [1, 1]} : vector<8x128xf32> to vector<8x32xf32>
    %302 = vector.extract_strided_slice %299 {offsets = [0, 32], sizes = [8, 32], strides = [1, 1]} : vector<8x128xf32> to vector<8x32xf32>
    %303 = vector.extract_strided_slice %300 {offsets = [0, 64], sizes = [8, 32], strides = [1, 1]} : vector<8x128xf32> to vector<8x32xf32>
    %304 = vector.extract_strided_slice %299 {offsets = [0, 96], sizes = [8, 32], strides = [1, 1]} : vector<8x128xf32> to vector<8x32xf32>
    %305 = arith.mulf %302, %271 : vector<8x32xf32>
    %306 = arith.mulf %301, %303 : vector<8x32xf32>
    %307 = arith.addf %305, %306 : vector<8x32xf32>
    %308 = math.tanh %307 : vector<8x32xf32>
    %309 = arith.mulf %304, %308 : vector<8x32xf32>
    %c0_42 = arith.constant 0 : index
    %c0_43 = arith.constant 0 : index
    %310 = vector.load %arg6[%c0_42, %c0_43] : memref<32x256xbf16, #tpu.memory_space<vmem>>, vector<32x256xbf16>
    %c0_44 = arith.constant 0 : index
    %c0_45 = arith.constant 0 : index
    %311 = vector.load %arg7[%c0_44, %c0_45] : memref<32x256xbf16, #tpu.memory_space<vmem>>, vector<32x256xbf16>
    %c0_46 = arith.constant 0 : index
    %c0_47 = arith.constant 0 : index
    %312 = vector.load %arg8[%c0_46, %c0_47] : memref<32x128xbf16, #tpu.memory_space<vmem>>, vector<32x128xbf16>
    %c0_48 = arith.constant 0 : index
    %c0_49 = arith.constant 0 : index
    %313 = vector.load %arg10[%c0_48, %c0_49] : memref<1x256xf32, #tpu.memory_space<vmem>>, vector<1x256xf32>
    %314 = arith.truncf %45 : vector<8x32xf32> to vector<8x32xbf16>
    %cst_50 = arith.constant dense<0.000000e+00> : vector<8x256xf32>
    %315 = tpu.matmul %314, %310, %cst_50 {dimension_numbers = #tpu.dot_dimension_numbers<[1], [0], [0], [1], [0, 0, 1, 1], [], []>} : vector<8x32xbf16>, vector<32x256xbf16>, vector<8x256xf32> -> vector<8x256xf32>
    %316 = arith.truncf %309 : vector<8x32xf32> to vector<8x32xbf16>
    %cst_51 = arith.constant dense<0.000000e+00> : vector<8x256xf32>
    %317 = tpu.matmul %316, %311, %cst_51 {dimension_numbers = #tpu.dot_dimension_numbers<[1], [0], [0], [1], [0, 0, 1, 1], [], []>} : vector<8x32xbf16>, vector<32x256xbf16>, vector<8x256xf32> -> vector<8x256xf32>
    %318 = arith.addf %315, %317 : vector<8x256xf32>
    %319 = vector.broadcast %313 : vector<1x256xf32> to vector<8x256xf32>
    %320 = arith.addf %318, %319 : vector<8x256xf32>
    %321 = vector.extract_strided_slice %320 {offsets = [0, 0], sizes = [8, 128], strides = [1, 1]} : vector<8x256xf32> to vector<8x128xf32>
    %322 = arith.truncf %78 : vector<8x32xf32> to vector<8x32xbf16>
    %cst_52 = arith.constant dense<0.000000e+00> : vector<8x256xf32>
    %323 = tpu.matmul %322, %310, %cst_52 {dimension_numbers = #tpu.dot_dimension_numbers<[1], [0], [0], [1], [0, 0, 1, 1], [], []>} : vector<8x32xbf16>, vector<32x256xbf16>, vector<8x256xf32> -> vector<8x256xf32>
    %324 = arith.truncf %273 : vector<8x32xf32> to vector<8x32xbf16>
    %cst_53 = arith.constant dense<0.000000e+00> : vector<8x256xf32>
    %325 = tpu.matmul %324, %311, %cst_53 {dimension_numbers = #tpu.dot_dimension_numbers<[1], [0], [0], [1], [0, 0, 1, 1], [], []>} : vector<8x32xbf16>, vector<32x256xbf16>, vector<8x256xf32> -> vector<8x256xf32>
    %326 = arith.addf %323, %325 : vector<8x256xf32>
    %327 = vector.broadcast %313 : vector<1x256xf32> to vector<8x256xf32>
    %328 = arith.addf %326, %327 : vector<8x256xf32>
    %329 = vector.extract_strided_slice %328 {offsets = [0, 0], sizes = [8, 128], strides = [1, 1]} : vector<8x256xf32> to vector<8x128xf32>
    %330 = arith.truncf %114 : vector<8x32xf32> to vector<8x32xbf16>
    %cst_54 = arith.constant dense<0.000000e+00> : vector<8x256xf32>
    %331 = tpu.matmul %330, %310, %cst_54 {dimension_numbers = #tpu.dot_dimension_numbers<[1], [0], [0], [1], [0, 0, 1, 1], [], []>} : vector<8x32xbf16>, vector<32x256xbf16>, vector<8x256xf32> -> vector<8x256xf32>
    %332 = arith.truncf %237 : vector<8x32xf32> to vector<8x32xbf16>
    %cst_55 = arith.constant dense<0.000000e+00> : vector<8x256xf32>
    %333 = tpu.matmul %332, %311, %cst_55 {dimension_numbers = #tpu.dot_dimension_numbers<[1], [0], [0], [1], [0, 0, 1, 1], [], []>} : vector<8x32xbf16>, vector<32x256xbf16>, vector<8x256xf32> -> vector<8x256xf32>
    %334 = arith.addf %331, %333 : vector<8x256xf32>
    %335 = vector.broadcast %313 : vector<1x256xf32> to vector<8x256xf32>
    %336 = arith.addf %334, %335 : vector<8x256xf32>
    %337 = vector.extract_strided_slice %336 {offsets = [0, 0], sizes = [8, 128], strides = [1, 1]} : vector<8x256xf32> to vector<8x128xf32>
    %338 = arith.truncf %150 : vector<8x32xf32> to vector<8x32xbf16>
    %cst_56 = arith.constant dense<0.000000e+00> : vector<8x256xf32>
    %339 = tpu.matmul %338, %310, %cst_56 {dimension_numbers = #tpu.dot_dimension_numbers<[1], [0], [0], [1], [0, 0, 1, 1], [], []>} : vector<8x32xbf16>, vector<32x256xbf16>, vector<8x256xf32> -> vector<8x256xf32>
    %340 = arith.truncf %201 : vector<8x32xf32> to vector<8x32xbf16>
    %cst_57 = arith.constant dense<0.000000e+00> : vector<8x256xf32>
    %341 = tpu.matmul %340, %311, %cst_57 {dimension_numbers = #tpu.dot_dimension_numbers<[1], [0], [0], [1], [0, 0, 1, 1], [], []>} : vector<8x32xbf16>, vector<32x256xbf16>, vector<8x256xf32> -> vector<8x256xf32>
    %342 = arith.addf %339, %341 : vector<8x256xf32>
    %343 = vector.broadcast %313 : vector<1x256xf32> to vector<8x256xf32>
    %344 = arith.addf %342, %343 : vector<8x256xf32>
    %345 = vector.extract_strided_slice %344 {offsets = [0, 0], sizes = [8, 128], strides = [1, 1]} : vector<8x256xf32> to vector<8x128xf32>
    %346 = arith.truncf %186 : vector<8x32xf32> to vector<8x32xbf16>
    %cst_58 = arith.constant dense<0.000000e+00> : vector<8x256xf32>
    %347 = tpu.matmul %346, %310, %cst_58 {dimension_numbers = #tpu.dot_dimension_numbers<[1], [0], [0], [1], [0, 0, 1, 1], [], []>} : vector<8x32xbf16>, vector<32x256xbf16>, vector<8x256xf32> -> vector<8x256xf32>
    %348 = arith.truncf %165 : vector<8x32xf32> to vector<8x32xbf16>
    %cst_59 = arith.constant dense<0.000000e+00> : vector<8x256xf32>
    %349 = tpu.matmul %348, %311, %cst_59 {dimension_numbers = #tpu.dot_dimension_numbers<[1], [0], [0], [1], [0, 0, 1, 1], [], []>} : vector<8x32xbf16>, vector<32x256xbf16>, vector<8x256xf32> -> vector<8x256xf32>
    %350 = arith.addf %347, %349 : vector<8x256xf32>
    %351 = vector.broadcast %313 : vector<1x256xf32> to vector<8x256xf32>
    %352 = arith.addf %350, %351 : vector<8x256xf32>
    %353 = vector.extract_strided_slice %352 {offsets = [0, 0], sizes = [8, 128], strides = [1, 1]} : vector<8x256xf32> to vector<8x128xf32>
    %354 = arith.truncf %222 : vector<8x32xf32> to vector<8x32xbf16>
    %cst_60 = arith.constant dense<0.000000e+00> : vector<8x256xf32>
    %355 = tpu.matmul %354, %310, %cst_60 {dimension_numbers = #tpu.dot_dimension_numbers<[1], [0], [0], [1], [0, 0, 1, 1], [], []>} : vector<8x32xbf16>, vector<32x256xbf16>, vector<8x256xf32> -> vector<8x256xf32>
    %356 = arith.truncf %129 : vector<8x32xf32> to vector<8x32xbf16>
    %cst_61 = arith.constant dense<0.000000e+00> : vector<8x256xf32>
    %357 = tpu.matmul %356, %311, %cst_61 {dimension_numbers = #tpu.dot_dimension_numbers<[1], [0], [0], [1], [0, 0, 1, 1], [], []>} : vector<8x32xbf16>, vector<32x256xbf16>, vector<8x256xf32> -> vector<8x256xf32>
    %358 = arith.addf %355, %357 : vector<8x256xf32>
    %359 = vector.broadcast %313 : vector<1x256xf32> to vector<8x256xf32>
    %360 = arith.addf %358, %359 : vector<8x256xf32>
    %361 = vector.extract_strided_slice %360 {offsets = [0, 0], sizes = [8, 128], strides = [1, 1]} : vector<8x256xf32> to vector<8x128xf32>
    %362 = arith.truncf %258 : vector<8x32xf32> to vector<8x32xbf16>
    %cst_62 = arith.constant dense<0.000000e+00> : vector<8x256xf32>
    %363 = tpu.matmul %362, %310, %cst_62 {dimension_numbers = #tpu.dot_dimension_numbers<[1], [0], [0], [1], [0, 0, 1, 1], [], []>} : vector<8x32xbf16>, vector<32x256xbf16>, vector<8x256xf32> -> vector<8x256xf32>
    %364 = arith.truncf %93 : vector<8x32xf32> to vector<8x32xbf16>
    %cst_63 = arith.constant dense<0.000000e+00> : vector<8x256xf32>
    %365 = tpu.matmul %364, %311, %cst_63 {dimension_numbers = #tpu.dot_dimension_numbers<[1], [0], [0], [1], [0, 0, 1, 1], [], []>} : vector<8x32xbf16>, vector<32x256xbf16>, vector<8x256xf32> -> vector<8x256xf32>
    %366 = arith.addf %363, %365 : vector<8x256xf32>
    %367 = vector.broadcast %313 : vector<1x256xf32> to vector<8x256xf32>
    %368 = arith.addf %366, %367 : vector<8x256xf32>
    %369 = vector.extract_strided_slice %368 {offsets = [0, 0], sizes = [8, 128], strides = [1, 1]} : vector<8x256xf32> to vector<8x128xf32>
    %370 = arith.truncf %294 : vector<8x32xf32> to vector<8x32xbf16>
    %cst_64 = arith.constant dense<0.000000e+00> : vector<8x256xf32>
    %371 = tpu.matmul %370, %310, %cst_64 {dimension_numbers = #tpu.dot_dimension_numbers<[1], [0], [0], [1], [0, 0, 1, 1], [], []>} : vector<8x32xbf16>, vector<32x256xbf16>, vector<8x256xf32> -> vector<8x256xf32>
    %372 = arith.truncf %57 : vector<8x32xf32> to vector<8x32xbf16>
    %cst_65 = arith.constant dense<0.000000e+00> : vector<8x256xf32>
    %373 = tpu.matmul %372, %311, %cst_65 {dimension_numbers = #tpu.dot_dimension_numbers<[1], [0], [0], [1], [0, 0, 1, 1], [], []>} : vector<8x32xbf16>, vector<32x256xbf16>, vector<8x256xf32> -> vector<8x256xf32>
    %374 = arith.addf %371, %373 : vector<8x256xf32>
    %375 = vector.broadcast %313 : vector<1x256xf32> to vector<8x256xf32>
    %376 = arith.addf %374, %375 : vector<8x256xf32>
    %377 = vector.extract_strided_slice %376 {offsets = [0, 0], sizes = [8, 128], strides = [1, 1]} : vector<8x256xf32> to vector<8x128xf32>
    %378 = vector.extract_strided_slice %376 {offsets = [0, 128], sizes = [8, 128], strides = [1, 1]} : vector<8x256xf32> to vector<8x128xf32>
    %379 = arith.negf %321 : vector<8x128xf32>
    %380 = math.exp %379 : vector<8x128xf32>
    %cst_66 = arith.constant 1.000000e+00 : f32
    %381 = vector.broadcast %cst_66 : f32 to vector<8x128xf32>
    %382 = arith.addf %381, %380 : vector<8x128xf32>
    %383 = arith.divf %381, %382 : vector<8x128xf32>
    %384 = math.tanh %321 : vector<8x128xf32>
    %385 = vector.extract_strided_slice %383 {offsets = [0, 0], sizes = [8, 32], strides = [1, 1]} : vector<8x128xf32> to vector<8x32xf32>
    %386 = vector.extract_strided_slice %384 {offsets = [0, 64], sizes = [8, 32], strides = [1, 1]} : vector<8x128xf32> to vector<8x32xf32>
    %387 = vector.extract_strided_slice %383 {offsets = [0, 96], sizes = [8, 32], strides = [1, 1]} : vector<8x128xf32> to vector<8x32xf32>
    %388 = arith.mulf %385, %386 : vector<8x32xf32>
    %389 = math.tanh %388 : vector<8x32xf32>
    %390 = arith.mulf %387, %389 : vector<8x32xf32>
    %391 = arith.truncf %390 : vector<8x32xf32> to vector<8x32xbf16>
    %cst_67 = arith.constant dense<0.000000e+00> : vector<8x128xf32>
    %392 = tpu.matmul %391, %312, %cst_67 {dimension_numbers = #tpu.dot_dimension_numbers<[1], [0], [0], [1], [0, 0, 1, 1], [], []>} : vector<8x32xbf16>, vector<32x128xbf16>, vector<8x128xf32> -> vector<8x128xf32>
    %393 = arith.addf %329, %392 : vector<8x128xf32>
    %394 = arith.negf %393 : vector<8x128xf32>
    %395 = math.exp %394 : vector<8x128xf32>
    %cst_68 = arith.constant 1.000000e+00 : f32
    %396 = vector.broadcast %cst_68 : f32 to vector<8x128xf32>
    %397 = arith.addf %396, %395 : vector<8x128xf32>
    %398 = arith.divf %396, %397 : vector<8x128xf32>
    %399 = math.tanh %393 : vector<8x128xf32>
    %400 = vector.extract_strided_slice %398 {offsets = [0, 0], sizes = [8, 32], strides = [1, 1]} : vector<8x128xf32> to vector<8x32xf32>
    %401 = vector.extract_strided_slice %398 {offsets = [0, 32], sizes = [8, 32], strides = [1, 1]} : vector<8x128xf32> to vector<8x32xf32>
    %402 = vector.extract_strided_slice %399 {offsets = [0, 64], sizes = [8, 32], strides = [1, 1]} : vector<8x128xf32> to vector<8x32xf32>
    %403 = vector.extract_strided_slice %398 {offsets = [0, 96], sizes = [8, 32], strides = [1, 1]} : vector<8x128xf32> to vector<8x32xf32>
    %404 = arith.mulf %401, %388 : vector<8x32xf32>
    %405 = arith.mulf %400, %402 : vector<8x32xf32>
    %406 = arith.addf %404, %405 : vector<8x32xf32>
    %407 = math.tanh %406 : vector<8x32xf32>
    %408 = arith.mulf %403, %407 : vector<8x32xf32>
    %409 = arith.truncf %408 : vector<8x32xf32> to vector<8x32xbf16>
    %cst_69 = arith.constant dense<0.000000e+00> : vector<8x128xf32>
    %410 = tpu.matmul %409, %312, %cst_69 {dimension_numbers = #tpu.dot_dimension_numbers<[1], [0], [0], [1], [0, 0, 1, 1], [], []>} : vector<8x32xbf16>, vector<32x128xbf16>, vector<8x128xf32> -> vector<8x128xf32>
    %411 = arith.addf %337, %410 : vector<8x128xf32>
    %412 = arith.negf %411 : vector<8x128xf32>
    %413 = math.exp %412 : vector<8x128xf32>
    %cst_70 = arith.constant 1.000000e+00 : f32
    %414 = vector.broadcast %cst_70 : f32 to vector<8x128xf32>
    %415 = arith.addf %414, %413 : vector<8x128xf32>
    %416 = arith.divf %414, %415 : vector<8x128xf32>
    %417 = math.tanh %411 : vector<8x128xf32>
    %418 = vector.extract_strided_slice %416 {offsets = [0, 0], sizes = [8, 32], strides = [1, 1]} : vector<8x128xf32> to vector<8x32xf32>
    %419 = vector.extract_strided_slice %416 {offsets = [0, 32], sizes = [8, 32], strides = [1, 1]} : vector<8x128xf32> to vector<8x32xf32>
    %420 = vector.extract_strided_slice %417 {offsets = [0, 64], sizes = [8, 32], strides = [1, 1]} : vector<8x128xf32> to vector<8x32xf32>
    %421 = vector.extract_strided_slice %416 {offsets = [0, 96], sizes = [8, 32], strides = [1, 1]} : vector<8x128xf32> to vector<8x32xf32>
    %422 = arith.mulf %419, %406 : vector<8x32xf32>
    %423 = arith.mulf %418, %420 : vector<8x32xf32>
    %424 = arith.addf %422, %423 : vector<8x32xf32>
    %425 = math.tanh %424 : vector<8x32xf32>
    %426 = arith.mulf %421, %425 : vector<8x32xf32>
    %427 = arith.truncf %426 : vector<8x32xf32> to vector<8x32xbf16>
    %cst_71 = arith.constant dense<0.000000e+00> : vector<8x128xf32>
    %428 = tpu.matmul %427, %312, %cst_71 {dimension_numbers = #tpu.dot_dimension_numbers<[1], [0], [0], [1], [0, 0, 1, 1], [], []>} : vector<8x32xbf16>, vector<32x128xbf16>, vector<8x128xf32> -> vector<8x128xf32>
    %429 = arith.addf %345, %428 : vector<8x128xf32>
    %430 = arith.negf %429 : vector<8x128xf32>
    %431 = math.exp %430 : vector<8x128xf32>
    %cst_72 = arith.constant 1.000000e+00 : f32
    %432 = vector.broadcast %cst_72 : f32 to vector<8x128xf32>
    %433 = arith.addf %432, %431 : vector<8x128xf32>
    %434 = arith.divf %432, %433 : vector<8x128xf32>
    %435 = math.tanh %429 : vector<8x128xf32>
    %436 = vector.extract_strided_slice %434 {offsets = [0, 0], sizes = [8, 32], strides = [1, 1]} : vector<8x128xf32> to vector<8x32xf32>
    %437 = vector.extract_strided_slice %434 {offsets = [0, 32], sizes = [8, 32], strides = [1, 1]} : vector<8x128xf32> to vector<8x32xf32>
    %438 = vector.extract_strided_slice %435 {offsets = [0, 64], sizes = [8, 32], strides = [1, 1]} : vector<8x128xf32> to vector<8x32xf32>
    %439 = vector.extract_strided_slice %434 {offsets = [0, 96], sizes = [8, 32], strides = [1, 1]} : vector<8x128xf32> to vector<8x32xf32>
    %440 = arith.mulf %437, %424 : vector<8x32xf32>
    %441 = arith.mulf %436, %438 : vector<8x32xf32>
    %442 = arith.addf %440, %441 : vector<8x32xf32>
    %443 = math.tanh %442 : vector<8x32xf32>
    %444 = arith.mulf %439, %443 : vector<8x32xf32>
    %445 = arith.truncf %444 : vector<8x32xf32> to vector<8x32xbf16>
    %cst_73 = arith.constant dense<0.000000e+00> : vector<8x128xf32>
    %446 = tpu.matmul %445, %312, %cst_73 {dimension_numbers = #tpu.dot_dimension_numbers<[1], [0], [0], [1], [0, 0, 1, 1], [], []>} : vector<8x32xbf16>, vector<32x128xbf16>, vector<8x128xf32> -> vector<8x128xf32>
    %447 = arith.addf %353, %446 : vector<8x128xf32>
    %448 = arith.negf %447 : vector<8x128xf32>
    %449 = math.exp %448 : vector<8x128xf32>
    %cst_74 = arith.constant 1.000000e+00 : f32
    %450 = vector.broadcast %cst_74 : f32 to vector<8x128xf32>
    %451 = arith.addf %450, %449 : vector<8x128xf32>
    %452 = arith.divf %450, %451 : vector<8x128xf32>
    %453 = math.tanh %447 : vector<8x128xf32>
    %454 = vector.extract_strided_slice %452 {offsets = [0, 0], sizes = [8, 32], strides = [1, 1]} : vector<8x128xf32> to vector<8x32xf32>
    %455 = vector.extract_strided_slice %452 {offsets = [0, 32], sizes = [8, 32], strides = [1, 1]} : vector<8x128xf32> to vector<8x32xf32>
    %456 = vector.extract_strided_slice %453 {offsets = [0, 64], sizes = [8, 32], strides = [1, 1]} : vector<8x128xf32> to vector<8x32xf32>
    %457 = vector.extract_strided_slice %452 {offsets = [0, 96], sizes = [8, 32], strides = [1, 1]} : vector<8x128xf32> to vector<8x32xf32>
    %458 = arith.mulf %455, %442 : vector<8x32xf32>
    %459 = arith.mulf %454, %456 : vector<8x32xf32>
    %460 = arith.addf %458, %459 : vector<8x32xf32>
    %461 = math.tanh %460 : vector<8x32xf32>
    %462 = arith.mulf %457, %461 : vector<8x32xf32>
    %463 = arith.truncf %462 : vector<8x32xf32> to vector<8x32xbf16>
    %cst_75 = arith.constant dense<0.000000e+00> : vector<8x128xf32>
    %464 = tpu.matmul %463, %312, %cst_75 {dimension_numbers = #tpu.dot_dimension_numbers<[1], [0], [0], [1], [0, 0, 1, 1], [], []>} : vector<8x32xbf16>, vector<32x128xbf16>, vector<8x128xf32> -> vector<8x128xf32>
    %465 = arith.addf %361, %464 : vector<8x128xf32>
    %466 = arith.negf %465 : vector<8x128xf32>
    %467 = math.exp %466 : vector<8x128xf32>
    %cst_76 = arith.constant 1.000000e+00 : f32
    %468 = vector.broadcast %cst_76 : f32 to vector<8x128xf32>
    %469 = arith.addf %468, %467 : vector<8x128xf32>
    %470 = arith.divf %468, %469 : vector<8x128xf32>
    %471 = math.tanh %465 : vector<8x128xf32>
    %472 = vector.extract_strided_slice %470 {offsets = [0, 0], sizes = [8, 32], strides = [1, 1]} : vector<8x128xf32> to vector<8x32xf32>
    %473 = vector.extract_strided_slice %470 {offsets = [0, 32], sizes = [8, 32], strides = [1, 1]} : vector<8x128xf32> to vector<8x32xf32>
    %474 = vector.extract_strided_slice %471 {offsets = [0, 64], sizes = [8, 32], strides = [1, 1]} : vector<8x128xf32> to vector<8x32xf32>
    %475 = vector.extract_strided_slice %470 {offsets = [0, 96], sizes = [8, 32], strides = [1, 1]} : vector<8x128xf32> to vector<8x32xf32>
    %476 = arith.mulf %473, %460 : vector<8x32xf32>
    %477 = arith.mulf %472, %474 : vector<8x32xf32>
    %478 = arith.addf %476, %477 : vector<8x32xf32>
    %479 = math.tanh %478 : vector<8x32xf32>
    %480 = arith.mulf %475, %479 : vector<8x32xf32>
    %481 = arith.truncf %480 : vector<8x32xf32> to vector<8x32xbf16>
    %cst_77 = arith.constant dense<0.000000e+00> : vector<8x128xf32>
    %482 = tpu.matmul %481, %312, %cst_77 {dimension_numbers = #tpu.dot_dimension_numbers<[1], [0], [0], [1], [0, 0, 1, 1], [], []>} : vector<8x32xbf16>, vector<32x128xbf16>, vector<8x128xf32> -> vector<8x128xf32>
    %483 = arith.addf %369, %482 : vector<8x128xf32>
    %484 = arith.negf %483 : vector<8x128xf32>
    %485 = math.exp %484 : vector<8x128xf32>
    %cst_78 = arith.constant 1.000000e+00 : f32
    %486 = vector.broadcast %cst_78 : f32 to vector<8x128xf32>
    %487 = arith.addf %486, %485 : vector<8x128xf32>
    %488 = arith.divf %486, %487 : vector<8x128xf32>
    %489 = math.tanh %483 : vector<8x128xf32>
    %490 = vector.extract_strided_slice %488 {offsets = [0, 0], sizes = [8, 32], strides = [1, 1]} : vector<8x128xf32> to vector<8x32xf32>
    %491 = vector.extract_strided_slice %488 {offsets = [0, 32], sizes = [8, 32], strides = [1, 1]} : vector<8x128xf32> to vector<8x32xf32>
    %492 = vector.extract_strided_slice %489 {offsets = [0, 64], sizes = [8, 32], strides = [1, 1]} : vector<8x128xf32> to vector<8x32xf32>
    %493 = vector.extract_strided_slice %488 {offsets = [0, 96], sizes = [8, 32], strides = [1, 1]} : vector<8x128xf32> to vector<8x32xf32>
    %494 = arith.mulf %491, %478 : vector<8x32xf32>
    %495 = arith.mulf %490, %492 : vector<8x32xf32>
    %496 = arith.addf %494, %495 : vector<8x32xf32>
    %497 = math.tanh %496 : vector<8x32xf32>
    %498 = arith.mulf %493, %497 : vector<8x32xf32>
    %499 = arith.truncf %498 : vector<8x32xf32> to vector<8x32xbf16>
    %cst_79 = arith.constant dense<0.000000e+00> : vector<8x128xf32>
    %500 = tpu.matmul %499, %312, %cst_79 {dimension_numbers = #tpu.dot_dimension_numbers<[1], [0], [0], [1], [0, 0, 1, 1], [], []>} : vector<8x32xbf16>, vector<32x128xbf16>, vector<8x128xf32> -> vector<8x128xf32>
    %501 = arith.addf %377, %500 : vector<8x128xf32>
    %502 = arith.negf %501 : vector<8x128xf32>
    %503 = math.exp %502 : vector<8x128xf32>
    %cst_80 = arith.constant 1.000000e+00 : f32
    %504 = vector.broadcast %cst_80 : f32 to vector<8x128xf32>
    %505 = arith.addf %504, %503 : vector<8x128xf32>
    %506 = arith.divf %504, %505 : vector<8x128xf32>
    %507 = math.tanh %501 : vector<8x128xf32>
    %508 = vector.extract_strided_slice %506 {offsets = [0, 0], sizes = [8, 32], strides = [1, 1]} : vector<8x128xf32> to vector<8x32xf32>
    %509 = vector.extract_strided_slice %506 {offsets = [0, 32], sizes = [8, 32], strides = [1, 1]} : vector<8x128xf32> to vector<8x32xf32>
    %510 = vector.extract_strided_slice %507 {offsets = [0, 64], sizes = [8, 32], strides = [1, 1]} : vector<8x128xf32> to vector<8x32xf32>
    %511 = vector.extract_strided_slice %506 {offsets = [0, 96], sizes = [8, 32], strides = [1, 1]} : vector<8x128xf32> to vector<8x32xf32>
    %512 = arith.mulf %509, %496 : vector<8x32xf32>
    %513 = arith.mulf %508, %510 : vector<8x32xf32>
    %514 = arith.addf %512, %513 : vector<8x32xf32>
    %515 = math.tanh %514 : vector<8x32xf32>
    %516 = arith.mulf %511, %515 : vector<8x32xf32>
    %517 = arith.negf %378 : vector<8x128xf32>
    %518 = math.exp %517 : vector<8x128xf32>
    %cst_81 = arith.constant 1.000000e+00 : f32
    %519 = vector.broadcast %cst_81 : f32 to vector<8x128xf32>
    %520 = arith.addf %519, %518 : vector<8x128xf32>
    %521 = arith.divf %519, %520 : vector<8x128xf32>
    %522 = math.tanh %378 : vector<8x128xf32>
    %523 = vector.extract_strided_slice %521 {offsets = [0, 0], sizes = [8, 32], strides = [1, 1]} : vector<8x128xf32> to vector<8x32xf32>
    %524 = vector.extract_strided_slice %522 {offsets = [0, 64], sizes = [8, 32], strides = [1, 1]} : vector<8x128xf32> to vector<8x32xf32>
    %525 = vector.extract_strided_slice %521 {offsets = [0, 96], sizes = [8, 32], strides = [1, 1]} : vector<8x128xf32> to vector<8x32xf32>
    %526 = arith.mulf %523, %524 : vector<8x32xf32>
    %527 = math.tanh %526 : vector<8x32xf32>
    %528 = arith.mulf %525, %527 : vector<8x32xf32>
    %c0_82 = arith.constant 0 : index
    %c0_83 = arith.constant 0 : index
    %529 = vector.load %arg11[%c0_82, %c0_83] : memref<32x4xbf16, #tpu.memory_space<vmem>>, vector<32x4xbf16>
    %c0_84 = arith.constant 0 : index
    %c0_85 = arith.constant 0 : index
    %530 = vector.load %arg12[%c0_84, %c0_85] : memref<32x4xbf16, #tpu.memory_space<vmem>>, vector<32x4xbf16>
    %c0_86 = arith.constant 0 : index
    %c0_87 = arith.constant 0 : index
    %531 = vector.load %arg13[%c0_86, %c0_87] : memref<1x4xf32, #tpu.memory_space<vmem>>, vector<1x4xf32>
    %532 = arith.truncf %516 : vector<8x32xf32> to vector<8x32xbf16>
    %cst_88 = arith.constant dense<0.000000e+00> : vector<8x4xf32>
    %533 = tpu.matmul %532, %529, %cst_88 {dimension_numbers = #tpu.dot_dimension_numbers<[1], [0], [0], [1], [0, 0, 1, 1], [], []>} : vector<8x32xbf16>, vector<32x4xbf16>, vector<8x4xf32> -> vector<8x4xf32>
    %534 = arith.truncf %528 : vector<8x32xf32> to vector<8x32xbf16>
    %cst_89 = arith.constant dense<0.000000e+00> : vector<8x4xf32>
    %535 = tpu.matmul %534, %530, %cst_89 {dimension_numbers = #tpu.dot_dimension_numbers<[1], [0], [0], [1], [0, 0, 1, 1], [], []>} : vector<8x32xbf16>, vector<32x4xbf16>, vector<8x4xf32> -> vector<8x4xf32>
    %536 = arith.addf %533, %535 : vector<8x4xf32>
    %537 = vector.broadcast %531 : vector<1x4xf32> to vector<8x4xf32>
    %538 = arith.addf %536, %537 : vector<8x4xf32>
    %539 = vector.extract_strided_slice %538 {offsets = [0, 0], sizes = [2, 4], strides = [1, 1]} : vector<8x4xf32> to vector<2x4xf32>
    %c0_90 = arith.constant 0 : index
    %c0_91 = arith.constant 0 : index
    %540 = vector.load %arg14[%c0_90, %c0_91] : memref<2x4xf32, #tpu.memory_space<vmem>>, vector<2x4xf32>
    tpu.vector_store %arg14[%c0_90, %c0_91], %539 {strides = array<i32>} : memref<2x4xf32, #tpu.memory_space<vmem>>, vector<2x4xf32>,
    return
  }
}

</mosaic_0001>

<llo_original>
// kernel: lstm_classifier_forward.1
$region0: #{lstm_classifier_forward.1}
  #allocation0 [shape = 'u32[]', space=smem, size = 0x4, offset = 0x4, fixed_abs, tag = 'smem constant byte address 0x4 - core index']
  #allocation1 [shape = 'u32[144,128]{1,0:T(1,128)}', space=vmem, size = 0x12000, scoped, tag = 'internal scratch']
  %s0 = inlined_call_operand.vmem [shape: s32[64,1], index: 0, kind: input, shape index: {}]
  %s1 = inlined_call_operand.vmem [shape: bf16[32,16], index: 1, kind: input, shape index: {}]
  %s2 = inlined_call_operand.vmem [shape: bf16[16,256], index: 2, kind: input, shape index: {}]
  %s3 = inlined_call_operand.vmem [shape: bf16[32,128], index: 3, kind: input, shape index: {}]
  %s4 = inlined_call_operand.vmem [shape: bf16[32,128], index: 4, kind: input, shape index: {}]
  %s5 = inlined_call_operand.vmem [shape: f32[1,256], index: 5, kind: input, shape index: {}]
  %s6 = inlined_call_operand.vmem [shape: bf16[32,256], index: 6, kind: input, shape index: {}]
  %s7 = inlined_call_operand.vmem [shape: bf16[32,256], index: 7, kind: input, shape index: {}]
  %s8 = inlined_call_operand.vmem [shape: bf16[32,128], index: 8, kind: input, shape index: {}]
  %s9 = inlined_call_operand.vmem [shape: bf16[32,128], index: 9, kind: input, shape index: {}]
  %s10 = inlined_call_operand.vmem [shape: f32[1,256], index: 10, kind: input, shape index: {}]
  %s11 = inlined_call_operand.vmem [shape: bf16[32,4], index: 11, kind: input, shape index: {}]
  %s12 = inlined_call_operand.vmem [shape: bf16[32,4], index: 12, kind: input, shape index: {}]
  %s13 = inlined_call_operand.vmem [shape: f32[1,4], index: 13, kind: input, shape index: {}]
  %s14 = inlined_call_operand.hbm [shape: f32[2,4], index: 14, kind: output, shape index: {}]
  %s15 = sld [smem:[#allocation0]]
  $region66: #{lstm_classifier_forward.1} parent=0
    _
  %s17 = ssub.s32 1, %s15
  %s18 = scalar_select 0, %s17, %s15
  $region1: #{lstm_classifier_forward.1} parent=0
    #allocation2 [shape = 'u8[1024]{0}', space=vmem, size = 0x400, scoped, tag = 'output window, operand 0, single buffered']
    #allocation3 [shape = 's32[1]{0}', space=sflag, size = 0x4, scoped, tag = 'scoped memory for lstm_classifier_forward.1']
    %19 = vsyncpa [#allocation3], 0
    // Predicated region
    $region2: #{lstm_classifier_forward.1} parent=1 // pred_check
      _
    $region3: #{lstm_classifier_forward.1} parent=1 // pred_check_branch
      %21 = sbr.rel (0) target = $region5
    $region4: #{lstm_classifier_forward.1} parent=1 // pred_region
      _
    $region5: #{lstm_classifier_forward.1} parent=1 // pred_fallthru
      _
    // Predicated region
    $region6: #{lstm_classifier_forward.1} parent=1 // pred_check
      _
    $region7: #{lstm_classifier_forward.1} parent=1 // pred_check_branch
      %23 = sbr.rel (0) target = $region9
    $region8: #{lstm_classifier_forward.1} parent=1 // pred_region
      _
    $region9: #{lstm_classifier_forward.1} parent=1 // pred_fallthru
      _
    // Predicated region
    $region10: #{lstm_classifier_forward.1} parent=1 // pred_check
      _
    $region11: #{lstm_classifier_forward.1} parent=1 // pred_check_branch
      %25 = sbr.rel (0) target = $region13
    $region12: #{lstm_classifier_forward.1} parent=1 // pred_region
      _
    $region13: #{lstm_classifier_forward.1} parent=1 // pred_fallthru
      _
    // Predicated region
    $region14: #{lstm_classifier_forward.1} parent=1 // pred_check
      _
    $region15: #{lstm_classifier_forward.1} parent=1 // pred_check_branch
      %27 = sbr.rel (0) target = $region17
    $region16: #{lstm_classifier_forward.1} parent=1 // pred_region
      _
    $region17: #{lstm_classifier_forward.1} parent=1 // pred_fallthru
      _
    // Predicated region
    $region18: #{lstm_classifier_forward.1} parent=1 // pred_check
      _
    $region19: #{lstm_classifier_forward.1} parent=1 // pred_check_branch
      %29 = sbr.rel (0) target = $region21
    $region20: #{lstm_classifier_forward.1} parent=1 // pred_region
      _
    $region21: #{lstm_classifier_forward.1} parent=1 // pred_fallthru
      _
    // Predicated region
    $region22: #{lstm_classifier_forward.1} parent=1 // pred_check
      _
    $region23: #{lstm_classifier_forward.1} parent=1 // pred_check_branch
      %31 = sbr.rel (0) target = $region25
    $region24: #{lstm_classifier_forward.1} parent=1 // pred_region
      _
    $region25: #{lstm_classifier_forward.1} parent=1 // pred_fallthru
      _
    // Predicated region
    $region26: #{lstm_classifier_forward.1} parent=1 // pred_check
      _
    $region27: #{lstm_classifier_forward.1} parent=1 // pred_check_branch
      %33 = sbr.rel (0) target = $region29
    $region28: #{lstm_classifier_forward.1} parent=1 // pred_region
      _
    $region29: #{lstm_classifier_forward.1} parent=1 // pred_fallthru
      _
    // Predicated region
    $region30: #{lstm_classifier_forward.1} parent=1 // pred_check
      _
    $region31: #{lstm_classifier_forward.1} parent=1 // pred_check_branch
      %35 = sbr.rel (0) target = $region33
    $region32: #{lstm_classifier_forward.1} parent=1 // pred_region
      _
    $region33: #{lstm_classifier_forward.1} parent=1 // pred_fallthru
      _
    // Predicated region
    $region34: #{lstm_classifier_forward.1} parent=1 // pred_check
      _
    $region35: #{lstm_classifier_forward.1} parent=1 // pred_check_branch
      %37 = sbr.rel (0) target = $region37
    $region36: #{lstm_classifier_forward.1} parent=1 // pred_region
      _
    $region37: #{lstm_classifier_forward.1} parent=1 // pred_fallthru
      _
    // Predicated region
    $region38: #{lstm_classifier_forward.1} parent=1 // pred_check
      _
    $region39: #{lstm_classifier_forward.1} parent=1 // pred_check_branch
      %39 = sbr.rel (0) target = $region41
    $region40: #{lstm_classifier_forward.1} parent=1 // pred_region
      _
    $region41: #{lstm_classifier_forward.1} parent=1 // pred_fallthru
      _
    // Predicated region
    $region42: #{lstm_classifier_forward.1} parent=1 // pred_check
      _
    $region43: #{lstm_classifier_forward.1} parent=1 // pred_check_branch
      %41 = sbr.rel (0) target = $region45
    $region44: #{lstm_classifier_forward.1} parent=1 // pred_region
      _
    $region45: #{lstm_classifier_forward.1} parent=1 // pred_fallthru
      _
    // Predicated region
    $region46: #{lstm_classifier_forward.1} parent=1 // pred_check
      _
    $region47: #{lstm_classifier_forward.1} parent=1 // pred_check_branch
      %43 = sbr.rel (0) target = $region49
    $region48: #{lstm_classifier_forward.1} parent=1 // pred_region
      _
    $region49: #{lstm_classifier_forward.1} parent=1 // pred_fallthru
      _
    // Predicated region
    $region50: #{lstm_classifier_forward.1} parent=1 // pred_check
      _
    $region51: #{lstm_classifier_forward.1} parent=1 // pred_check_branch
      %45 = sbr.rel (0) target = $region53
    $region52: #{lstm_classifier_forward.1} parent=1 // pred_region
      _
    $region53: #{lstm_classifier_forward.1} parent=1 // pred_fallthru
      _
    // Predicated region
    $region54: #{lstm_classifier_forward.1} parent=1 // pred_check
      _
    $region55: #{lstm_classifier_forward.1} parent=1 // pred_check_branch
      %47 = sbr.rel (0) target = $region57
    $region56: #{lstm_classifier_forward.1} parent=1 // pred_region
      _
    $region57: #{lstm_classifier_forward.1} parent=1 // pred_fallthru
      _
    %v49 = vld [vmem:[%s0] sm:$0xff]
    %v50 = vld [vmem:[%s0 + $0x8] sm:$0xff]
    %v51 = vld [vmem:[%s0 + $0x10] sm:$0xff]
    %v52 = vld [vmem:[%s0 + $0x18] sm:$0xff]
    %v53 = vld [vmem:[%s0 + $0x20] sm:$0xff]
    %v54 = vld [vmem:[%s0 + $0x28] sm:$0xff]
    %v55 = vld [vmem:[%s0 + $0x30] sm:$0xff]
    %v56 = vld [vmem:[%s0 + $0x38] sm:$0xff]
    %v57 = vlaneseq
    %v58 = vand.u32 %v57, 127
    %59 = vset.pattern.permute.xlu0 0
    %60 = vperm.xlu0 %59, %v49
    %v61 = vpop.permute.xlu0 %60
    %62 = vset.pattern.permute.xlu0 0
    %63 = vperm.xlu0 %62, %v50
    %v64 = vpop.permute.xlu0 %63
    %65 = vset.pattern.permute.xlu0 0
    %66 = vperm.xlu0 %65, %v51
    %v67 = vpop.permute.xlu0 %66
    %68 = vset.pattern.permute.xlu0 0
    %69 = vperm.xlu0 %68, %v52
    %v70 = vpop.permute.xlu0 %69
    %71 = vset.pattern.permute.xlu0 0
    %72 = vperm.xlu0 %71, %v53
    %v73 = vpop.permute.xlu0 %72
    %74 = vset.pattern.permute.xlu0 0
    %75 = vperm.xlu0 %74, %v54
    %v76 = vpop.permute.xlu0 %75
    %77 = vset.pattern.permute.xlu0 0
    %78 = vperm.xlu0 %77, %v55
    %v79 = vpop.permute.xlu0 %78
    %80 = vset.pattern.permute.xlu0 0
    %81 = vperm.xlu0 %80, %v56
    %v82 = vpop.permute.xlu0 %81
    %vm83 = vcmp.eq.s32.totalorder %v61, %v58
    %vm84 = vcmp.eq.s32.totalorder %v64, %v58
    %vm85 = vcmp.eq.s32.totalorder %v67, %v58
    %vm86 = vcmp.eq.s32.totalorder %v70, %v58
    %vm87 = vcmp.eq.s32.totalorder %v73, %v58
    %vm88 = vcmp.eq.s32.totalorder %v76, %v58
    %vm89 = vcmp.eq.s32.totalorder %v79, %v58
    %vm90 = vcmp.eq.s32.totalorder %v82, %v58
    %v91 = vsel %vm83, 1, 0
    %v92 = vsel %vm84, 1, 0
    %v93 = vsel %vm85, 1, 0
    %v94 = vsel %vm86, 1, 0
    %v95 = vsel %vm87, 1, 0
    %v96 = vsel %vm88, 1, 0
    %v97 = vsel %vm89, 1, 0
    %v98 = vsel %vm90, 1, 0
    %v99 = vcvt.s32.f32 %v91
    %v100 = vcvt.s32.f32 %v92
    %v101 = vcvt.s32.f32 %v93
    %v102 = vcvt.s32.f32 %v94
    %v103 = vcvt.s32.f32 %v95
    %v104 = vcvt.s32.f32 %v96
    %v105 = vcvt.s32.f32 %v97
    %v106 = vcvt.s32.f32 %v98
    %v107 = vpack.c.bf16 %v100, %v99
    %v108 = vpack.c.bf16 %v102, %v101
    %v109 = vpack.c.bf16 %v104, %v103
    %v110 = vpack.c.bf16 %v106, %v105
    %v111 = vld [vmem:[%s1] sm:$0xf]
    %v112 = vld [vmem:[%s1 + $0x4] sm:$0xf]
    %v113 = vld [vmem:[%s1 + $0x8] sm:$0xf]
    %v114 = vld [vmem:[%s1 + $0xc] sm:$0xf]
    %v119 = vunpack.c.l.b16 %v111
    %v120 = vunpack.c.l.b16 %v112
    %v121 = vunpack.c.l.b16 %v113
    %v122 = vunpack.c.l.b16 %v114
    %v123 = vpack.c.b16 %v120, %v119
    %v124 = vpack.c.b16 %v122, %v121
    %vm127 = vcmask 261120
    %v129 = vsel %vm127, %v107, 0
    %v132 = vsel %vm127, %v108, 0
    %v135 = vsel %vm127, %v109, 0
    %v138 = vsel %vm127, %v110, 0
    %140 = vmatprep.subr.bf16.mxu0 0
    %141 = vmatpush1.bf16.msra.mxu0 0
    %142 = vmatprep.subr.bf16.mxu0 0
    %143 = vmatpush1.bf16.msra.mxu0 0
    %144 = vmatprep.subr.bf16.mxu0 0
    %145 = vmatpush1.bf16.msra.mxu0 0
    %146 = vmatprep.subr.bf16.mxu0 0
    %147 = vmatpush1.bf16.msra.mxu0 0
    %148 = vmatprep.subr.bf16.mxu0 0
    %149 = vmatpush1.bf16.msra.mxu0 0
    %150 = vmatprep.subr.bf16.mxu0 0
    %151 = vmatpush1.bf16.msra.mxu0 0
    %152 = vmatprep.subr.bf16.mxu0 0
    %153 = vmatpush1.bf16.msra.mxu0 %v124
    %154 = vmatprep.subr.bf16.mxu0 0
    %155 = vmatpush1.bf16.msra.mxu0 %v123
    %156 = vmatprep.subr.bf16.mxu0 0
    %157 = vmatpush2.bf16.msra.mxu0 0
    %158 = vmatprep.subr.bf16.mxu0 0
    %159 = vmatpush2.bf16.msra.mxu0 0
    %160 = vmatprep.subr.bf16.mxu0 0
    %161 = vmatpush2.bf16.msra.mxu0 0
    %162 = vmatprep.subr.bf16.mxu0 0
    %163 = vmatpush2.bf16.msra.mxu0 0
    %164 = vmatprep.subr.bf16.mxu0 0
    %165 = vmatpush2.bf16.msra.mxu0 0
    %166 = vmatprep.subr.bf16.mxu0 0
    %167 = vmatpush2.bf16.msra.mxu0 0
    %168 = vmatprep.subr.bf16.mxu0 0
    %169 = vmatpush2.bf16.msra.mxu0 0
    %170 = vmatprep.subr.bf16.mxu0 0
    %171 = vmatpush2.bf16.msra.mxu0 0
    %172 = vmatprep.mubr.bf16.mxu0 0
    %173 = vmatmul.mubr.bf16.gmra.mxu0 %v129
    %v174 = vpop.f32.mrf.mxu0
    %v175 = vadd.f32 0.0, %v174
    %v176 = vpop.f32.mrf.mxu0
    %v177 = vpop.f32.mrf.mxu0
    %v178 = vadd.f32 0.0, %v177
    %v179 = vpop.f32.mrf.mxu0
    %180 = vmatprep.mubr.bf16.mxu0 0
    %181 = vmatmul.mubr.bf16.gmra.mxu0 %v132
    %v182 = vpop.f32.mrf.mxu0
    %v183 = vadd.f32 0.0, %v182
    %v184 = vpop.f32.mrf.mxu0
    %v185 = vpop.f32.mrf.mxu0
    %v186 = vadd.f32 0.0, %v185
    %v187 = vpop.f32.mrf.mxu0
    %188 = vmatprep.mubr.bf16.mxu0 0
    %189 = vmatmul.mubr.bf16.gmra.mxu0 %v135
    %v190 = vpop.f32.mrf.mxu0
    %v191 = vadd.f32 0.0, %v190
    %v192 = vpop.f32.mrf.mxu0
    %v193 = vpop.f32.mrf.mxu0
    %v194 = vadd.f32 0.0, %v193
    %v195 = vpop.f32.mrf.mxu0
    %196 = vmatprep.mubr.bf16.mxu0 0
    %197 = vmatmul.mubr.bf16.gmra.mxu0 %v138
    %v198 = vpop.f32.mrf.mxu0
    %v199 = vadd.f32 0.0, %v198
    %v200 = vpop.f32.mrf.mxu0
    %v201 = vpop.f32.mrf.mxu0
    %v202 = vadd.f32 0.0, %v201
    %v203 = vpop.f32.mrf.mxu0
    %204 = vdwg.mxu0
    %v205 = vpack.c.bf16 %v178, %v175
    %v206 = vpack.c.bf16 %v186, %v183
    %v207 = vpack.c.bf16 %v194, %v191
    %v208 = vpack.c.bf16 %v202, %v199
    %v209 = vld [vmem:[%s2] sm:$0xff]
    %v210 = vld [vmem:[%s2 + $0x8] sm:$0xff]
    %v211 = vld [vmem:[%s3] sm:$0xf]
    %v212 = vld [vmem:[%s3 + $0x4] sm:$0xf]
    %v213 = vld [vmem:[%s3 + $0x8] sm:$0xf]
    %v214 = vld [vmem:[%s3 + $0xc] sm:$0xf]
    %v215 = vld [vmem:[%s4] sm:$0xf]
    %v216 = vld [vmem:[%s4 + $0x4] sm:$0xf]
    %v217 = vld [vmem:[%s4 + $0x8] sm:$0xf]
    %v218 = vld [vmem:[%s4 + $0xc] sm:$0xf]
    %v219 = vld [vmem:[%s5] sm:$0x3]
    %v221 = vlaneseq
    %v222 = vshrl.u32 %v221, 7
    %v223 = vsub.s32 0, %v222
    %v224 = vrot.slane %v219, %v223
    %v225 = vlaneseq
    %v226 = vshrl.u32 %v225, 7
    %v227 = vsub.s32 1, %v226
    %v228 = vrot.slane %v219, %v227
    %v233 = vunpack.c.l.b16 %v209
    %v234 = vunpack.c.h.b16 %v209
    %v235 = vunpack.c.l.b16 %v210
    %v236 = vunpack.c.h.b16 %v210
    %v237 = vpack.c.b16 %v235, %v233
    %v238 = vpack.c.b16 %v236, %v234
    %vm241 = vcmask 130048
    %v243 = vsel %vm241, %v205, 0
    %v246 = vsel %vm241, %v206, 0
    %v249 = vsel %vm241, %v207, 0
    %v252 = vsel %vm241, %v208, 0
    %254 = vmatprep.subr.bf16.mxu0 0
    %255 = vmatpush1.bf16.msra.mxu0 0
    %256 = vmatprep.subr.bf16.mxu0 0
    %257 = vmatpush1.bf16.msra.mxu0 0
    %258 = vmatprep.subr.bf16.mxu0 0
    %259 = vmatpush1.bf16.msra.mxu0 0
    %260 = vmatprep.subr.bf16.mxu0 0
    %261 = vmatpush1.bf16.msra.mxu0 0
    %262 = vmatprep.subr.bf16.mxu0 0
    %263 = vmatpush1.bf16.msra.mxu0 0
    %264 = vmatprep.subr.bf16.mxu0 0
    %265 = vmatpush1.bf16.msra.mxu0 0
    %266 = vmatprep.subr.bf16.mxu0 0
    %267 = vmatpush1.bf16.msra.mxu0 0
    %268 = vmatprep.subr.bf16.mxu0 %v238
    %269 = vmatpush1.bf16.msra.mxu0 %v237
    %270 = vmatprep.subr.bf16.mxu0 0
    %271 = vmatpush2.bf16.msra.mxu0 0
    %272 = vmatprep.subr.bf16.mxu0 0
    %273 = vmatpush2.bf16.msra.mxu0 0
    %274 = vmatprep.subr.bf16.mxu0 0
    %275 = vmatpush2.bf16.msra.mxu0 0
    %276 = vmatprep.subr.bf16.mxu0 0
    %277 = vmatpush2.bf16.msra.mxu0 0
    %278 = vmatprep.subr.bf16.mxu0 0
    %279 = vmatpush2.bf16.msra.mxu0 0
    %280 = vmatprep.subr.bf16.mxu0 0
    %281 = vmatpush2.bf16.msra.mxu0 0
    %282 = vmatprep.subr.bf16.mxu0 0
    %283 = vmatpush2.bf16.msra.mxu0 0
    %284 = vmatprep.subr.bf16.mxu0 0
    %285 = vmatpush2.bf16.msra.mxu0 0
    %286 = vmatprep.mubr.bf16.mxu0 0
    %287 = vmatmul.mubr.bf16.gmra.mxu0 %v243
    %v288 = vpop.f32.mrf.mxu0
    %v289 = vadd.f32 %v224, %v288
    %v290 = vpop.f32.mrf.mxu0
    %v291 = vadd.f32 %v228, %v290
    %v292 = vpop.f32.mrf.mxu0
    %v293 = vadd.f32 %v224, %v292
    %v294 = vpop.f32.mrf.mxu0
    %v295 = vadd.f32 %v228, %v294
    %296 = vmatprep.mubr.bf16.mxu0 0
    %297 = vmatmul.mubr.bf16.gmra.mxu0 %v246
    %v298 = vpop.f32.mrf.mxu0
    %v299 = vadd.f32 %v224, %v298
    %v300 = vpop.f32.mrf.mxu0
    %v301 = vadd.f32 %v228, %v300
    %v302 = vpop.f32.mrf.mxu0
    %v303 = vadd.f32 %v224, %v302
    %v304 = vpop.f32.mrf.mxu0
    %v305 = vadd.f32 %v228, %v304
    %306 = vmatprep.mubr.bf16.mxu0 0
    %307 = vmatmul.mubr.bf16.gmra.mxu0 %v249
    %v308 = vpop.f32.mrf.mxu0
    %v309 = vadd.f32 %v224, %v308
    %v310 = vpop.f32.mrf.mxu0
    %v311 = vadd.f32 %v228, %v310
    %v312 = vpop.f32.mrf.mxu0
    %v313 = vadd.f32 %v224, %v312
    %v314 = vpop.f32.mrf.mxu0
    %v315 = vadd.f32 %v228, %v314
    %316 = vmatprep.mubr.bf16.mxu0 0
    %317 = vmatmul.mubr.bf16.gmra.mxu0 %v252
    %v318 = vpop.f32.mrf.mxu0
    %v319 = vadd.f32 %v224, %v318
    %v320 = vpop.f32.mrf.mxu0
    %v321 = vadd.f32 %v228, %v320
    %v322 = vpop.f32.mrf.mxu0
    %v323 = vadd.f32 %v224, %v322
    %v324 = vpop.f32.mrf.mxu0
    %v325 = vadd.f32 %v228, %v324
    %326 = vdwg.mxu0
    %v327 = vxor.u32 %v289, 2147483648
    %v328 = vmul.f32 %v327, 1.442695
    %v329 = vpow.pop %v328
    %v330 = vadd.f32 %v329, 1.0
    %v331 = vrcp.pop %v330
    %v332 = vmul.f32 1.0, %v331
    %v333 = vtanh.pop %v289
    %335 = vrot.lane.b32.xlu0 %v333, 64
    %v336 = vpop.permute.xlu0 %335
    %v338 = vmul.f32 %v332, %v336
    %v339 = vtanh.pop %v338
    %341 = vrot.lane.b32.xlu0 %v339, 96
    %v342 = vpop.permute.xlu0 %341
    %v344 = vmul.f32 %v332, %v342
    %v345 = vxor.u32 %v325, 2147483648
    %v346 = vmul.f32 %v345, 1.442695
    %v347 = vpow.pop %v346
    %v348 = vadd.f32 %v347, 1.0
    %v349 = vrcp.pop %v348
    %v350 = vmul.f32 1.0, %v349
    %v351 = vtanh.pop %v325
    %353 = vrot.lane.b32.xlu0 %v351, 64
    %v354 = vpop.permute.xlu0 %353
    %v356 = vmul.f32 %v350, %v354
    %v357 = vtanh.pop %v356
    %359 = vrot.lane.b32.xlu0 %v357, 96
    %v360 = vpop.permute.xlu0 %359
    %v362 = vmul.f32 %v350, %v360
    %v363 = vpack.c.bf16 %v344, %v344
    %365 = vrot.lane.b32.xlu0 %v363, 32
    %v366 = vpop.permute.xlu0 %365
    %v371 = vunpack.c.l.b16 %v211
    %v372 = vunpack.c.l.b16 %v212
    %v373 = vunpack.c.l.b16 %v213
    %v374 = vunpack.c.l.b16 %v214
    %v375 = vpack.c.b16 %v372, %v371
    %v376 = vpack.c.b16 %v374, %v373
    %v380 = vsel %vm127, %v366, 0
    %382 = vmatprep.subr.bf16.mxu0 0
    %383 = vmatpush1.bf16.msra.mxu0 0
    %384 = vmatprep.subr.bf16.mxu0 0
    %385 = vmatpush1.bf16.msra.mxu0 0
    %386 = vmatprep.subr.bf16.mxu0 0
    %387 = vmatpush1.bf16.msra.mxu0 0
    %388 = vmatprep.subr.bf16.mxu0 0
    %389 = vmatpush1.bf16.msra.mxu0 0
    %390 = vmatprep.subr.bf16.mxu0 0
    %391 = vmatpush1.bf16.msra.mxu0 0
    %392 = vmatprep.subr.bf16.mxu0 0
    %393 = vmatpush1.bf16.msra.mxu0 0
    %394 = vmatprep.subr.bf16.mxu0 0
    %395 = vmatpush1.bf16.msra.mxu0 %v376
    %396 = vmatprep.subr.bf16.mxu0 0
    %397 = vmatpush1.bf16.msra.mxu0 %v375
    %398 = vmatprep.subr.bf16.mxu0 0
    %399 = vmatpush2.bf16.msra.mxu0 0
    %400 = vmatprep.subr.bf16.mxu0 0
    %401 = vmatpush2.bf16.msra.mxu0 0
    %402 = vmatprep.subr.bf16.mxu0 0
    %403 = vmatpush2.bf16.msra.mxu0 0
    %404 = vmatprep.subr.bf16.mxu0 0
    %405 = vmatpush2.bf16.msra.mxu0 0
    %406 = vmatprep.subr.bf16.mxu0 0
    %407 = vmatpush2.bf16.msra.mxu0 0
    %408 = vmatprep.subr.bf16.mxu0 0
    %409 = vmatpush2.bf16.msra.mxu0 0
    %410 = vmatprep.subr.bf16.mxu0 0
    %411 = vmatpush2.bf16.msra.mxu0 0
    %412 = vmatprep.subr.bf16.mxu0 0
    %413 = vmatpush2.bf16.msra.mxu0 0
    %414 = vmatprep.mubr.bf16.mxu0 0
    %415 = vmatmul.mubr.bf16.gmra.mxu0 %v380
    %v416 = vpop.f32.mrf.mxu0
    %v417 = vadd.f32 0.0, %v416
    %v418 = vpop.f32.mrf.mxu0
    %v419 = vpop.f32.mrf.mxu0
    %v420 = vpop.f32.mrf.mxu0
    %421 = vdwg.mxu0
    %v422 = vadd.f32 %v293, %v417
    %v423 = vpack.c.bf16 %v362, %v362
    %425 = vrot.lane.b32.xlu0 %v423, 32
    %v426 = vpop.permute.xlu0 %425
    %v431 = vunpack.c.l.b16 %v215
    %v432 = vunpack.c.l.b16 %v216
    %v433 = vunpack.c.l.b16 %v217
    %v434 = vunpack.c.l.b16 %v218
    %v435 = vpack.c.b16 %v432, %v431
    %v436 = vpack.c.b16 %v434, %v433
    %v440 = vsel %vm127, %v426, 0
    %442 = vmatprep.subr.bf16.mxu0 0
    %443 = vmatpush1.bf16.msra.mxu0 0
    %444 = vmatprep.subr.bf16.mxu0 0
    %445 = vmatpush1.bf16.msra.mxu0 0
    %446 = vmatprep.subr.bf16.mxu0 0
    %447 = vmatpush1.bf16.msra.mxu0 0
    %448 = vmatprep.subr.bf16.mxu0 0
    %449 = vmatpush1.bf16.msra.mxu0 0
    %450 = vmatprep.subr.bf16.mxu0 0
    %451 = vmatpush1.bf16.msra.mxu0 0
    %452 = vmatprep.subr.bf16.mxu0 0
    %453 = vmatpush1.bf16.msra.mxu0 0
    %454 = vmatprep.subr.bf16.mxu0 0
    %455 = vmatpush1.bf16.msra.mxu0 %v436
    %456 = vmatprep.subr.bf16.mxu0 0
    %457 = vmatpush1.bf16.msra.mxu0 %v435
    %458 = vmatprep.subr.bf16.mxu0 0
    %459 = vmatpush2.bf16.msra.mxu0 0
    %460 = vmatprep.subr.bf16.mxu0 0
    %461 = vmatpush2.bf16.msra.mxu0 0
    %462 = vmatprep.subr.bf16.mxu0 0
    %463 = vmatpush2.bf16.msra.mxu0 0
    %464 = vmatprep.subr.bf16.mxu0 0
    %465 = vmatpush2.bf16.msra.mxu0 0
    %466 = vmatprep.subr.bf16.mxu0 0
    %467 = vmatpush2.bf16.msra.mxu0 0
    %468 = vmatprep.subr.bf16.mxu0 0
    %469 = vmatpush2.bf16.msra.mxu0 0
    %470 = vmatprep.subr.bf16.mxu0 0
    %471 = vmatpush2.bf16.msra.mxu0 0
    %472 = vmatprep.subr.bf16.mxu0 0
    %473 = vmatpush2.bf16.msra.mxu0 0
    %474 = vmatprep.mubr.bf16.mxu0 0
    %475 = vmatmul.mubr.bf16.gmra.mxu0 %v440
    %v476 = vpop.f32.mrf.mxu0
    %v477 = vadd.f32 0.0, %v476
    %v478 = vpop.f32.mrf.mxu0
    %v479 = vpop.f32.mrf.mxu0
    %v480 = vpop.f32.mrf.mxu0
    %481 = vdwg.mxu0
    %v482 = vadd.f32 %v321, %v477
    %v483 = vxor.u32 %v422, 2147483648
    %v484 = vmul.f32 %v483, 1.442695
    %v485 = vpow.pop %v484
    %v486 = vadd.f32 %v485, 1.0
    %v487 = vrcp.pop %v486
    %v488 = vmul.f32 1.0, %v487
    %v489 = vtanh.pop %v422
    %491 = vrot.lane.b32.xlu0 %v338, 32
    %v492 = vpop.permute.xlu0 %491
    %v494 = vmul.f32 %v488, %v492
    %496 = vrot.lane.b32.xlu0 %v489, 64
    %v497 = vpop.permute.xlu0 %496
    %v499 = vmul.f32 %v488, %v497
    %501 = vrot.lane.b32.xlu0 %v499, 32
    %v502 = vpop.permute.xlu0 %501
    %v504 = vadd.f32 %v494, %v502
    %v505 = vtanh.pop %v504
    %507 = vrot.lane.b32.xlu0 %v505, 64
    %v508 = vpop.permute.xlu0 %507
    %v510 = vmul.f32 %v488, %v508
    %v511 = vxor.u32 %v482, 2147483648
    %v512 = vmul.f32 %v511, 1.442695
    %v513 = vpow.pop %v512
    %v514 = vadd.f32 %v513, 1.0
    %v515 = vrcp.pop %v514
    %v516 = vmul.f32 1.0, %v515
    %v517 = vtanh.pop %v482
    %519 = vrot.lane.b32.xlu0 %v356, 32
    %v520 = vpop.permute.xlu0 %519
    %v522 = vmul.f32 %v516, %v520
    %524 = vrot.lane.b32.xlu0 %v517, 64
    %v525 = vpop.permute.xlu0 %524
    %v527 = vmul.f32 %v516, %v525
    %529 = vrot.lane.b32.xlu0 %v527, 32
    %v530 = vpop.permute.xlu0 %529
    %v532 = vadd.f32 %v522, %v530
    %v533 = vtanh.pop %v532
    %535 = vrot.lane.b32.xlu0 %v533, 64
    %v536 = vpop.permute.xlu0 %535
    %v538 = vmul.f32 %v516, %v536
    %v539 = vpack.c.bf16 %v510, %v510
    %541 = vrot.lane.b32.xlu0 %v539, 32
    %v542 = vpop.permute.xlu0 %541
    %v544 = vsel %vm127, %v542, 0
    %546 = vmatprep.subr.bf16.mxu0 0
    %547 = vmatpush1.bf16.msra.mxu0 0
    %548 = vmatprep.subr.bf16.mxu0 0
    %549 = vmatpush1.bf16.msra.mxu0 0
    %550 = vmatprep.subr.bf16.mxu0 0
    %551 = vmatpush1.bf16.msra.mxu0 0
    %552 = vmatprep.subr.bf16.mxu0 0
    %553 = vmatpush1.bf16.msra.mxu0 0
    %554 = vmatprep.subr.bf16.mxu0 0
    %555 = vmatpush1.bf16.msra.mxu0 0
    %556 = vmatprep.subr.bf16.mxu0 0
    %557 = vmatpush1.bf16.msra.mxu0 0
    %558 = vmatprep.subr.bf16.mxu0 0
    %559 = vmatpush1.bf16.msra.mxu0 %v376
    %560 = vmatprep.subr.bf16.mxu0 0
    %561 = vmatpush1.bf16.msra.mxu0 %v375
    %562 = vmatprep.subr.bf16.mxu0 0
    %563 = vmatpush2.bf16.msra.mxu0 0
    %564 = vmatprep.subr.bf16.mxu0 0
    %565 = vmatpush2.bf16.msra.mxu0 0
    %566 = vmatprep.subr.bf16.mxu0 0
    %567 = vmatpush2.bf16.msra.mxu0 0
    %568 = vmatprep.subr.bf16.mxu0 0
    %569 = vmatpush2.bf16.msra.mxu0 0
    %570 = vmatprep.subr.bf16.mxu0 0
    %571 = vmatpush2.bf16.msra.mxu0 0
    %572 = vmatprep.subr.bf16.mxu0 0
    %573 = vmatpush2.bf16.msra.mxu0 0
    %574 = vmatprep.subr.bf16.mxu0 0
    %575 = vmatpush2.bf16.msra.mxu0 0
    %576 = vmatprep.subr.bf16.mxu0 0
    %577 = vmatpush2.bf16.msra.mxu0 0
    %578 = vmatprep.mubr.bf16.mxu0 0
    %579 = vmatmul.mubr.bf16.gmra.mxu0 %v544
    %v580 = vpop.f32.mrf.mxu0
    %v581 = vadd.f32 0.0, %v580
    %v582 = vpop.f32.mrf.mxu0
    %v583 = vpop.f32.mrf.mxu0
    %v584 = vpop.f32.mrf.mxu0
    %585 = vdwg.mxu0
    %v586 = vadd.f32 %v299, %v581
    %v587 = vpack.c.bf16 %v538, %v538
    %589 = vrot.lane.b32.xlu0 %v587, 32
    %v590 = vpop.permute.xlu0 %589
    %v592 = vsel %vm127, %v590, 0
    %594 = vmatprep.subr.bf16.mxu0 0
    %595 = vmatpush1.bf16.msra.mxu0 0
    %596 = vmatprep.subr.bf16.mxu0 0
    %597 = vmatpush1.bf16.msra.mxu0 0
    %598 = vmatprep.subr.bf16.mxu0 0
    %599 = vmatpush1.bf16.msra.mxu0 0
    %600 = vmatprep.subr.bf16.mxu0 0
    %601 = vmatpush1.bf16.msra.mxu0 0
    %602 = vmatprep.subr.bf16.mxu0 0
    %603 = vmatpush1.bf16.msra.mxu0 0
    %604 = vmatprep.subr.bf16.mxu0 0
    %605 = vmatpush1.bf16.msra.mxu0 0
    %606 = vmatprep.subr.bf16.mxu0 0
    %607 = vmatpush1.bf16.msra.mxu0 %v436
    %608 = vmatprep.subr.bf16.mxu0 0
    %609 = vmatpush1.bf16.msra.mxu0 %v435
    %610 = vmatprep.subr.bf16.mxu0 0
    %611 = vmatpush2.bf16.msra.mxu0 0
    %612 = vmatprep.subr.bf16.mxu0 0
    %613 = vmatpush2.bf16.msra.mxu0 0
    %614 = vmatprep.subr.bf16.mxu0 0
    %615 = vmatpush2.bf16.msra.mxu0 0
    %616 = vmatprep.subr.bf16.mxu0 0
    %617 = vmatpush2.bf16.msra.mxu0 0
    %618 = vmatprep.subr.bf16.mxu0 0
    %619 = vmatpush2.bf16.msra.mxu0 0
    %620 = vmatprep.subr.bf16.mxu0 0
    %621 = vmatpush2.bf16.msra.mxu0 0
    %622 = vmatprep.subr.bf16.mxu0 0
    %623 = vmatpush2.bf16.msra.mxu0 0
    %624 = vmatprep.subr.bf16.mxu0 0
    %625 = vmatpush2.bf16.msra.mxu0 0
    %626 = vmatprep.mubr.bf16.mxu0 0
    %627 = vmatmul.mubr.bf16.gmra.mxu0 %v592
    %v628 = vpop.f32.mrf.mxu0
    %v629 = vadd.f32 0.0, %v628
    %v630 = vpop.f32.mrf.mxu0
    %v631 = vpop.f32.mrf.mxu0
    %v632 = vpop.f32.mrf.mxu0
    %633 = vdwg.mxu0
    %v634 = vadd.f32 %v315, %v629
    %v635 = vxor.u32 %v586, 2147483648
    %v636 = vmul.f32 %v635, 1.442695
    %v637 = vpow.pop %v636
    %v638 = vadd.f32 %v637, 1.0
    %v639 = vrcp.pop %v638
    %v640 = vmul.f32 1.0, %v639
    %v641 = vtanh.pop %v586
    %v642 = vmul.f32 %v640, %v504
    %644 = vrot.lane.b32.xlu0 %v641, 64
    %v645 = vpop.permute.xlu0 %644
    %v647 = vmul.f32 %v640, %v645
    %649 = vrot.lane.b32.xlu0 %v647, 32
    %v650 = vpop.permute.xlu0 %649
    %v652 = vadd.f32 %v642, %v650
    %v653 = vtanh.pop %v652
    %655 = vrot.lane.b32.xlu0 %v653, 64
    %v656 = vpop.permute.xlu0 %655
    %v658 = vmul.f32 %v640, %v656
    %v659 = vxor.u32 %v634, 2147483648
    %v660 = vmul.f32 %v659, 1.442695
    %v661 = vpow.pop %v660
    %v662 = vadd.f32 %v661, 1.0
    %v663 = vrcp.pop %v662
    %v664 = vmul.f32 1.0, %v663
    %v665 = vtanh.pop %v634
    %v666 = vmul.f32 %v664, %v532
    %668 = vrot.lane.b32.xlu0 %v665, 64
    %v669 = vpop.permute.xlu0 %668
    %v671 = vmul.f32 %v664, %v669
    %673 = vrot.lane.b32.xlu0 %v671, 32
    %v674 = vpop.permute.xlu0 %673
    %v676 = vadd.f32 %v666, %v674
    %v677 = vtanh.pop %v676
    %679 = vrot.lane.b32.xlu0 %v677, 64
    %v680 = vpop.permute.xlu0 %679
    %v682 = vmul.f32 %v664, %v680
    %v683 = vpack.c.bf16 %v658, %v658
    %685 = vrot.lane.b32.xlu0 %v683, 32
    %v686 = vpop.permute.xlu0 %685
    %v688 = vsel %vm127, %v686, 0
    %690 = vmatprep.subr.bf16.mxu0 0
    %691 = vmatpush1.bf16.msra.mxu0 0
    %692 = vmatprep.subr.bf16.mxu0 0
    %693 = vmatpush1.bf16.msra.mxu0 0
    %694 = vmatprep.subr.bf16.mxu0 0
    %695 = vmatpush1.bf16.msra.mxu0 0
    %696 = vmatprep.subr.bf16.mxu0 0
    %697 = vmatpush1.bf16.msra.mxu0 0
    %698 = vmatprep.subr.bf16.mxu0 0
    %699 = vmatpush1.bf16.msra.mxu0 0
    %700 = vmatprep.subr.bf16.mxu0 0
    %701 = vmatpush1.bf16.msra.mxu0 0
    %702 = vmatprep.subr.bf16.mxu0 0
    %703 = vmatpush1.bf16.msra.mxu0 %v376
    %704 = vmatprep.subr.bf16.mxu0 0
    %705 = vmatpush1.bf16.msra.mxu0 %v375
    %706 = vmatprep.subr.bf16.mxu0 0
    %707 = vmatpush2.bf16.msra.mxu0 0
    %708 = vmatprep.subr.bf16.mxu0 0
    %709 = vmatpush2.bf16.msra.mxu0 0
    %710 = vmatprep.subr.bf16.mxu0 0
    %711 = vmatpush2.bf16.msra.mxu0 0
    %712 = vmatprep.subr.bf16.mxu0 0
    %713 = vmatpush2.bf16.msra.mxu0 0
    %714 = vmatprep.subr.bf16.mxu0 0
    %715 = vmatpush2.bf16.msra.mxu0 0
    %716 = vmatprep.subr.bf16.mxu0 0
    %717 = vmatpush2.bf16.msra.mxu0 0
    %718 = vmatprep.subr.bf16.mxu0 0
    %719 = vmatpush2.bf16.msra.mxu0 0
    %720 = vmatprep.subr.bf16.mxu0 0
    %721 = vmatpush2.bf16.msra.mxu0 0
    %722 = vmatprep.mubr.bf16.mxu0 0
    %723 = vmatmul.mubr.bf16.gmra.mxu0 %v688
    %v724 = vpop.f32.mrf.mxu0
    %v725 = vadd.f32 0.0, %v724
    %v726 = vpop.f32.mrf.mxu0
    %v727 = vpop.f32.mrf.mxu0
    %v728 = vpop.f32.mrf.mxu0
    %729 = vdwg.mxu0
    %v730 = vadd.f32 %v303, %v725
    %v731 = vpack.c.bf16 %v682, %v682
    %733 = vrot.lane.b32.xlu0 %v731, 32
    %v734 = vpop.permute.xlu0 %733
    %v736 = vsel %vm127, %v734, 0
    %738 = vmatprep.subr.bf16.mxu0 0
    %739 = vmatpush1.bf16.msra.mxu0 0
    %740 = vmatprep.subr.bf16.mxu0 0
    %741 = vmatpush1.bf16.msra.mxu0 0
    %742 = vmatprep.subr.bf16.mxu0 0
    %743 = vmatpush1.bf16.msra.mxu0 0
    %744 = vmatprep.subr.bf16.mxu0 0
    %745 = vmatpush1.bf16.msra.mxu0 0
    %746 = vmatprep.subr.bf16.mxu0 0
    %747 = vmatpush1.bf16.msra.mxu0 0
    %748 = vmatprep.subr.bf16.mxu0 0
    %749 = vmatpush1.bf16.msra.mxu0 0
    %750 = vmatprep.subr.bf16.mxu0 0
    %751 = vmatpush1.bf16.msra.mxu0 %v436
    %752 = vmatprep.subr.bf16.mxu0 0
    %753 = vmatpush1.bf16.msra.mxu0 %v435
    %754 = vmatprep.subr.bf16.mxu0 0
    %755 = vmatpush2.bf16.msra.mxu0 0
    %756 = vmatprep.subr.bf16.mxu0 0
    %757 = vmatpush2.bf16.msra.mxu0 0
    %758 = vmatprep.subr.bf16.mxu0 0
    %759 = vmatpush2.bf16.msra.mxu0 0
    %760 = vmatprep.subr.bf16.mxu0 0
    %761 = vmatpush2.bf16.msra.mxu0 0
    %762 = vmatprep.subr.bf16.mxu0 0
    %763 = vmatpush2.bf16.msra.mxu0 0
    %764 = vmatprep.subr.bf16.mxu0 0
    %765 = vmatpush2.bf16.msra.mxu0 0
    %766 = vmatprep.subr.bf16.mxu0 0
    %767 = vmatpush2.bf16.msra.mxu0 0
    %768 = vmatprep.subr.bf16.mxu0 0
    %769 = vmatpush2.bf16.msra.mxu0 0
    %770 = vmatprep.mubr.bf16.mxu0 0
    %771 = vmatmul.mubr.bf16.gmra.mxu0 %v736
    %v772 = vpop.f32.mrf.mxu0
    %v773 = vadd.f32 0.0, %v772
    %v774 = vpop.f32.mrf.mxu0
    %v775 = vpop.f32.mrf.mxu0
    %v776 = vpop.f32.mrf.mxu0
    %777 = vdwg.mxu0
    %v778 = vadd.f32 %v311, %v773
    %v779 = vxor.u32 %v730, 2147483648
    %v780 = vmul.f32 %v779, 1.442695
    %v781 = vpow.pop %v780
    %v782 = vadd.f32 %v781, 1.0
    %v783 = vrcp.pop %v782
    %v784 = vmul.f32 1.0, %v783
    %v785 = vtanh.pop %v730
    %v786 = vmul.f32 %v784, %v652
    %788 = vrot.lane.b32.xlu0 %v785, 64
    %v789 = vpop.permute.xlu0 %788
    %v791 = vmul.f32 %v784, %v789
    %793 = vrot.lane.b32.xlu0 %v791, 32
    %v794 = vpop.permute.xlu0 %793
    %v796 = vadd.f32 %v786, %v794
    %v797 = vtanh.pop %v796
    %799 = vrot.lane.b32.xlu0 %v797, 64
    %v800 = vpop.permute.xlu0 %799
    %v802 = vmul.f32 %v784, %v800
    %v803 = vxor.u32 %v778, 2147483648
    %v804 = vmul.f32 %v803, 1.442695
    %v805 = vpow.pop %v804
    %v806 = vadd.f32 %v805, 1.0
    %v807 = vrcp.pop %v806
    %v808 = vmul.f32 1.0, %v807
    %v809 = vtanh.pop %v778
    %v810 = vmul.f32 %v808, %v676
    %812 = vrot.lane.b32.xlu0 %v809, 64
    %v813 = vpop.permute.xlu0 %812
    %v815 = vmul.f32 %v808, %v813
    %817 = vrot.lane.b32.xlu0 %v815, 32
    %v818 = vpop.permute.xlu0 %817
    %v820 = vadd.f32 %v810, %v818
    %v821 = vtanh.pop %v820
    %823 = vrot.lane.b32.xlu0 %v821, 64
    %v824 = vpop.permute.xlu0 %823
    %v826 = vmul.f32 %v808, %v824
    %v827 = vpack.c.bf16 %v802, %v802
    %829 = vrot.lane.b32.xlu0 %v827, 32
    %v830 = vpop.permute.xlu0 %829
    %v832 = vsel %vm127, %v830, 0
    %834 = vmatprep.subr.bf16.mxu0 0
    %835 = vmatpush1.bf16.msra.mxu0 0
    %836 = vmatprep.subr.bf16.mxu0 0
    %837 = vmatpush1.bf16.msra.mxu0 0
    %838 = vmatprep.subr.bf16.mxu0 0
    %839 = vmatpush1.bf16.msra.mxu0 0
    %840 = vmatprep.subr.bf16.mxu0 0
    %841 = vmatpush1.bf16.msra.mxu0 0
    %842 = vmatprep.subr.bf16.mxu0 0
    %843 = vmatpush1.bf16.msra.mxu0 0
    %844 = vmatprep.subr.bf16.mxu0 0
    %845 = vmatpush1.bf16.msra.mxu0 0
    %846 = vmatprep.subr.bf16.mxu0 0
    %847 = vmatpush1.bf16.msra.mxu0 %v376
    %848 = vmatprep.subr.bf16.mxu0 0
    %849 = vmatpush1.bf16.msra.mxu0 %v375
    %850 = vmatprep.subr.bf16.mxu0 0
    %851 = vmatpush2.bf16.msra.mxu0 0
    %852 = vmatprep.subr.bf16.mxu0 0
    %853 = vmatpush2.bf16.msra.mxu0 0
    %854 = vmatprep.subr.bf16.mxu0 0
    %855 = vmatpush2.bf16.msra.mxu0 0
    %856 = vmatprep.subr.bf16.mxu0 0
    %857 = vmatpush2.bf16.msra.mxu0 0
    %858 = vmatprep.subr.bf16.mxu0 0
    %859 = vmatpush2.bf16.msra.mxu0 0
    %860 = vmatprep.subr.bf16.mxu0 0
    %861 = vmatpush2.bf16.msra.mxu0 0
    %862 = vmatprep.subr.bf16.mxu0 0
    %863 = vmatpush2.bf16.msra.mxu0 0
    %864 = vmatprep.subr.bf16.mxu0 0
    %865 = vmatpush2.bf16.msra.mxu0 0
    %866 = vmatprep.mubr.bf16.mxu0 0
    %867 = vmatmul.mubr.bf16.gmra.mxu0 %v832
    %v868 = vpop.f32.mrf.mxu0
    %v869 = vadd.f32 0.0, %v868
    %v870 = vpop.f32.mrf.mxu0
    %v871 = vpop.f32.mrf.mxu0
    %v872 = vpop.f32.mrf.mxu0
    %873 = vdwg.mxu0
    %v874 = vadd.f32 %v309, %v869
    %v875 = vpack.c.bf16 %v826, %v826
    %877 = vrot.lane.b32.xlu0 %v875, 32
    %v878 = vpop.permute.xlu0 %877
    %v880 = vsel %vm127, %v878, 0
    %882 = vmatprep.subr.bf16.mxu0 0
    %883 = vmatpush1.bf16.msra.mxu0 0
    %884 = vmatprep.subr.bf16.mxu0 0
    %885 = vmatpush1.bf16.msra.mxu0 0
    %886 = vmatprep.subr.bf16.mxu0 0
    %887 = vmatpush1.bf16.msra.mxu0 0
    %888 = vmatprep.subr.bf16.mxu0 0
    %889 = vmatpush1.bf16.msra.mxu0 0
    %890 = vmatprep.subr.bf16.mxu0 0
    %891 = vmatpush1.bf16.msra.mxu0 0
    %892 = vmatprep.subr.bf16.mxu0 0
    %893 = vmatpush1.bf16.msra.mxu0 0
    %894 = vmatprep.subr.bf16.mxu0 0
    %895 = vmatpush1.bf16.msra.mxu0 %v436
    %896 = vmatprep.subr.bf16.mxu0 0
    %897 = vmatpush1.bf16.msra.mxu0 %v435
    %898 = vmatprep.subr.bf16.mxu0 0
    %899 = vmatpush2.bf16.msra.mxu0 0
    %900 = vmatprep.subr.bf16.mxu0 0
    %901 = vmatpush2.bf16.msra.mxu0 0
    %902 = vmatprep.subr.bf16.mxu0 0
    %903 = vmatpush2.bf16.msra.mxu0 0
    %904 = vmatprep.subr.bf16.mxu0 0
    %905 = vmatpush2.bf16.msra.mxu0 0
    %906 = vmatprep.subr.bf16.mxu0 0
    %907 = vmatpush2.bf16.msra.mxu0 0
    %908 = vmatprep.subr.bf16.mxu0 0
    %909 = vmatpush2.bf16.msra.mxu0 0
    %910 = vmatprep.subr.bf16.mxu0 0
    %911 = vmatpush2.bf16.msra.mxu0 0
    %912 = vmatprep.subr.bf16.mxu0 0
    %913 = vmatpush2.bf16.msra.mxu0 0
    %914 = vmatprep.mubr.bf16.mxu0 0
    %915 = vmatmul.mubr.bf16.gmra.mxu0 %v880
    %v916 = vpop.f32.mrf.mxu0
    %v917 = vadd.f32 0.0, %v916
    %v918 = vpop.f32.mrf.mxu0
    %v919 = vpop.f32.mrf.mxu0
    %v920 = vpop.f32.mrf.mxu0
    %921 = vdwg.mxu0
    %v922 = vadd.f32 %v305, %v917
    %v923 = vxor.u32 %v874, 2147483648
    %v924 = vmul.f32 %v923, 1.442695
    %v925 = vpow.pop %v924
    %v926 = vadd.f32 %v925, 1.0
    %v927 = vrcp.pop %v926
    %v928 = vmul.f32 1.0, %v927
    %v929 = vtanh.pop %v874
    %v930 = vmul.f32 %v928, %v796
    %932 = vrot.lane.b32.xlu0 %v929, 64
    %v933 = vpop.permute.xlu0 %932
    %v935 = vmul.f32 %v928, %v933
    %937 = vrot.lane.b32.xlu0 %v935, 32
    %v938 = vpop.permute.xlu0 %937
    %v940 = vadd.f32 %v930, %v938
    %v941 = vtanh.pop %v940
    %943 = vrot.lane.b32.xlu0 %v941, 64
    %v944 = vpop.permute.xlu0 %943
    %v946 = vmul.f32 %v928, %v944
    %v947 = vxor.u32 %v922, 2147483648
    %v948 = vmul.f32 %v947, 1.442695
    %v949 = vpow.pop %v948
    %v950 = vadd.f32 %v949, 1.0
    %v951 = vrcp.pop %v950
    %v952 = vmul.f32 1.0, %v951
    %v953 = vtanh.pop %v922
    %v954 = vmul.f32 %v952, %v820
    %956 = vrot.lane.b32.xlu0 %v953, 64
    %v957 = vpop.permute.xlu0 %956
    %v959 = vmul.f32 %v952, %v957
    %961 = vrot.lane.b32.xlu0 %v959, 32
    %v962 = vpop.permute.xlu0 %961
    %v964 = vadd.f32 %v954, %v962
    %v965 = vtanh.pop %v964
    %967 = vrot.lane.b32.xlu0 %v965, 64
    %v968 = vpop.permute.xlu0 %967
    %v970 = vmul.f32 %v952, %v968
    %v971 = vpack.c.bf16 %v946, %v946
    %973 = vrot.lane.b32.xlu0 %v971, 32
    %v974 = vpop.permute.xlu0 %973
    %v976 = vsel %vm127, %v974, 0
    %978 = vmatprep.subr.bf16.mxu0 0
    %979 = vmatpush1.bf16.msra.mxu0 0
    %980 = vmatprep.subr.bf16.mxu0 0
    %981 = vmatpush1.bf16.msra.mxu0 0
    %982 = vmatprep.subr.bf16.mxu0 0
    %983 = vmatpush1.bf16.msra.mxu0 0
    %984 = vmatprep.subr.bf16.mxu0 0
    %985 = vmatpush1.bf16.msra.mxu0 0
    %986 = vmatprep.subr.bf16.mxu0 0
    %987 = vmatpush1.bf16.msra.mxu0 0
    %988 = vmatprep.subr.bf16.mxu0 0
    %989 = vmatpush1.bf16.msra.mxu0 0
    %990 = vmatprep.subr.bf16.mxu0 0
    %991 = vmatpush1.bf16.msra.mxu0 %v376
    %992 = vmatprep.subr.bf16.mxu0 0
    %993 = vmatpush1.bf16.msra.mxu0 %v375
    %994 = vmatprep.subr.bf16.mxu0 0
    %995 = vmatpush2.bf16.msra.mxu0 0
    %996 = vmatprep.subr.bf16.mxu0 0
    %997 = vmatpush2.bf16.msra.mxu0 0
    %998 = vmatprep.subr.bf16.mxu0 0
    %999 = vmatpush2.bf16.msra.mxu0 0
    %1000 = vmatprep.subr.bf16.mxu0 0
    %1001 = vmatpush2.bf16.msra.mxu0 0
    %1002 = vmatprep.subr.bf16.mxu0 0
    %1003 = vmatpush2.bf16.msra.mxu0 0
    %1004 = vmatprep.subr.bf16.mxu0 0
    %1005 = vmatpush2.bf16.msra.mxu0 0
    %1006 = vmatprep.subr.bf16.mxu0 0
    %1007 = vmatpush2.bf16.msra.mxu0 0
    %1008 = vmatprep.subr.bf16.mxu0 0
    %1009 = vmatpush2.bf16.msra.mxu0 0
    %1010 = vmatprep.mubr.bf16.mxu0 0
    %1011 = vmatmul.mubr.bf16.gmra.mxu0 %v976
    %v1012 = vpop.f32.mrf.mxu0
    %v1013 = vadd.f32 0.0, %v1012
    %v1014 = vpop.f32.mrf.mxu0
    %v1015 = vpop.f32.mrf.mxu0
    %v1016 = vpop.f32.mrf.mxu0
    %1017 = vdwg.mxu0
    %v1018 = vadd.f32 %v313, %v1013
    %v1019 = vpack.c.bf16 %v970, %v970
    %1021 = vrot.lane.b32.xlu0 %v1019, 32
    %v1022 = vpop.permute.xlu0 %1021
    %v1024 = vsel %vm127, %v1022, 0
    %1026 = vmatprep.subr.bf16.mxu0 0
    %1027 = vmatpush1.bf16.msra.mxu0 0
    %1028 = vmatprep.subr.bf16.mxu0 0
    %1029 = vmatpush1.bf16.msra.mxu0 0
    %1030 = vmatprep.subr.bf16.mxu0 0
    %1031 = vmatpush1.bf16.msra.mxu0 0
    %1032 = vmatprep.subr.bf16.mxu0 0
    %1033 = vmatpush1.bf16.msra.mxu0 0
    %1034 = vmatprep.subr.bf16.mxu0 0
    %1035 = vmatpush1.bf16.msra.mxu0 0
    %1036 = vmatprep.subr.bf16.mxu0 0
    %1037 = vmatpush1.bf16.msra.mxu0 0
    %1038 = vmatprep.subr.bf16.mxu0 0
    %1039 = vmatpush1.bf16.msra.mxu0 %v436
    %1040 = vmatprep.subr.bf16.mxu0 0
    %1041 = vmatpush1.bf16.msra.mxu0 %v435
    %1042 = vmatprep.subr.bf16.mxu0 0
    %1043 = vmatpush2.bf16.msra.mxu0 0
    %1044 = vmatprep.subr.bf16.mxu0 0
    %1045 = vmatpush2.bf16.msra.mxu0 0
    %1046 = vmatprep.subr.bf16.mxu0 0
    %1047 = vmatpush2.bf16.msra.mxu0 0
    %1048 = vmatprep.subr.bf16.mxu0 0
    %1049 = vmatpush2.bf16.msra.mxu0 0
    %1050 = vmatprep.subr.bf16.mxu0 0
    %1051 = vmatpush2.bf16.msra.mxu0 0
    %1052 = vmatprep.subr.bf16.mxu0 0
    %1053 = vmatpush2.bf16.msra.mxu0 0
    %1054 = vmatprep.subr.bf16.mxu0 0
    %1055 = vmatpush2.bf16.msra.mxu0 0
    %1056 = vmatprep.subr.bf16.mxu0 0
    %1057 = vmatpush2.bf16.msra.mxu0 0
    %1058 = vmatprep.mubr.bf16.mxu0 0
    %1059 = vmatmul.mubr.bf16.gmra.mxu0 %v1024
    %v1060 = vpop.f32.mrf.mxu0
    %v1061 = vadd.f32 0.0, %v1060
    %v1062 = vpop.f32.mrf.mxu0
    %v1063 = vpop.f32.mrf.mxu0
    %v1064 = vpop.f32.mrf.mxu0
    %1065 = vdwg.mxu0
    %v1066 = vadd.f32 %v301, %v1061
    %v1067 = vxor.u32 %v1018, 2147483648
    %v1068 = vmul.f32 %v1067, 1.442695
    %v1069 = vpow.pop %v1068
    %v1070 = vadd.f32 %v1069, 1.0
    %v1071 = vrcp.pop %v1070
    %v1072 = vmul.f32 1.0, %v1071
    %v1073 = vtanh.pop %v1018
    %v1074 = vmul.f32 %v1072, %v940
    %1076 = vrot.lane.b32.xlu0 %v1073, 64
    %v1077 = vpop.permute.xlu0 %1076
    %v1079 = vmul.f32 %v1072, %v1077
    %1081 = vrot.lane.b32.xlu0 %v1079, 32
    %v1082 = vpop.permute.xlu0 %1081
    %v1084 = vadd.f32 %v1074, %v1082
    %v1085 = vtanh.pop %v1084
    %1087 = vrot.lane.b32.xlu0 %v1085, 64
    %v1088 = vpop.permute.xlu0 %1087
    %v1090 = vmul.f32 %v1072, %v1088
    %v1091 = vxor.u32 %v1066, 2147483648
    %v1092 = vmul.f32 %v1091, 1.442695
    %v1093 = vpow.pop %v1092
    %v1094 = vadd.f32 %v1093, 1.0
    %v1095 = vrcp.pop %v1094
    %v1096 = vmul.f32 1.0, %v1095
    %v1097 = vtanh.pop %v1066
    %v1098 = vmul.f32 %v1096, %v964
    %1100 = vrot.lane.b32.xlu0 %v1097, 64
    %v1101 = vpop.permute.xlu0 %1100
    %v1103 = vmul.f32 %v1096, %v1101
    %1105 = vrot.lane.b32.xlu0 %v1103, 32
    %v1106 = vpop.permute.xlu0 %1105
    %v1108 = vadd.f32 %v1098, %v1106
    %v1109 = vtanh.pop %v1108
    %1111 = vrot.lane.b32.xlu0 %v1109, 64
    %v1112 = vpop.permute.xlu0 %1111
    %v1114 = vmul.f32 %v1096, %v1112
    %v1115 = vpack.c.bf16 %v1090, %v1090
    %1117 = vrot.lane.b32.xlu0 %v1115, 32
    %v1118 = vpop.permute.xlu0 %1117
    %v1120 = vsel %vm127, %v1118, 0
    %1122 = vmatprep.subr.bf16.mxu0 0
    %1123 = vmatpush1.bf16.msra.mxu0 0
    %1124 = vmatprep.subr.bf16.mxu0 0
    %1125 = vmatpush1.bf16.msra.mxu0 0
    %1126 = vmatprep.subr.bf16.mxu0 0
    %1127 = vmatpush1.bf16.msra.mxu0 0
    %1128 = vmatprep.subr.bf16.mxu0 0
    %1129 = vmatpush1.bf16.msra.mxu0 0
    %1130 = vmatprep.subr.bf16.mxu0 0
    %1131 = vmatpush1.bf16.msra.mxu0 0
    %1132 = vmatprep.subr.bf16.mxu0 0
    %1133 = vmatpush1.bf16.msra.mxu0 0
    %1134 = vmatprep.subr.bf16.mxu0 0
    %1135 = vmatpush1.bf16.msra.mxu0 %v376
    %1136 = vmatprep.subr.bf16.mxu0 0
    %1137 = vmatpush1.bf16.msra.mxu0 %v375
    %1138 = vmatprep.subr.bf16.mxu0 0
    %1139 = vmatpush2.bf16.msra.mxu0 0
    %1140 = vmatprep.subr.bf16.mxu0 0
    %1141 = vmatpush2.bf16.msra.mxu0 0
    %1142 = vmatprep.subr.bf16.mxu0 0
    %1143 = vmatpush2.bf16.msra.mxu0 0
    %1144 = vmatprep.subr.bf16.mxu0 0
    %1145 = vmatpush2.bf16.msra.mxu0 0
    %1146 = vmatprep.subr.bf16.mxu0 0
    %1147 = vmatpush2.bf16.msra.mxu0 0
    %1148 = vmatprep.subr.bf16.mxu0 0
    %1149 = vmatpush2.bf16.msra.mxu0 0
    %1150 = vmatprep.subr.bf16.mxu0 0
    %1151 = vmatpush2.bf16.msra.mxu0 0
    %1152 = vmatprep.subr.bf16.mxu0 0
    %1153 = vmatpush2.bf16.msra.mxu0 0
    %1154 = vmatprep.mubr.bf16.mxu0 0
    %1155 = vmatmul.mubr.bf16.gmra.mxu0 %v1120
    %v1156 = vpop.f32.mrf.mxu0
    %v1157 = vadd.f32 0.0, %v1156
    %v1158 = vpop.f32.mrf.mxu0
    %v1159 = vpop.f32.mrf.mxu0
    %v1160 = vpop.f32.mrf.mxu0
    %1161 = vdwg.mxu0
    %v1162 = vadd.f32 %v319, %v1157
    %v1163 = vpack.c.bf16 %v1114, %v1114
    %1165 = vrot.lane.b32.xlu0 %v1163, 32
    %v1166 = vpop.permute.xlu0 %1165
    %v1168 = vsel %vm127, %v1166, 0
    %1170 = vmatprep.subr.bf16.mxu0 0
    %1171 = vmatpush1.bf16.msra.mxu0 0
    %1172 = vmatprep.subr.bf16.mxu0 0
    %1173 = vmatpush1.bf16.msra.mxu0 0
    %1174 = vmatprep.subr.bf16.mxu0 0
    %1175 = vmatpush1.bf16.msra.mxu0 0
    %1176 = vmatprep.subr.bf16.mxu0 0
    %1177 = vmatpush1.bf16.msra.mxu0 0
    %1178 = vmatprep.subr.bf16.mxu0 0
    %1179 = vmatpush1.bf16.msra.mxu0 0
    %1180 = vmatprep.subr.bf16.mxu0 0
    %1181 = vmatpush1.bf16.msra.mxu0 0
    %1182 = vmatprep.subr.bf16.mxu0 0
    %1183 = vmatpush1.bf16.msra.mxu0 %v436
    %1184 = vmatprep.subr.bf16.mxu0 0
    %1185 = vmatpush1.bf16.msra.mxu0 %v435
    %1186 = vmatprep.subr.bf16.mxu0 0
    %1187 = vmatpush2.bf16.msra.mxu0 0
    %1188 = vmatprep.subr.bf16.mxu0 0
    %1189 = vmatpush2.bf16.msra.mxu0 0
    %1190 = vmatprep.subr.bf16.mxu0 0
    %1191 = vmatpush2.bf16.msra.mxu0 0
    %1192 = vmatprep.subr.bf16.mxu0 0
    %1193 = vmatpush2.bf16.msra.mxu0 0
    %1194 = vmatprep.subr.bf16.mxu0 0
    %1195 = vmatpush2.bf16.msra.mxu0 0
    %1196 = vmatprep.subr.bf16.mxu0 0
    %1197 = vmatpush2.bf16.msra.mxu0 0
    %1198 = vmatprep.subr.bf16.mxu0 0
    %1199 = vmatpush2.bf16.msra.mxu0 0
    %1200 = vmatprep.subr.bf16.mxu0 0
    %1201 = vmatpush2.bf16.msra.mxu0 0
    %1202 = vmatprep.mubr.bf16.mxu0 0
    %1203 = vmatmul.mubr.bf16.gmra.mxu0 %v1168
    %v1204 = vpop.f32.mrf.mxu0
    %v1205 = vadd.f32 0.0, %v1204
    %v1206 = vpop.f32.mrf.mxu0
    %v1207 = vpop.f32.mrf.mxu0
    %v1208 = vpop.f32.mrf.mxu0
    %1209 = vdwg.mxu0
    %v1210 = vadd.f32 %v295, %v1205
    %v1211 = vxor.u32 %v1162, 2147483648
    %v1212 = vmul.f32 %v1211, 1.442695
    %v1213 = vpow.pop %v1212
    %v1214 = vadd.f32 %v1213, 1.0
    %v1215 = vrcp.pop %v1214
    %v1216 = vmul.f32 1.0, %v1215
    %v1217 = vtanh.pop %v1162
    %v1218 = vmul.f32 %v1216, %v1084
    %1220 = vrot.lane.b32.xlu0 %v1217, 64
    %v1221 = vpop.permute.xlu0 %1220
    %v1223 = vmul.f32 %v1216, %v1221
    %1225 = vrot.lane.b32.xlu0 %v1223, 32
    %v1226 = vpop.permute.xlu0 %1225
    %v1228 = vadd.f32 %v1218, %v1226
    %v1229 = vtanh.pop %v1228
    %1231 = vrot.lane.b32.xlu0 %v1229, 64
    %v1232 = vpop.permute.xlu0 %1231
    %v1234 = vmul.f32 %v1216, %v1232
    %v1235 = vxor.u32 %v1210, 2147483648
    %v1236 = vmul.f32 %v1235, 1.442695
    %v1237 = vpow.pop %v1236
    %v1238 = vadd.f32 %v1237, 1.0
    %v1239 = vrcp.pop %v1238
    %v1240 = vmul.f32 1.0, %v1239
    %v1241 = vtanh.pop %v1210
    %v1242 = vmul.f32 %v1240, %v1108
    %1244 = vrot.lane.b32.xlu0 %v1241, 64
    %v1245 = vpop.permute.xlu0 %1244
    %v1247 = vmul.f32 %v1240, %v1245
    %1249 = vrot.lane.b32.xlu0 %v1247, 32
    %v1250 = vpop.permute.xlu0 %1249
    %v1252 = vadd.f32 %v1242, %v1250
    %v1253 = vtanh.pop %v1252
    %1255 = vrot.lane.b32.xlu0 %v1253, 64
    %v1256 = vpop.permute.xlu0 %1255
    %v1258 = vmul.f32 %v1240, %v1256
    %v1259 = vpack.c.bf16 %v1234, %v1234
    %1261 = vrot.lane.b32.xlu0 %v1259, 32
    %v1262 = vpop.permute.xlu0 %1261
    %v1264 = vsel %vm127, %v1262, 0
    %1266 = vmatprep.subr.bf16.mxu0 0
    %1267 = vmatpush1.bf16.msra.mxu0 0
    %1268 = vmatprep.subr.bf16.mxu0 0
    %1269 = vmatpush1.bf16.msra.mxu0 0
    %1270 = vmatprep.subr.bf16.mxu0 0
    %1271 = vmatpush1.bf16.msra.mxu0 0
    %1272 = vmatprep.subr.bf16.mxu0 0
    %1273 = vmatpush1.bf16.msra.mxu0 0
    %1274 = vmatprep.subr.bf16.mxu0 0
    %1275 = vmatpush1.bf16.msra.mxu0 0
    %1276 = vmatprep.subr.bf16.mxu0 0
    %1277 = vmatpush1.bf16.msra.mxu0 0
    %1278 = vmatprep.subr.bf16.mxu0 0
    %1279 = vmatpush1.bf16.msra.mxu0 %v376
    %1280 = vmatprep.subr.bf16.mxu0 0
    %1281 = vmatpush1.bf16.msra.mxu0 %v375
    %1282 = vmatprep.subr.bf16.mxu0 0
    %1283 = vmatpush2.bf16.msra.mxu0 0
    %1284 = vmatprep.subr.bf16.mxu0 0
    %1285 = vmatpush2.bf16.msra.mxu0 0
    %1286 = vmatprep.subr.bf16.mxu0 0
    %1287 = vmatpush2.bf16.msra.mxu0 0
    %1288 = vmatprep.subr.bf16.mxu0 0
    %1289 = vmatpush2.bf16.msra.mxu0 0
    %1290 = vmatprep.subr.bf16.mxu0 0
    %1291 = vmatpush2.bf16.msra.mxu0 0
    %1292 = vmatprep.subr.bf16.mxu0 0
    %1293 = vmatpush2.bf16.msra.mxu0 0
    %1294 = vmatprep.subr.bf16.mxu0 0
    %1295 = vmatpush2.bf16.msra.mxu0 0
    %1296 = vmatprep.subr.bf16.mxu0 0
    %1297 = vmatpush2.bf16.msra.mxu0 0
    %1298 = vmatprep.mubr.bf16.mxu0 0
    %1299 = vmatmul.mubr.bf16.gmra.mxu0 %v1264
    %v1300 = vpop.f32.mrf.mxu0
    %v1301 = vadd.f32 0.0, %v1300
    %v1302 = vpop.f32.mrf.mxu0
    %v1303 = vpop.f32.mrf.mxu0
    %v1304 = vpop.f32.mrf.mxu0
    %1305 = vdwg.mxu0
    %v1306 = vadd.f32 %v323, %v1301
    %v1307 = vpack.c.bf16 %v1258, %v1258
    %1309 = vrot.lane.b32.xlu0 %v1307, 32
    %v1310 = vpop.permute.xlu0 %1309
    %v1312 = vsel %vm127, %v1310, 0
    %1314 = vmatprep.subr.bf16.mxu0 0
    %1315 = vmatpush1.bf16.msra.mxu0 0
    %1316 = vmatprep.subr.bf16.mxu0 0
    %1317 = vmatpush1.bf16.msra.mxu0 0
    %1318 = vmatprep.subr.bf16.mxu0 0
    %1319 = vmatpush1.bf16.msra.mxu0 0
    %1320 = vmatprep.subr.bf16.mxu0 0
    %1321 = vmatpush1.bf16.msra.mxu0 0
    %1322 = vmatprep.subr.bf16.mxu0 0
    %1323 = vmatpush1.bf16.msra.mxu0 0
    %1324 = vmatprep.subr.bf16.mxu0 0
    %1325 = vmatpush1.bf16.msra.mxu0 0
    %1326 = vmatprep.subr.bf16.mxu0 0
    %1327 = vmatpush1.bf16.msra.mxu0 %v436
    %1328 = vmatprep.subr.bf16.mxu0 0
    %1329 = vmatpush1.bf16.msra.mxu0 %v435
    %1330 = vmatprep.subr.bf16.mxu0 0
    %1331 = vmatpush2.bf16.msra.mxu0 0
    %1332 = vmatprep.subr.bf16.mxu0 0
    %1333 = vmatpush2.bf16.msra.mxu0 0
    %1334 = vmatprep.subr.bf16.mxu0 0
    %1335 = vmatpush2.bf16.msra.mxu0 0
    %1336 = vmatprep.subr.bf16.mxu0 0
    %1337 = vmatpush2.bf16.msra.mxu0 0
    %1338 = vmatprep.subr.bf16.mxu0 0
    %1339 = vmatpush2.bf16.msra.mxu0 0
    %1340 = vmatprep.subr.bf16.mxu0 0
    %1341 = vmatpush2.bf16.msra.mxu0 0
    %1342 = vmatprep.subr.bf16.mxu0 0
    %1343 = vmatpush2.bf16.msra.mxu0 0
    %1344 = vmatprep.subr.bf16.mxu0 0
    %1345 = vmatpush2.bf16.msra.mxu0 0
    %1346 = vmatprep.mubr.bf16.mxu0 0
    %1347 = vmatmul.mubr.bf16.gmra.mxu0 %v1312
    %v1348 = vpop.f32.mrf.mxu0
    %v1349 = vadd.f32 0.0, %v1348
    %v1350 = vpop.f32.mrf.mxu0
    %v1351 = vpop.f32.mrf.mxu0
    %v1352 = vpop.f32.mrf.mxu0
    %1353 = vdwg.mxu0
    %v1354 = vadd.f32 %v291, %v1349
    %v1355 = vxor.u32 %v1306, 2147483648
    %v1356 = vmul.f32 %v1355, 1.442695
    %v1357 = vpow.pop %v1356
    %v1358 = vadd.f32 %v1357, 1.0
    %v1359 = vrcp.pop %v1358
    %v1360 = vmul.f32 1.0, %v1359
    %v1361 = vtanh.pop %v1306
    %v1362 = vmul.f32 %v1360, %v1228
    %1364 = vrot.lane.b32.xlu0 %v1361, 64
    %v1365 = vpop.permute.xlu0 %1364
    %v1367 = vmul.f32 %v1360, %v1365
    %1369 = vrot.lane.b32.xlu0 %v1367, 32
    %v1370 = vpop.permute.xlu0 %1369
    %v1372 = vadd.f32 %v1362, %v1370
    %v1373 = vtanh.pop %v1372
    %1375 = vrot.lane.b32.xlu0 %v1373, 64
    %v1376 = vpop.permute.xlu0 %1375
    %v1378 = vmul.f32 %v1360, %v1376
    %v1379 = vxor.u32 %v1354, 2147483648
    %v1380 = vmul.f32 %v1379, 1.442695
    %v1381 = vpow.pop %v1380
    %v1382 = vadd.f32 %v1381, 1.0
    %v1383 = vrcp.pop %v1382
    %v1384 = vmul.f32 1.0, %v1383
    %v1385 = vtanh.pop %v1354
    %v1386 = vmul.f32 %v1384, %v1252
    %1388 = vrot.lane.b32.xlu0 %v1385, 64
    %v1389 = vpop.permute.xlu0 %1388
    %v1391 = vmul.f32 %v1384, %v1389
    %1393 = vrot.lane.b32.xlu0 %v1391, 32
    %v1394 = vpop.permute.xlu0 %1393
    %v1396 = vadd.f32 %v1386, %v1394
    %v1397 = vtanh.pop %v1396
    %1399 = vrot.lane.b32.xlu0 %v1397, 64
    %v1400 = vpop.permute.xlu0 %1399
    %v1402 = vmul.f32 %v1384, %v1400
    %v1403 = vld [vmem:[%s6] sm:$0xff]
    %v1404 = vld [vmem:[%s6 + $0x8] sm:$0xff]
    %v1405 = vld [vmem:[%s6 + $0x10] sm:$0xff]
    %v1406 = vld [vmem:[%s6 + $0x18] sm:$0xff]
    %v1407 = vld [vmem:[%s7] sm:$0xff]
    %v1408 = vld [vmem:[%s7 + $0x8] sm:$0xff]
    %v1409 = vld [vmem:[%s7 + $0x10] sm:$0xff]
    %v1410 = vld [vmem:[%s7 + $0x18] sm:$0xff]
    %v1411 = vld [vmem:[%s8] sm:$0xf]
    %v1412 = vld [vmem:[%s8 + $0x4] sm:$0xf]
    %v1413 = vld [vmem:[%s8 + $0x8] sm:$0xf]
    %v1414 = vld [vmem:[%s8 + $0xc] sm:$0xf]
    %v1415 = vld [vmem:[%s10] sm:$0x3]
    %v1416 = vpack.c.bf16 %v1402, %v1402
    %1418 = vrot.lane.b32.xlu0 %v1416, 32
    %v1419 = vpop.permute.xlu0 %1418
    %v1424 = vunpack.c.l.b16 %v1407
    %v1425 = vunpack.c.h.b16 %v1407
    %v1426 = vunpack.c.l.b16 %v1408
    %v1427 = vunpack.c.h.b16 %v1408
    %v1428 = vunpack.c.l.b16 %v1409
    %v1429 = vunpack.c.h.b16 %v1409
    %v1430 = vunpack.c.l.b16 %v1410
    %v1431 = vunpack.c.h.b16 %v1410
    %v1432 = vpack.c.b16 %v1426, %v1424
    %v1433 = vpack.c.b16 %v1427, %v1425
    %v1434 = vpack.c.b16 %v1430, %v1428
    %v1435 = vpack.c.b16 %v1431, %v1429
    %v1441 = vsel %vm127, %v1419, 0
    %1443 = vmatprep.subr.bf16.mxu0 0
    %1444 = vmatpush1.bf16.msra.mxu0 0
    %1445 = vmatprep.subr.bf16.mxu0 0
    %1446 = vmatpush1.bf16.msra.mxu0 0
    %1447 = vmatprep.subr.bf16.mxu0 0
    %1448 = vmatpush1.bf16.msra.mxu0 0
    %1449 = vmatprep.subr.bf16.mxu0 0
    %1450 = vmatpush1.bf16.msra.mxu0 0
    %1451 = vmatprep.subr.bf16.mxu0 0
    %1452 = vmatpush1.bf16.msra.mxu0 0
    %1453 = vmatprep.subr.bf16.mxu0 0
    %1454 = vmatpush1.bf16.msra.mxu0 0
    %1455 = vmatprep.subr.bf16.mxu0 %v1435
    %1456 = vmatpush1.bf16.msra.mxu0 %v1434
    %1457 = vmatprep.subr.bf16.mxu0 %v1433
    %1458 = vmatpush1.bf16.msra.mxu0 %v1432
    %1459 = vmatprep.subr.bf16.mxu0 0
    %1460 = vmatpush2.bf16.msra.mxu0 0
    %1461 = vmatprep.subr.bf16.mxu0 0
    %1462 = vmatpush2.bf16.msra.mxu0 0
    %1463 = vmatprep.subr.bf16.mxu0 0
    %1464 = vmatpush2.bf16.msra.mxu0 0
    %1465 = vmatprep.subr.bf16.mxu0 0
    %1466 = vmatpush2.bf16.msra.mxu0 0
    %1467 = vmatprep.subr.bf16.mxu0 0
    %1468 = vmatpush2.bf16.msra.mxu0 0
    %1469 = vmatprep.subr.bf16.mxu0 0
    %1470 = vmatpush2.bf16.msra.mxu0 0
    %1471 = vmatprep.subr.bf16.mxu0 0
    %1472 = vmatpush2.bf16.msra.mxu0 0
    %1473 = vmatprep.subr.bf16.mxu0 0
    %1474 = vmatpush2.bf16.msra.mxu0 0
    %1475 = vmatprep.mubr.bf16.mxu0 0
    %1476 = vmatmul.mubr.bf16.gmra.mxu0 %v1441
    %v1477 = vpop.f32.mrf.mxu0
    %v1478 = vadd.f32 0.0, %v1477
    %v1479 = vpop.f32.mrf.mxu0
    %v1480 = vpop.f32.mrf.mxu0
    %v1481 = vpop.f32.mrf.mxu0
    %1482 = vdwg.mxu0
    %v1487 = vunpack.c.l.b16 %v1403
    %v1488 = vunpack.c.h.b16 %v1403
    %v1489 = vunpack.c.l.b16 %v1404
    %v1490 = vunpack.c.h.b16 %v1404
    %v1491 = vunpack.c.l.b16 %v1405
    %v1492 = vunpack.c.h.b16 %v1405
    %v1493 = vunpack.c.l.b16 %v1406
    %v1494 = vunpack.c.h.b16 %v1406
    %v1495 = vpack.c.b16 %v1489, %v1487
    %v1496 = vpack.c.b16 %v1490, %v1488
    %v1497 = vpack.c.b16 %v1493, %v1491
    %v1498 = vpack.c.b16 %v1494, %v1492
    %1503 = vmatprep.subr.bf16.mxu0 0
    %1504 = vmatpush1.bf16.msra.mxu0 0
    %1505 = vmatprep.subr.bf16.mxu0 0
    %1506 = vmatpush1.bf16.msra.mxu0 0
    %1507 = vmatprep.subr.bf16.mxu0 0
    %1508 = vmatpush1.bf16.msra.mxu0 0
    %1509 = vmatprep.subr.bf16.mxu0 0
    %1510 = vmatpush1.bf16.msra.mxu0 0
    %1511 = vmatprep.subr.bf16.mxu0 0
    %1512 = vmatpush1.bf16.msra.mxu0 0
    %1513 = vmatprep.subr.bf16.mxu0 0
    %1514 = vmatpush1.bf16.msra.mxu0 0
    %1515 = vmatprep.subr.bf16.mxu0 %v1498
    %1516 = vmatpush1.bf16.msra.mxu0 %v1497
    %1517 = vmatprep.subr.bf16.mxu0 %v1496
    %1518 = vmatpush1.bf16.msra.mxu0 %v1495
    %1519 = vmatprep.subr.bf16.mxu0 0
    %1520 = vmatpush2.bf16.msra.mxu0 0
    %1521 = vmatprep.subr.bf16.mxu0 0
    %1522 = vmatpush2.bf16.msra.mxu0 0
    %1523 = vmatprep.subr.bf16.mxu0 0
    %1524 = vmatpush2.bf16.msra.mxu0 0
    %1525 = vmatprep.subr.bf16.mxu0 0
    %1526 = vmatpush2.bf16.msra.mxu0 0
    %1527 = vmatprep.subr.bf16.mxu0 0
    %1528 = vmatpush2.bf16.msra.mxu0 0
    %1529 = vmatprep.subr.bf16.mxu0 0
    %1530 = vmatpush2.bf16.msra.mxu0 0
    %1531 = vmatprep.subr.bf16.mxu0 0
    %1532 = vmatpush2.bf16.msra.mxu0 0
    %1533 = vmatprep.subr.bf16.mxu0 0
    %1534 = vmatpush2.bf16.msra.mxu0 0
    %1535 = vmatprep.mubr.bf16.mxu0 0
    %1536 = vmatmul.mubr.bf16.gmra.mxu0 %v380
    %v1537 = vpop.f32.mrf.mxu0
    %v1538 = vadd.f32 %v1478, %v1537
    %v1539 = vpop.f32.mrf.mxu0
    %v1540 = vpop.f32.mrf.mxu0
    %v1541 = vpop.f32.mrf.mxu0
    %1542 = vdwg.mxu0
    %v1544 = vlaneseq
    %v1545 = vshrl.u32 %v1544, 7
    %v1546 = vsub.s32 0, %v1545
    %v1547 = vrot.slane %v1415, %v1546
    %v1548 = vlaneseq
    %v1549 = vshrl.u32 %v1548, 7
    %v1550 = vsub.s32 1, %v1549
    %v1551 = vrot.slane %v1415, %v1550
    %v1554 = vadd.f32 %v1538, %v1547
    %1555 = vmatprep.subr.bf16.mxu0 0
    %1556 = vmatpush1.bf16.msra.mxu0 0
    %1557 = vmatprep.subr.bf16.mxu0 0
    %1558 = vmatpush1.bf16.msra.mxu0 0
    %1559 = vmatprep.subr.bf16.mxu0 0
    %1560 = vmatpush1.bf16.msra.mxu0 0
    %1561 = vmatprep.subr.bf16.mxu0 0
    %1562 = vmatpush1.bf16.msra.mxu0 0
    %1563 = vmatprep.subr.bf16.mxu0 0
    %1564 = vmatpush1.bf16.msra.mxu0 0
    %1565 = vmatprep.subr.bf16.mxu0 0
    %1566 = vmatpush1.bf16.msra.mxu0 0
    %1567 = vmatprep.subr.bf16.mxu0 %v1435
    %1568 = vmatpush1.bf16.msra.mxu0 %v1434
    %1569 = vmatprep.subr.bf16.mxu0 %v1433
    %1570 = vmatpush1.bf16.msra.mxu0 %v1432
    %1571 = vmatprep.subr.bf16.mxu0 0
    %1572 = vmatpush2.bf16.msra.mxu0 0
    %1573 = vmatprep.subr.bf16.mxu0 0
    %1574 = vmatpush2.bf16.msra.mxu0 0
    %1575 = vmatprep.subr.bf16.mxu0 0
    %1576 = vmatpush2.bf16.msra.mxu0 0
    %1577 = vmatprep.subr.bf16.mxu0 0
    %1578 = vmatpush2.bf16.msra.mxu0 0
    %1579 = vmatprep.subr.bf16.mxu0 0
    %1580 = vmatpush2.bf16.msra.mxu0 0
    %1581 = vmatprep.subr.bf16.mxu0 0
    %1582 = vmatpush2.bf16.msra.mxu0 0
    %1583 = vmatprep.subr.bf16.mxu0 0
    %1584 = vmatpush2.bf16.msra.mxu0 0
    %1585 = vmatprep.subr.bf16.mxu0 0
    %1586 = vmatpush2.bf16.msra.mxu0 0
    %1587 = vmatprep.mubr.bf16.mxu0 0
    %1588 = vmatmul.mubr.bf16.gmra.mxu0 %v1312
    %v1589 = vpop.f32.mrf.mxu0
    %v1590 = vadd.f32 0.0, %v1589
    %v1591 = vpop.f32.mrf.mxu0
    %v1592 = vpop.f32.mrf.mxu0
    %v1593 = vpop.f32.mrf.mxu0
    %1594 = vdwg.mxu0
    %1595 = vmatprep.subr.bf16.mxu0 0
    %1596 = vmatpush1.bf16.msra.mxu0 0
    %1597 = vmatprep.subr.bf16.mxu0 0
    %1598 = vmatpush1.bf16.msra.mxu0 0
    %1599 = vmatprep.subr.bf16.mxu0 0
    %1600 = vmatpush1.bf16.msra.mxu0 0
    %1601 = vmatprep.subr.bf16.mxu0 0
    %1602 = vmatpush1.bf16.msra.mxu0 0
    %1603 = vmatprep.subr.bf16.mxu0 0
    %1604 = vmatpush1.bf16.msra.mxu0 0
    %1605 = vmatprep.subr.bf16.mxu0 0
    %1606 = vmatpush1.bf16.msra.mxu0 0
    %1607 = vmatprep.subr.bf16.mxu0 %v1498
    %1608 = vmatpush1.bf16.msra.mxu0 %v1497
    %1609 = vmatprep.subr.bf16.mxu0 %v1496
    %1610 = vmatpush1.bf16.msra.mxu0 %v1495
    %1611 = vmatprep.subr.bf16.mxu0 0
    %1612 = vmatpush2.bf16.msra.mxu0 0
    %1613 = vmatprep.subr.bf16.mxu0 0
    %1614 = vmatpush2.bf16.msra.mxu0 0
    %1615 = vmatprep.subr.bf16.mxu0 0
    %1616 = vmatpush2.bf16.msra.mxu0 0
    %1617 = vmatprep.subr.bf16.mxu0 0
    %1618 = vmatpush2.bf16.msra.mxu0 0
    %1619 = vmatprep.subr.bf16.mxu0 0
    %1620 = vmatpush2.bf16.msra.mxu0 0
    %1621 = vmatprep.subr.bf16.mxu0 0
    %1622 = vmatpush2.bf16.msra.mxu0 0
    %1623 = vmatprep.subr.bf16.mxu0 0
    %1624 = vmatpush2.bf16.msra.mxu0 0
    %1625 = vmatprep.subr.bf16.mxu0 0
    %1626 = vmatpush2.bf16.msra.mxu0 0
    %1627 = vmatprep.mubr.bf16.mxu0 0
    %1628 = vmatmul.mubr.bf16.gmra.mxu0 %v544
    %v1629 = vpop.f32.mrf.mxu0
    %v1630 = vadd.f32 %v1590, %v1629
    %v1631 = vpop.f32.mrf.mxu0
    %v1632 = vpop.f32.mrf.mxu0
    %v1633 = vpop.f32.mrf.mxu0
    %1634 = vdwg.mxu0
    %v1635 = vadd.f32 %v1630, %v1547
    %1636 = vmatprep.subr.bf16.mxu0 0
    %1637 = vmatpush1.bf16.msra.mxu0 0
    %1638 = vmatprep.subr.bf16.mxu0 0
    %1639 = vmatpush1.bf16.msra.mxu0 0
    %1640 = vmatprep.subr.bf16.mxu0 0
    %1641 = vmatpush1.bf16.msra.mxu0 0
    %1642 = vmatprep.subr.bf16.mxu0 0
    %1643 = vmatpush1.bf16.msra.mxu0 0
    %1644 = vmatprep.subr.bf16.mxu0 0
    %1645 = vmatpush1.bf16.msra.mxu0 0
    %1646 = vmatprep.subr.bf16.mxu0 0
    %1647 = vmatpush1.bf16.msra.mxu0 0
    %1648 = vmatprep.subr.bf16.mxu0 %v1435
    %1649 = vmatpush1.bf16.msra.mxu0 %v1434
    %1650 = vmatprep.subr.bf16.mxu0 %v1433
    %1651 = vmatpush1.bf16.msra.mxu0 %v1432
    %1652 = vmatprep.subr.bf16.mxu0 0
    %1653 = vmatpush2.bf16.msra.mxu0 0
    %1654 = vmatprep.subr.bf16.mxu0 0
    %1655 = vmatpush2.bf16.msra.mxu0 0
    %1656 = vmatprep.subr.bf16.mxu0 0
    %1657 = vmatpush2.bf16.msra.mxu0 0
    %1658 = vmatprep.subr.bf16.mxu0 0
    %1659 = vmatpush2.bf16.msra.mxu0 0
    %1660 = vmatprep.subr.bf16.mxu0 0
    %1661 = vmatpush2.bf16.msra.mxu0 0
    %1662 = vmatprep.subr.bf16.mxu0 0
    %1663 = vmatpush2.bf16.msra.mxu0 0
    %1664 = vmatprep.subr.bf16.mxu0 0
    %1665 = vmatpush2.bf16.msra.mxu0 0
    %1666 = vmatprep.subr.bf16.mxu0 0
    %1667 = vmatpush2.bf16.msra.mxu0 0
    %1668 = vmatprep.mubr.bf16.mxu0 0
    %1669 = vmatmul.mubr.bf16.gmra.mxu0 %v1168
    %v1670 = vpop.f32.mrf.mxu0
    %v1671 = vadd.f32 0.0, %v1670
    %v1672 = vpop.f32.mrf.mxu0
    %v1673 = vpop.f32.mrf.mxu0
    %v1674 = vpop.f32.mrf.mxu0
    %1675 = vdwg.mxu0
    %1676 = vmatprep.subr.bf16.mxu0 0
    %1677 = vmatpush1.bf16.msra.mxu0 0
    %1678 = vmatprep.subr.bf16.mxu0 0
    %1679 = vmatpush1.bf16.msra.mxu0 0
    %1680 = vmatprep.subr.bf16.mxu0 0
    %1681 = vmatpush1.bf16.msra.mxu0 0
    %1682 = vmatprep.subr.bf16.mxu0 0
    %1683 = vmatpush1.bf16.msra.mxu0 0
    %1684 = vmatprep.subr.bf16.mxu0 0
    %1685 = vmatpush1.bf16.msra.mxu0 0
    %1686 = vmatprep.subr.bf16.mxu0 0
    %1687 = vmatpush1.bf16.msra.mxu0 0
    %1688 = vmatprep.subr.bf16.mxu0 %v1498
    %1689 = vmatpush1.bf16.msra.mxu0 %v1497
    %1690 = vmatprep.subr.bf16.mxu0 %v1496
    %1691 = vmatpush1.bf16.msra.mxu0 %v1495
    %1692 = vmatprep.subr.bf16.mxu0 0
    %1693 = vmatpush2.bf16.msra.mxu0 0
    %1694 = vmatprep.subr.bf16.mxu0 0
    %1695 = vmatpush2.bf16.msra.mxu0 0
    %1696 = vmatprep.subr.bf16.mxu0 0
    %1697 = vmatpush2.bf16.msra.mxu0 0
    %1698 = vmatprep.subr.bf16.mxu0 0
    %1699 = vmatpush2.bf16.msra.mxu0 0
    %1700 = vmatprep.subr.bf16.mxu0 0
    %1701 = vmatpush2.bf16.msra.mxu0 0
    %1702 = vmatprep.subr.bf16.mxu0 0
    %1703 = vmatpush2.bf16.msra.mxu0 0
    %1704 = vmatprep.subr.bf16.mxu0 0
    %1705 = vmatpush2.bf16.msra.mxu0 0
    %1706 = vmatprep.subr.bf16.mxu0 0
    %1707 = vmatpush2.bf16.msra.mxu0 0
    %1708 = vmatprep.mubr.bf16.mxu0 0
    %1709 = vmatmul.mubr.bf16.gmra.mxu0 %v688
    %v1710 = vpop.f32.mrf.mxu0
    %v1711 = vadd.f32 %v1671, %v1710
    %v1712 = vpop.f32.mrf.mxu0
    %v1713 = vpop.f32.mrf.mxu0
    %v1714 = vpop.f32.mrf.mxu0
    %1715 = vdwg.mxu0
    %v1716 = vadd.f32 %v1711, %v1547
    %1717 = vmatprep.subr.bf16.mxu0 0
    %1718 = vmatpush1.bf16.msra.mxu0 0
    %1719 = vmatprep.subr.bf16.mxu0 0
    %1720 = vmatpush1.bf16.msra.mxu0 0
    %1721 = vmatprep.subr.bf16.mxu0 0
    %1722 = vmatpush1.bf16.msra.mxu0 0
    %1723 = vmatprep.subr.bf16.mxu0 0
    %1724 = vmatpush1.bf16.msra.mxu0 0
    %1725 = vmatprep.subr.bf16.mxu0 0
    %1726 = vmatpush1.bf16.msra.mxu0 0
    %1727 = vmatprep.subr.bf16.mxu0 0
    %1728 = vmatpush1.bf16.msra.mxu0 0
    %1729 = vmatprep.subr.bf16.mxu0 %v1435
    %1730 = vmatpush1.bf16.msra.mxu0 %v1434
    %1731 = vmatprep.subr.bf16.mxu0 %v1433
    %1732 = vmatpush1.bf16.msra.mxu0 %v1432
    %1733 = vmatprep.subr.bf16.mxu0 0
    %1734 = vmatpush2.bf16.msra.mxu0 0
    %1735 = vmatprep.subr.bf16.mxu0 0
    %1736 = vmatpush2.bf16.msra.mxu0 0
    %1737 = vmatprep.subr.bf16.mxu0 0
    %1738 = vmatpush2.bf16.msra.mxu0 0
    %1739 = vmatprep.subr.bf16.mxu0 0
    %1740 = vmatpush2.bf16.msra.mxu0 0
    %1741 = vmatprep.subr.bf16.mxu0 0
    %1742 = vmatpush2.bf16.msra.mxu0 0
    %1743 = vmatprep.subr.bf16.mxu0 0
    %1744 = vmatpush2.bf16.msra.mxu0 0
    %1745 = vmatprep.subr.bf16.mxu0 0
    %1746 = vmatpush2.bf16.msra.mxu0 0
    %1747 = vmatprep.subr.bf16.mxu0 0
    %1748 = vmatpush2.bf16.msra.mxu0 0
    %1749 = vmatprep.mubr.bf16.mxu0 0
    %1750 = vmatmul.mubr.bf16.gmra.mxu0 %v1024
    %v1751 = vpop.f32.mrf.mxu0
    %v1752 = vadd.f32 0.0, %v1751
    %v1753 = vpop.f32.mrf.mxu0
    %v1754 = vpop.f32.mrf.mxu0
    %v1755 = vpop.f32.mrf.mxu0
    %1756 = vdwg.mxu0
    %1757 = vmatprep.subr.bf16.mxu0 0
    %1758 = vmatpush1.bf16.msra.mxu0 0
    %1759 = vmatprep.subr.bf16.mxu0 0
    %1760 = vmatpush1.bf16.msra.mxu0 0
    %1761 = vmatprep.subr.bf16.mxu0 0
    %1762 = vmatpush1.bf16.msra.mxu0 0
    %1763 = vmatprep.subr.bf16.mxu0 0
    %1764 = vmatpush1.bf16.msra.mxu0 0
    %1765 = vmatprep.subr.bf16.mxu0 0
    %1766 = vmatpush1.bf16.msra.mxu0 0
    %1767 = vmatprep.subr.bf16.mxu0 0
    %1768 = vmatpush1.bf16.msra.mxu0 0
    %1769 = vmatprep.subr.bf16.mxu0 %v1498
    %1770 = vmatpush1.bf16.msra.mxu0 %v1497
    %1771 = vmatprep.subr.bf16.mxu0 %v1496
    %1772 = vmatpush1.bf16.msra.mxu0 %v1495
    %1773 = vmatprep.subr.bf16.mxu0 0
    %1774 = vmatpush2.bf16.msra.mxu0 0
    %1775 = vmatprep.subr.bf16.mxu0 0
    %1776 = vmatpush2.bf16.msra.mxu0 0
    %1777 = vmatprep.subr.bf16.mxu0 0
    %1778 = vmatpush2.bf16.msra.mxu0 0
    %1779 = vmatprep.subr.bf16.mxu0 0
    %1780 = vmatpush2.bf16.msra.mxu0 0
    %1781 = vmatprep.subr.bf16.mxu0 0
    %1782 = vmatpush2.bf16.msra.mxu0 0
    %1783 = vmatprep.subr.bf16.mxu0 0
    %1784 = vmatpush2.bf16.msra.mxu0 0
    %1785 = vmatprep.subr.bf16.mxu0 0
    %1786 = vmatpush2.bf16.msra.mxu0 0
    %1787 = vmatprep.subr.bf16.mxu0 0
    %1788 = vmatpush2.bf16.msra.mxu0 0
    %1789 = vmatprep.mubr.bf16.mxu0 0
    %1790 = vmatmul.mubr.bf16.gmra.mxu0 %v832
    %v1791 = vpop.f32.mrf.mxu0
    %v1792 = vadd.f32 %v1752, %v1791
    %v1793 = vpop.f32.mrf.mxu0
    %v1794 = vpop.f32.mrf.mxu0
    %v1795 = vpop.f32.mrf.mxu0
    %1796 = vdwg.mxu0
    %v1797 = vadd.f32 %v1792, %v1547
    %1798 = vmatprep.subr.bf16.mxu0 0
    %1799 = vmatpush1.bf16.msra.mxu0 0
    %1800 = vmatprep.subr.bf16.mxu0 0
    %1801 = vmatpush1.bf16.msra.mxu0 0
    %1802 = vmatprep.subr.bf16.mxu0 0
    %1803 = vmatpush1.bf16.msra.mxu0 0
    %1804 = vmatprep.subr.bf16.mxu0 0
    %1805 = vmatpush1.bf16.msra.mxu0 0
    %1806 = vmatprep.subr.bf16.mxu0 0
    %1807 = vmatpush1.bf16.msra.mxu0 0
    %1808 = vmatprep.subr.bf16.mxu0 0
    %1809 = vmatpush1.bf16.msra.mxu0 0
    %1810 = vmatprep.subr.bf16.mxu0 %v1435
    %1811 = vmatpush1.bf16.msra.mxu0 %v1434
    %1812 = vmatprep.subr.bf16.mxu0 %v1433
    %1813 = vmatpush1.bf16.msra.mxu0 %v1432
    %1814 = vmatprep.subr.bf16.mxu0 0
    %1815 = vmatpush2.bf16.msra.mxu0 0
    %1816 = vmatprep.subr.bf16.mxu0 0
    %1817 = vmatpush2.bf16.msra.mxu0 0
    %1818 = vmatprep.subr.bf16.mxu0 0
    %1819 = vmatpush2.bf16.msra.mxu0 0
    %1820 = vmatprep.subr.bf16.mxu0 0
    %1821 = vmatpush2.bf16.msra.mxu0 0
    %1822 = vmatprep.subr.bf16.mxu0 0
    %1823 = vmatpush2.bf16.msra.mxu0 0
    %1824 = vmatprep.subr.bf16.mxu0 0
    %1825 = vmatpush2.bf16.msra.mxu0 0
    %1826 = vmatprep.subr.bf16.mxu0 0
    %1827 = vmatpush2.bf16.msra.mxu0 0
    %1828 = vmatprep.subr.bf16.mxu0 0
    %1829 = vmatpush2.bf16.msra.mxu0 0
    %1830 = vmatprep.mubr.bf16.mxu0 0
    %1831 = vmatmul.mubr.bf16.gmra.mxu0 %v880
    %v1832 = vpop.f32.mrf.mxu0
    %v1833 = vadd.f32 0.0, %v1832
    %v1834 = vpop.f32.mrf.mxu0
    %v1835 = vpop.f32.mrf.mxu0
    %v1836 = vpop.f32.mrf.mxu0
    %1837 = vdwg.mxu0
    %1838 = vmatprep.subr.bf16.mxu0 0
    %1839 = vmatpush1.bf16.msra.mxu0 0
    %1840 = vmatprep.subr.bf16.mxu0 0
    %1841 = vmatpush1.bf16.msra.mxu0 0
    %1842 = vmatprep.subr.bf16.mxu0 0
    %1843 = vmatpush1.bf16.msra.mxu0 0
    %1844 = vmatprep.subr.bf16.mxu0 0
    %1845 = vmatpush1.bf16.msra.mxu0 0
    %1846 = vmatprep.subr.bf16.mxu0 0
    %1847 = vmatpush1.bf16.msra.mxu0 0
    %1848 = vmatprep.subr.bf16.mxu0 0
    %1849 = vmatpush1.bf16.msra.mxu0 0
    %1850 = vmatprep.subr.bf16.mxu0 %v1498
    %1851 = vmatpush1.bf16.msra.mxu0 %v1497
    %1852 = vmatprep.subr.bf16.mxu0 %v1496
    %1853 = vmatpush1.bf16.msra.mxu0 %v1495
    %1854 = vmatprep.subr.bf16.mxu0 0
    %1855 = vmatpush2.bf16.msra.mxu0 0
    %1856 = vmatprep.subr.bf16.mxu0 0
    %1857 = vmatpush2.bf16.msra.mxu0 0
    %1858 = vmatprep.subr.bf16.mxu0 0
    %1859 = vmatpush2.bf16.msra.mxu0 0
    %1860 = vmatprep.subr.bf16.mxu0 0
    %1861 = vmatpush2.bf16.msra.mxu0 0
    %1862 = vmatprep.subr.bf16.mxu0 0
    %1863 = vmatpush2.bf16.msra.mxu0 0
    %1864 = vmatprep.subr.bf16.mxu0 0
    %1865 = vmatpush2.bf16.msra.mxu0 0
    %1866 = vmatprep.subr.bf16.mxu0 0
    %1867 = vmatpush2.bf16.msra.mxu0 0
    %1868 = vmatprep.subr.bf16.mxu0 0
    %1869 = vmatpush2.bf16.msra.mxu0 0
    %1870 = vmatprep.mubr.bf16.mxu0 0
    %1871 = vmatmul.mubr.bf16.gmra.mxu0 %v976
    %v1872 = vpop.f32.mrf.mxu0
    %v1873 = vadd.f32 %v1833, %v1872
    %v1874 = vpop.f32.mrf.mxu0
    %v1875 = vpop.f32.mrf.mxu0
    %v1876 = vpop.f32.mrf.mxu0
    %1877 = vdwg.mxu0
    %v1878 = vadd.f32 %v1873, %v1547
    %1879 = vmatprep.subr.bf16.mxu0 0
    %1880 = vmatpush1.bf16.msra.mxu0 0
    %1881 = vmatprep.subr.bf16.mxu0 0
    %1882 = vmatpush1.bf16.msra.mxu0 0
    %1883 = vmatprep.subr.bf16.mxu0 0
    %1884 = vmatpush1.bf16.msra.mxu0 0
    %1885 = vmatprep.subr.bf16.mxu0 0
    %1886 = vmatpush1.bf16.msra.mxu0 0
    %1887 = vmatprep.subr.bf16.mxu0 0
    %1888 = vmatpush1.bf16.msra.mxu0 0
    %1889 = vmatprep.subr.bf16.mxu0 0
    %1890 = vmatpush1.bf16.msra.mxu0 0
    %1891 = vmatprep.subr.bf16.mxu0 %v1435
    %1892 = vmatpush1.bf16.msra.mxu0 %v1434
    %1893 = vmatprep.subr.bf16.mxu0 %v1433
    %1894 = vmatpush1.bf16.msra.mxu0 %v1432
    %1895 = vmatprep.subr.bf16.mxu0 0
    %1896 = vmatpush2.bf16.msra.mxu0 0
    %1897 = vmatprep.subr.bf16.mxu0 0
    %1898 = vmatpush2.bf16.msra.mxu0 0
    %1899 = vmatprep.subr.bf16.mxu0 0
    %1900 = vmatpush2.bf16.msra.mxu0 0
    %1901 = vmatprep.subr.bf16.mxu0 0
    %1902 = vmatpush2.bf16.msra.mxu0 0
    %1903 = vmatprep.subr.bf16.mxu0 0
    %1904 = vmatpush2.bf16.msra.mxu0 0
    %1905 = vmatprep.subr.bf16.mxu0 0
    %1906 = vmatpush2.bf16.msra.mxu0 0
    %1907 = vmatprep.subr.bf16.mxu0 0
    %1908 = vmatpush2.bf16.msra.mxu0 0
    %1909 = vmatprep.subr.bf16.mxu0 0
    %1910 = vmatpush2.bf16.msra.mxu0 0
    %1911 = vmatprep.mubr.bf16.mxu0 0
    %1912 = vmatmul.mubr.bf16.gmra.mxu0 %v736
    %v1913 = vpop.f32.mrf.mxu0
    %v1914 = vadd.f32 0.0, %v1913
    %v1915 = vpop.f32.mrf.mxu0
    %v1916 = vpop.f32.mrf.mxu0
    %v1917 = vpop.f32.mrf.mxu0
    %1918 = vdwg.mxu0
    %1919 = vmatprep.subr.bf16.mxu0 0
    %1920 = vmatpush1.bf16.msra.mxu0 0
    %1921 = vmatprep.subr.bf16.mxu0 0
    %1922 = vmatpush1.bf16.msra.mxu0 0
    %1923 = vmatprep.subr.bf16.mxu0 0
    %1924 = vmatpush1.bf16.msra.mxu0 0
    %1925 = vmatprep.subr.bf16.mxu0 0
    %1926 = vmatpush1.bf16.msra.mxu0 0
    %1927 = vmatprep.subr.bf16.mxu0 0
    %1928 = vmatpush1.bf16.msra.mxu0 0
    %1929 = vmatprep.subr.bf16.mxu0 0
    %1930 = vmatpush1.bf16.msra.mxu0 0
    %1931 = vmatprep.subr.bf16.mxu0 %v1498
    %1932 = vmatpush1.bf16.msra.mxu0 %v1497
    %1933 = vmatprep.subr.bf16.mxu0 %v1496
    %1934 = vmatpush1.bf16.msra.mxu0 %v1495
    %1935 = vmatprep.subr.bf16.mxu0 0
    %1936 = vmatpush2.bf16.msra.mxu0 0
    %1937 = vmatprep.subr.bf16.mxu0 0
    %1938 = vmatpush2.bf16.msra.mxu0 0
    %1939 = vmatprep.subr.bf16.mxu0 0
    %1940 = vmatpush2.bf16.msra.mxu0 0
    %1941 = vmatprep.subr.bf16.mxu0 0
    %1942 = vmatpush2.bf16.msra.mxu0 0
    %1943 = vmatprep.subr.bf16.mxu0 0
    %1944 = vmatpush2.bf16.msra.mxu0 0
    %1945 = vmatprep.subr.bf16.mxu0 0
    %1946 = vmatpush2.bf16.msra.mxu0 0
    %1947 = vmatprep.subr.bf16.mxu0 0
    %1948 = vmatpush2.bf16.msra.mxu0 0
    %1949 = vmatprep.subr.bf16.mxu0 0
    %1950 = vmatpush2.bf16.msra.mxu0 0
    %1951 = vmatprep.mubr.bf16.mxu0 0
    %1952 = vmatmul.mubr.bf16.gmra.mxu0 %v1120
    %v1953 = vpop.f32.mrf.mxu0
    %v1954 = vadd.f32 %v1914, %v1953
    %v1955 = vpop.f32.mrf.mxu0
    %v1956 = vpop.f32.mrf.mxu0
    %v1957 = vpop.f32.mrf.mxu0
    %1958 = vdwg.mxu0
    %v1959 = vadd.f32 %v1954, %v1547
    %1960 = vmatprep.subr.bf16.mxu0 0
    %1961 = vmatpush1.bf16.msra.mxu0 0
    %1962 = vmatprep.subr.bf16.mxu0 0
    %1963 = vmatpush1.bf16.msra.mxu0 0
    %1964 = vmatprep.subr.bf16.mxu0 0
    %1965 = vmatpush1.bf16.msra.mxu0 0
    %1966 = vmatprep.subr.bf16.mxu0 0
    %1967 = vmatpush1.bf16.msra.mxu0 0
    %1968 = vmatprep.subr.bf16.mxu0 0
    %1969 = vmatpush1.bf16.msra.mxu0 0
    %1970 = vmatprep.subr.bf16.mxu0 0
    %1971 = vmatpush1.bf16.msra.mxu0 0
    %1972 = vmatprep.subr.bf16.mxu0 %v1435
    %1973 = vmatpush1.bf16.msra.mxu0 %v1434
    %1974 = vmatprep.subr.bf16.mxu0 %v1433
    %1975 = vmatpush1.bf16.msra.mxu0 %v1432
    %1976 = vmatprep.subr.bf16.mxu0 0
    %1977 = vmatpush2.bf16.msra.mxu0 0
    %1978 = vmatprep.subr.bf16.mxu0 0
    %1979 = vmatpush2.bf16.msra.mxu0 0
    %1980 = vmatprep.subr.bf16.mxu0 0
    %1981 = vmatpush2.bf16.msra.mxu0 0
    %1982 = vmatprep.subr.bf16.mxu0 0
    %1983 = vmatpush2.bf16.msra.mxu0 0
    %1984 = vmatprep.subr.bf16.mxu0 0
    %1985 = vmatpush2.bf16.msra.mxu0 0
    %1986 = vmatprep.subr.bf16.mxu0 0
    %1987 = vmatpush2.bf16.msra.mxu0 0
    %1988 = vmatprep.subr.bf16.mxu0 0
    %1989 = vmatpush2.bf16.msra.mxu0 0
    %1990 = vmatprep.subr.bf16.mxu0 0
    %1991 = vmatpush2.bf16.msra.mxu0 0
    %1992 = vmatprep.mubr.bf16.mxu0 0
    %1993 = vmatmul.mubr.bf16.gmra.mxu0 %v592
    %v1994 = vpop.f32.mrf.mxu0
    %v1995 = vadd.f32 0.0, %v1994
    %v1996 = vpop.f32.mrf.mxu0
    %v1997 = vpop.f32.mrf.mxu0
    %v1998 = vpop.f32.mrf.mxu0
    %1999 = vdwg.mxu0
    %2000 = vmatprep.subr.bf16.mxu0 0
    %2001 = vmatpush1.bf16.msra.mxu0 0
    %2002 = vmatprep.subr.bf16.mxu0 0
    %2003 = vmatpush1.bf16.msra.mxu0 0
    %2004 = vmatprep.subr.bf16.mxu0 0
    %2005 = vmatpush1.bf16.msra.mxu0 0
    %2006 = vmatprep.subr.bf16.mxu0 0
    %2007 = vmatpush1.bf16.msra.mxu0 0
    %2008 = vmatprep.subr.bf16.mxu0 0
    %2009 = vmatpush1.bf16.msra.mxu0 0
    %2010 = vmatprep.subr.bf16.mxu0 0
    %2011 = vmatpush1.bf16.msra.mxu0 0
    %2012 = vmatprep.subr.bf16.mxu0 %v1498
    %2013 = vmatpush1.bf16.msra.mxu0 %v1497
    %2014 = vmatprep.subr.bf16.mxu0 %v1496
    %2015 = vmatpush1.bf16.msra.mxu0 %v1495
    %2016 = vmatprep.subr.bf16.mxu0 0
    %2017 = vmatpush2.bf16.msra.mxu0 0
    %2018 = vmatprep.subr.bf16.mxu0 0
    %2019 = vmatpush2.bf16.msra.mxu0 0
    %2020 = vmatprep.subr.bf16.mxu0 0
    %2021 = vmatpush2.bf16.msra.mxu0 0
    %2022 = vmatprep.subr.bf16.mxu0 0
    %2023 = vmatpush2.bf16.msra.mxu0 0
    %2024 = vmatprep.subr.bf16.mxu0 0
    %2025 = vmatpush2.bf16.msra.mxu0 0
    %2026 = vmatprep.subr.bf16.mxu0 0
    %2027 = vmatpush2.bf16.msra.mxu0 0
    %2028 = vmatprep.subr.bf16.mxu0 0
    %2029 = vmatpush2.bf16.msra.mxu0 0
    %2030 = vmatprep.subr.bf16.mxu0 0
    %2031 = vmatpush2.bf16.msra.mxu0 0
    %2032 = vmatprep.mubr.bf16.mxu0 0
    %2033 = vmatmul.mubr.bf16.gmra.mxu0 %v1264
    %v2034 = vpop.f32.mrf.mxu0
    %v2035 = vadd.f32 %v1995, %v2034
    %v2036 = vpop.f32.mrf.mxu0
    %v2037 = vpop.f32.mrf.mxu0
    %v2038 = vpop.f32.mrf.mxu0
    %2039 = vdwg.mxu0
    %v2040 = vadd.f32 %v2035, %v1547
    %v2041 = vpack.c.bf16 %v1378, %v1378
    %2042 = vmatprep.subr.bf16.mxu0 0
    %2043 = vmatpush1.bf16.msra.mxu0 0
    %2044 = vmatprep.subr.bf16.mxu0 0
    %2045 = vmatpush1.bf16.msra.mxu0 0
    %2046 = vmatprep.subr.bf16.mxu0 0
    %2047 = vmatpush1.bf16.msra.mxu0 0
    %2048 = vmatprep.subr.bf16.mxu0 0
    %2049 = vmatpush1.bf16.msra.mxu0 0
    %2050 = vmatprep.subr.bf16.mxu0 0
    %2051 = vmatpush1.bf16.msra.mxu0 0
    %2052 = vmatprep.subr.bf16.mxu0 0
    %2053 = vmatpush1.bf16.msra.mxu0 0
    %2054 = vmatprep.subr.bf16.mxu0 %v1435
    %2055 = vmatpush1.bf16.msra.mxu0 %v1434
    %2056 = vmatprep.subr.bf16.mxu0 %v1433
    %2057 = vmatpush1.bf16.msra.mxu0 %v1432
    %2058 = vmatprep.subr.bf16.mxu0 0
    %2059 = vmatpush2.bf16.msra.mxu0 0
    %2060 = vmatprep.subr.bf16.mxu0 0
    %2061 = vmatpush2.bf16.msra.mxu0 0
    %2062 = vmatprep.subr.bf16.mxu0 0
    %2063 = vmatpush2.bf16.msra.mxu0 0
    %2064 = vmatprep.subr.bf16.mxu0 0
    %2065 = vmatpush2.bf16.msra.mxu0 0
    %2066 = vmatprep.subr.bf16.mxu0 0
    %2067 = vmatpush2.bf16.msra.mxu0 0
    %2068 = vmatprep.subr.bf16.mxu0 0
    %2069 = vmatpush2.bf16.msra.mxu0 0
    %2070 = vmatprep.subr.bf16.mxu0 0
    %2071 = vmatpush2.bf16.msra.mxu0 0
    %2072 = vmatprep.subr.bf16.mxu0 0
    %2073 = vmatpush2.bf16.msra.mxu0 0
    %2074 = vmatprep.mubr.bf16.mxu0 0
    %2075 = vmatmul.mubr.bf16.gmra.mxu0 %v440
    %v2076 = vpop.f32.mrf.mxu0
    %v2077 = vadd.f32 0.0, %v2076
    %v2078 = vpop.f32.mrf.mxu0
    %v2079 = vadd.f32 0.0, %v2078
    %v2080 = vpop.f32.mrf.mxu0
    %v2081 = vpop.f32.mrf.mxu0
    %2082 = vdwg.mxu0
    %2084 = vrot.lane.b32.xlu0 %v2041, 32
    %v2085 = vpop.permute.xlu0 %2084
    %v2087 = vsel %vm127, %v2085, 0
    %2089 = vmatprep.subr.bf16.mxu0 0
    %2090 = vmatpush1.bf16.msra.mxu0 0
    %2091 = vmatprep.subr.bf16.mxu0 0
    %2092 = vmatpush1.bf16.msra.mxu0 0
    %2093 = vmatprep.subr.bf16.mxu0 0
    %2094 = vmatpush1.bf16.msra.mxu0 0
    %2095 = vmatprep.subr.bf16.mxu0 0
    %2096 = vmatpush1.bf16.msra.mxu0 0
    %2097 = vmatprep.subr.bf16.mxu0 0
    %2098 = vmatpush1.bf16.msra.mxu0 0
    %2099 = vmatprep.subr.bf16.mxu0 0
    %2100 = vmatpush1.bf16.msra.mxu0 0
    %2101 = vmatprep.subr.bf16.mxu0 %v1498
    %2102 = vmatpush1.bf16.msra.mxu0 %v1497
    %2103 = vmatprep.subr.bf16.mxu0 %v1496
    %2104 = vmatpush1.bf16.msra.mxu0 %v1495
    %2105 = vmatprep.subr.bf16.mxu0 0
    %2106 = vmatpush2.bf16.msra.mxu0 0
    %2107 = vmatprep.subr.bf16.mxu0 0
    %2108 = vmatpush2.bf16.msra.mxu0 0
    %2109 = vmatprep.subr.bf16.mxu0 0
    %2110 = vmatpush2.bf16.msra.mxu0 0
    %2111 = vmatprep.subr.bf16.mxu0 0
    %2112 = vmatpush2.bf16.msra.mxu0 0
    %2113 = vmatprep.subr.bf16.mxu0 0
    %2114 = vmatpush2.bf16.msra.mxu0 0
    %2115 = vmatprep.subr.bf16.mxu0 0
    %2116 = vmatpush2.bf16.msra.mxu0 0
    %2117 = vmatprep.subr.bf16.mxu0 0
    %2118 = vmatpush2.bf16.msra.mxu0 0
    %2119 = vmatprep.subr.bf16.mxu0 0
    %2120 = vmatpush2.bf16.msra.mxu0 0
    %2121 = vmatprep.mubr.bf16.mxu0 0
    %2122 = vmatmul.mubr.bf16.gmra.mxu0 %v2087
    %v2123 = vpop.f32.mrf.mxu0
    %v2124 = vadd.f32 %v2077, %v2123
    %v2125 = vpop.f32.mrf.mxu0
    %v2126 = vadd.f32 %v2079, %v2125
    %v2127 = vpop.f32.mrf.mxu0
    %v2128 = vpop.f32.mrf.mxu0
    %2129 = vdwg.mxu0
    %v2130 = vadd.f32 %v2124, %v1547
    %v2131 = vadd.f32 %v2126, %v1551
    %v2132 = vxor.u32 %v1554, 2147483648
    %v2133 = vmul.f32 %v2132, 1.442695
    %v2134 = vpow.pop %v2133
    %v2135 = vadd.f32 %v2134, 1.0
    %v2136 = vrcp.pop %v2135
    %v2137 = vmul.f32 1.0, %v2136
    %v2138 = vtanh.pop %v1554
    %2140 = vrot.lane.b32.xlu0 %v2138, 64
    %v2141 = vpop.permute.xlu0 %2140
    %v2143 = vmul.f32 %v2137, %v2141
    %v2144 = vtanh.pop %v2143
    %2146 = vrot.lane.b32.xlu0 %v2144, 96
    %v2147 = vpop.permute.xlu0 %2146
    %v2149 = vmul.f32 %v2137, %v2147
    %v2150 = vpack.c.bf16 %v2149, %v2149
    %2152 = vrot.lane.b32.xlu0 %v2150, 32
    %v2153 = vpop.permute.xlu0 %2152
    %v2158 = vunpack.c.l.b16 %v1411
    %v2159 = vunpack.c.l.b16 %v1412
    %v2160 = vunpack.c.l.b16 %v1413
    %v2161 = vunpack.c.l.b16 %v1414
    %v2162 = vpack.c.b16 %v2159, %v2158
    %v2163 = vpack.c.b16 %v2161, %v2160
    %v2167 = vsel %vm127, %v2153, 0
    %2169 = vmatprep.subr.bf16.mxu0 0
    %2170 = vmatpush1.bf16.msra.mxu0 0
    %2171 = vmatprep.subr.bf16.mxu0 0
    %2172 = vmatpush1.bf16.msra.mxu0 0
    %2173 = vmatprep.subr.bf16.mxu0 0
    %2174 = vmatpush1.bf16.msra.mxu0 0
    %2175 = vmatprep.subr.bf16.mxu0 0
    %2176 = vmatpush1.bf16.msra.mxu0 0
    %2177 = vmatprep.subr.bf16.mxu0 0
    %2178 = vmatpush1.bf16.msra.mxu0 0
    %2179 = vmatprep.subr.bf16.mxu0 0
    %2180 = vmatpush1.bf16.msra.mxu0 0
    %2181 = vmatprep.subr.bf16.mxu0 0
    %2182 = vmatpush1.bf16.msra.mxu0 %v2163
    %2183 = vmatprep.subr.bf16.mxu0 0
    %2184 = vmatpush1.bf16.msra.mxu0 %v2162
    %2185 = vmatprep.subr.bf16.mxu0 0
    %2186 = vmatpush2.bf16.msra.mxu0 0
    %2187 = vmatprep.subr.bf16.mxu0 0
    %2188 = vmatpush2.bf16.msra.mxu0 0
    %2189 = vmatprep.subr.bf16.mxu0 0
    %2190 = vmatpush2.bf16.msra.mxu0 0
    %2191 = vmatprep.subr.bf16.mxu0 0
    %2192 = vmatpush2.bf16.msra.mxu0 0
    %2193 = vmatprep.subr.bf16.mxu0 0
    %2194 = vmatpush2.bf16.msra.mxu0 0
    %2195 = vmatprep.subr.bf16.mxu0 0
    %2196 = vmatpush2.bf16.msra.mxu0 0
    %2197 = vmatprep.subr.bf16.mxu0 0
    %2198 = vmatpush2.bf16.msra.mxu0 0
    %2199 = vmatprep.subr.bf16.mxu0 0
    %2200 = vmatpush2.bf16.msra.mxu0 0
    %2201 = vmatprep.mubr.bf16.mxu0 0
    %2202 = vmatmul.mubr.bf16.gmra.mxu0 %v2167
    %v2203 = vpop.f32.mrf.mxu0
    %v2204 = vadd.f32 0.0, %v2203
    %v2205 = vpop.f32.mrf.mxu0
    %v2206 = vpop.f32.mrf.mxu0
    %v2207 = vpop.f32.mrf.mxu0
    %2208 = vdwg.mxu0
    %v2209 = vadd.f32 %v1635, %v2204
    %v2210 = vxor.u32 %v2209, 2147483648
    %v2211 = vmul.f32 %v2210, 1.442695
    %v2212 = vpow.pop %v2211
    %v2213 = vadd.f32 %v2212, 1.0
    %v2214 = vrcp.pop %v2213
    %v2215 = vmul.f32 1.0, %v2214
    %v2216 = vtanh.pop %v2209
    %2218 = vrot.lane.b32.xlu0 %v2143, 32
    %v2219 = vpop.permute.xlu0 %2218
    %v2221 = vmul.f32 %v2215, %v2219
    %2223 = vrot.lane.b32.xlu0 %v2216, 64
    %v2224 = vpop.permute.xlu0 %2223
    %v2226 = vmul.f32 %v2215, %v2224
    %2228 = vrot.lane.b32.xlu0 %v2226, 32
    %v2229 = vpop.permute.xlu0 %2228
    %v2231 = vadd.f32 %v2221, %v2229
    %v2232 = vtanh.pop %v2231
    %2234 = vrot.lane.b32.xlu0 %v2232, 64
    %v2235 = vpop.permute.xlu0 %2234
    %v2237 = vmul.f32 %v2215, %v2235
    %v2238 = vpack.c.bf16 %v2237, %v2237
    %2240 = vrot.lane.b32.xlu0 %v2238, 32
    %v2241 = vpop.permute.xlu0 %2240
    %v2243 = vsel %vm127, %v2241, 0
    %2245 = vmatprep.subr.bf16.mxu0 0
    %2246 = vmatpush1.bf16.msra.mxu0 0
    %2247 = vmatprep.subr.bf16.mxu0 0
    %2248 = vmatpush1.bf16.msra.mxu0 0
    %2249 = vmatprep.subr.bf16.mxu0 0
    %2250 = vmatpush1.bf16.msra.mxu0 0
    %2251 = vmatprep.subr.bf16.mxu0 0
    %2252 = vmatpush1.bf16.msra.mxu0 0
    %2253 = vmatprep.subr.bf16.mxu0 0
    %2254 = vmatpush1.bf16.msra.mxu0 0
    %2255 = vmatprep.subr.bf16.mxu0 0
    %2256 = vmatpush1.bf16.msra.mxu0 0
    %2257 = vmatprep.subr.bf16.mxu0 0
    %2258 = vmatpush1.bf16.msra.mxu0 %v2163
    %2259 = vmatprep.subr.bf16.mxu0 0
    %2260 = vmatpush1.bf16.msra.mxu0 %v2162
    %2261 = vmatprep.subr.bf16.mxu0 0
    %2262 = vmatpush2.bf16.msra.mxu0 0
    %2263 = vmatprep.subr.bf16.mxu0 0
    %2264 = vmatpush2.bf16.msra.mxu0 0
    %2265 = vmatprep.subr.bf16.mxu0 0
    %2266 = vmatpush2.bf16.msra.mxu0 0
    %2267 = vmatprep.subr.bf16.mxu0 0
    %2268 = vmatpush2.bf16.msra.mxu0 0
    %2269 = vmatprep.subr.bf16.mxu0 0
    %2270 = vmatpush2.bf16.msra.mxu0 0
    %2271 = vmatprep.subr.bf16.mxu0 0
    %2272 = vmatpush2.bf16.msra.mxu0 0
    %2273 = vmatprep.subr.bf16.mxu0 0
    %2274 = vmatpush2.bf16.msra.mxu0 0
    %2275 = vmatprep.subr.bf16.mxu0 0
    %2276 = vmatpush2.bf16.msra.mxu0 0
    %2277 = vmatprep.mubr.bf16.mxu0 0
    %2278 = vmatmul.mubr.bf16.gmra.mxu0 %v2243
    %v2279 = vpop.f32.mrf.mxu0
    %v2280 = vadd.f32 0.0, %v2279
    %v2281 = vpop.f32.mrf.mxu0
    %v2282 = vpop.f32.mrf.mxu0
    %v2283 = vpop.f32.mrf.mxu0
    %2284 = vdwg.mxu0
    %v2285 = vadd.f32 %v1716, %v2280
    %v2286 = vxor.u32 %v2285, 2147483648
    %v2287 = vmul.f32 %v2286, 1.442695
    %v2288 = vpow.pop %v2287
    %v2289 = vadd.f32 %v2288, 1.0
    %v2290 = vrcp.pop %v2289
    %v2291 = vmul.f32 1.0, %v2290
    %v2292 = vtanh.pop %v2285
    %v2293 = vmul.f32 %v2291, %v2231
    %2295 = vrot.lane.b32.xlu0 %v2292, 64
    %v2296 = vpop.permute.xlu0 %2295
    %v2298 = vmul.f32 %v2291, %v2296
    %2300 = vrot.lane.b32.xlu0 %v2298, 32
    %v2301 = vpop.permute.xlu0 %2300
    %v2303 = vadd.f32 %v2293, %v2301
    %v2304 = vtanh.pop %v2303
    %2306 = vrot.lane.b32.xlu0 %v2304, 64
    %v2307 = vpop.permute.xlu0 %2306
    %v2309 = vmul.f32 %v2291, %v2307
    %v2310 = vpack.c.bf16 %v2309, %v2309
    %2312 = vrot.lane.b32.xlu0 %v2310, 32
    %v2313 = vpop.permute.xlu0 %2312
    %v2315 = vsel %vm127, %v2313, 0
    %2317 = vmatprep.subr.bf16.mxu0 0
    %2318 = vmatpush1.bf16.msra.mxu0 0
    %2319 = vmatprep.subr.bf16.mxu0 0
    %2320 = vmatpush1.bf16.msra.mxu0 0
    %2321 = vmatprep.subr.bf16.mxu0 0
    %2322 = vmatpush1.bf16.msra.mxu0 0
    %2323 = vmatprep.subr.bf16.mxu0 0
    %2324 = vmatpush1.bf16.msra.mxu0 0
    %2325 = vmatprep.subr.bf16.mxu0 0
    %2326 = vmatpush1.bf16.msra.mxu0 0
    %2327 = vmatprep.subr.bf16.mxu0 0
    %2328 = vmatpush1.bf16.msra.mxu0 0
    %2329 = vmatprep.subr.bf16.mxu0 0
    %2330 = vmatpush1.bf16.msra.mxu0 %v2163
    %2331 = vmatprep.subr.bf16.mxu0 0
    %2332 = vmatpush1.bf16.msra.mxu0 %v2162
    %2333 = vmatprep.subr.bf16.mxu0 0
    %2334 = vmatpush2.bf16.msra.mxu0 0
    %2335 = vmatprep.subr.bf16.mxu0 0
    %2336 = vmatpush2.bf16.msra.mxu0 0
    %2337 = vmatprep.subr.bf16.mxu0 0
    %2338 = vmatpush2.bf16.msra.mxu0 0
    %2339 = vmatprep.subr.bf16.mxu0 0
    %2340 = vmatpush2.bf16.msra.mxu0 0
    %2341 = vmatprep.subr.bf16.mxu0 0
    %2342 = vmatpush2.bf16.msra.mxu0 0
    %2343 = vmatprep.subr.bf16.mxu0 0
    %2344 = vmatpush2.bf16.msra.mxu0 0
    %2345 = vmatprep.subr.bf16.mxu0 0
    %2346 = vmatpush2.bf16.msra.mxu0 0
    %2347 = vmatprep.subr.bf16.mxu0 0
    %2348 = vmatpush2.bf16.msra.mxu0 0
    %2349 = vmatprep.mubr.bf16.mxu0 0
    %2350 = vmatmul.mubr.bf16.gmra.mxu0 %v2315
    %v2351 = vpop.f32.mrf.mxu0
    %v2352 = vadd.f32 0.0, %v2351
    %v2353 = vpop.f32.mrf.mxu0
    %v2354 = vpop.f32.mrf.mxu0
    %v2355 = vpop.f32.mrf.mxu0
    %2356 = vdwg.mxu0
    %v2357 = vadd.f32 %v1797, %v2352
    %v2358 = vxor.u32 %v2357, 2147483648
    %v2359 = vmul.f32 %v2358, 1.442695
    %v2360 = vpow.pop %v2359
    %v2361 = vadd.f32 %v2360, 1.0
    %v2362 = vrcp.pop %v2361
    %v2363 = vmul.f32 1.0, %v2362
    %v2364 = vtanh.pop %v2357
    %v2365 = vmul.f32 %v2363, %v2303
    %2367 = vrot.lane.b32.xlu0 %v2364, 64
    %v2368 = vpop.permute.xlu0 %2367
    %v2370 = vmul.f32 %v2363, %v2368
    %2372 = vrot.lane.b32.xlu0 %v2370, 32
    %v2373 = vpop.permute.xlu0 %2372
    %v2375 = vadd.f32 %v2365, %v2373
    %v2376 = vtanh.pop %v2375
    %2378 = vrot.lane.b32.xlu0 %v2376, 64
    %v2379 = vpop.permute.xlu0 %2378
    %v2381 = vmul.f32 %v2363, %v2379
    %v2382 = vpack.c.bf16 %v2381, %v2381
    %2384 = vrot.lane.b32.xlu0 %v2382, 32
    %v2385 = vpop.permute.xlu0 %2384
    %v2387 = vsel %vm127, %v2385, 0
    %2389 = vmatprep.subr.bf16.mxu0 0
    %2390 = vmatpush1.bf16.msra.mxu0 0
    %2391 = vmatprep.subr.bf16.mxu0 0
    %2392 = vmatpush1.bf16.msra.mxu0 0
    %2393 = vmatprep.subr.bf16.mxu0 0
    %2394 = vmatpush1.bf16.msra.mxu0 0
    %2395 = vmatprep.subr.bf16.mxu0 0
    %2396 = vmatpush1.bf16.msra.mxu0 0
    %2397 = vmatprep.subr.bf16.mxu0 0
    %2398 = vmatpush1.bf16.msra.mxu0 0
    %2399 = vmatprep.subr.bf16.mxu0 0
    %2400 = vmatpush1.bf16.msra.mxu0 0
    %2401 = vmatprep.subr.bf16.mxu0 0
    %2402 = vmatpush1.bf16.msra.mxu0 %v2163
    %2403 = vmatprep.subr.bf16.mxu0 0
    %2404 = vmatpush1.bf16.msra.mxu0 %v2162
    %2405 = vmatprep.subr.bf16.mxu0 0
    %2406 = vmatpush2.bf16.msra.mxu0 0
    %2407 = vmatprep.subr.bf16.mxu0 0
    %2408 = vmatpush2.bf16.msra.mxu0 0
    %2409 = vmatprep.subr.bf16.mxu0 0
    %2410 = vmatpush2.bf16.msra.mxu0 0
    %2411 = vmatprep.subr.bf16.mxu0 0
    %2412 = vmatpush2.bf16.msra.mxu0 0
    %2413 = vmatprep.subr.bf16.mxu0 0
    %2414 = vmatpush2.bf16.msra.mxu0 0
    %2415 = vmatprep.subr.bf16.mxu0 0
    %2416 = vmatpush2.bf16.msra.mxu0 0
    %2417 = vmatprep.subr.bf16.mxu0 0
    %2418 = vmatpush2.bf16.msra.mxu0 0
    %2419 = vmatprep.subr.bf16.mxu0 0
    %2420 = vmatpush2.bf16.msra.mxu0 0
    %2421 = vmatprep.mubr.bf16.mxu0 0
    %2422 = vmatmul.mubr.bf16.gmra.mxu0 %v2387
    %v2423 = vpop.f32.mrf.mxu0
    %v2424 = vadd.f32 0.0, %v2423
    %v2425 = vpop.f32.mrf.mxu0
    %v2426 = vpop.f32.mrf.mxu0
    %v2427 = vpop.f32.mrf.mxu0
    %2428 = vdwg.mxu0
    %v2429 = vadd.f32 %v1878, %v2424
    %v2430 = vxor.u32 %v2429, 2147483648
    %v2431 = vmul.f32 %v2430, 1.442695
    %v2432 = vpow.pop %v2431
    %v2433 = vadd.f32 %v2432, 1.0
    %v2434 = vrcp.pop %v2433
    %v2435 = vmul.f32 1.0, %v2434
    %v2436 = vtanh.pop %v2429
    %v2437 = vmul.f32 %v2435, %v2375
    %2439 = vrot.lane.b32.xlu0 %v2436, 64
    %v2440 = vpop.permute.xlu0 %2439
    %v2442 = vmul.f32 %v2435, %v2440
    %2444 = vrot.lane.b32.xlu0 %v2442, 32
    %v2445 = vpop.permute.xlu0 %2444
    %v2447 = vadd.f32 %v2437, %v2445
    %v2448 = vtanh.pop %v2447
    %2450 = vrot.lane.b32.xlu0 %v2448, 64
    %v2451 = vpop.permute.xlu0 %2450
    %v2453 = vmul.f32 %v2435, %v2451
    %v2454 = vpack.c.bf16 %v2453, %v2453
    %2456 = vrot.lane.b32.xlu0 %v2454, 32
    %v2457 = vpop.permute.xlu0 %2456
    %v2459 = vsel %vm127, %v2457, 0
    %2461 = vmatprep.subr.bf16.mxu0 0
    %2462 = vmatpush1.bf16.msra.mxu0 0
    %2463 = vmatprep.subr.bf16.mxu0 0
    %2464 = vmatpush1.bf16.msra.mxu0 0
    %2465 = vmatprep.subr.bf16.mxu0 0
    %2466 = vmatpush1.bf16.msra.mxu0 0
    %2467 = vmatprep.subr.bf16.mxu0 0
    %2468 = vmatpush1.bf16.msra.mxu0 0
    %2469 = vmatprep.subr.bf16.mxu0 0
    %2470 = vmatpush1.bf16.msra.mxu0 0
    %2471 = vmatprep.subr.bf16.mxu0 0
    %2472 = vmatpush1.bf16.msra.mxu0 0
    %2473 = vmatprep.subr.bf16.mxu0 0
    %2474 = vmatpush1.bf16.msra.mxu0 %v2163
    %2475 = vmatprep.subr.bf16.mxu0 0
    %2476 = vmatpush1.bf16.msra.mxu0 %v2162
    %2477 = vmatprep.subr.bf16.mxu0 0
    %2478 = vmatpush2.bf16.msra.mxu0 0
    %2479 = vmatprep.subr.bf16.mxu0 0
    %2480 = vmatpush2.bf16.msra.mxu0 0
    %2481 = vmatprep.subr.bf16.mxu0 0
    %2482 = vmatpush2.bf16.msra.mxu0 0
    %2483 = vmatprep.subr.bf16.mxu0 0
    %2484 = vmatpush2.bf16.msra.mxu0 0
    %2485 = vmatprep.subr.bf16.mxu0 0
    %2486 = vmatpush2.bf16.msra.mxu0 0
    %2487 = vmatprep.subr.bf16.mxu0 0
    %2488 = vmatpush2.bf16.msra.mxu0 0
    %2489 = vmatprep.subr.bf16.mxu0 0
    %2490 = vmatpush2.bf16.msra.mxu0 0
    %2491 = vmatprep.subr.bf16.mxu0 0
    %2492 = vmatpush2.bf16.msra.mxu0 0
    %2493 = vmatprep.mubr.bf16.mxu0 0
    %2494 = vmatmul.mubr.bf16.gmra.mxu0 %v2459
    %v2495 = vpop.f32.mrf.mxu0
    %v2496 = vadd.f32 0.0, %v2495
    %v2497 = vpop.f32.mrf.mxu0
    %v2498 = vpop.f32.mrf.mxu0
    %v2499 = vpop.f32.mrf.mxu0
    %2500 = vdwg.mxu0
    %v2501 = vadd.f32 %v1959, %v2496
    %v2502 = vxor.u32 %v2501, 2147483648
    %v2503 = vmul.f32 %v2502, 1.442695
    %v2504 = vpow.pop %v2503
    %v2505 = vadd.f32 %v2504, 1.0
    %v2506 = vrcp.pop %v2505
    %v2507 = vmul.f32 1.0, %v2506
    %v2508 = vtanh.pop %v2501
    %v2509 = vmul.f32 %v2507, %v2447
    %2511 = vrot.lane.b32.xlu0 %v2508, 64
    %v2512 = vpop.permute.xlu0 %2511
    %v2514 = vmul.f32 %v2507, %v2512
    %2516 = vrot.lane.b32.xlu0 %v2514, 32
    %v2517 = vpop.permute.xlu0 %2516
    %v2519 = vadd.f32 %v2509, %v2517
    %v2520 = vtanh.pop %v2519
    %2522 = vrot.lane.b32.xlu0 %v2520, 64
    %v2523 = vpop.permute.xlu0 %2522
    %v2525 = vmul.f32 %v2507, %v2523
    %v2526 = vpack.c.bf16 %v2525, %v2525
    %2528 = vrot.lane.b32.xlu0 %v2526, 32
    %v2529 = vpop.permute.xlu0 %2528
    %v2531 = vsel %vm127, %v2529, 0
    %2533 = vmatprep.subr.bf16.mxu0 0
    %2534 = vmatpush1.bf16.msra.mxu0 0
    %2535 = vmatprep.subr.bf16.mxu0 0
    %2536 = vmatpush1.bf16.msra.mxu0 0
    %2537 = vmatprep.subr.bf16.mxu0 0
    %2538 = vmatpush1.bf16.msra.mxu0 0
    %2539 = vmatprep.subr.bf16.mxu0 0
    %2540 = vmatpush1.bf16.msra.mxu0 0
    %2541 = vmatprep.subr.bf16.mxu0 0
    %2542 = vmatpush1.bf16.msra.mxu0 0
    %2543 = vmatprep.subr.bf16.mxu0 0
    %2544 = vmatpush1.bf16.msra.mxu0 0
    %2545 = vmatprep.subr.bf16.mxu0 0
    %2546 = vmatpush1.bf16.msra.mxu0 %v2163
    %2547 = vmatprep.subr.bf16.mxu0 0
    %2548 = vmatpush1.bf16.msra.mxu0 %v2162
    %2549 = vmatprep.subr.bf16.mxu0 0
    %2550 = vmatpush2.bf16.msra.mxu0 0
    %2551 = vmatprep.subr.bf16.mxu0 0
    %2552 = vmatpush2.bf16.msra.mxu0 0
    %2553 = vmatprep.subr.bf16.mxu0 0
    %2554 = vmatpush2.bf16.msra.mxu0 0
    %2555 = vmatprep.subr.bf16.mxu0 0
    %2556 = vmatpush2.bf16.msra.mxu0 0
    %2557 = vmatprep.subr.bf16.mxu0 0
    %2558 = vmatpush2.bf16.msra.mxu0 0
    %2559 = vmatprep.subr.bf16.mxu0 0
    %2560 = vmatpush2.bf16.msra.mxu0 0
    %2561 = vmatprep.subr.bf16.mxu0 0
    %2562 = vmatpush2.bf16.msra.mxu0 0
    %2563 = vmatprep.subr.bf16.mxu0 0
    %2564 = vmatpush2.bf16.msra.mxu0 0
    %2565 = vmatprep.mubr.bf16.mxu0 0
    %2566 = vmatmul.mubr.bf16.gmra.mxu0 %v2531
    %v2567 = vpop.f32.mrf.mxu0
    %v2568 = vadd.f32 0.0, %v2567
    %v2569 = vpop.f32.mrf.mxu0
    %v2570 = vpop.f32.mrf.mxu0
    %v2571 = vpop.f32.mrf.mxu0
    %2572 = vdwg.mxu0
    %v2573 = vadd.f32 %v2040, %v2568
    %v2574 = vxor.u32 %v2573, 2147483648
    %v2575 = vmul.f32 %v2574, 1.442695
    %v2576 = vpow.pop %v2575
    %v2577 = vadd.f32 %v2576, 1.0
    %v2578 = vrcp.pop %v2577
    %v2579 = vmul.f32 1.0, %v2578
    %v2580 = vtanh.pop %v2573
    %v2581 = vmul.f32 %v2579, %v2519
    %2583 = vrot.lane.b32.xlu0 %v2580, 64
    %v2584 = vpop.permute.xlu0 %2583
    %v2586 = vmul.f32 %v2579, %v2584
    %2588 = vrot.lane.b32.xlu0 %v2586, 32
    %v2589 = vpop.permute.xlu0 %2588
    %v2591 = vadd.f32 %v2581, %v2589
    %v2592 = vtanh.pop %v2591
    %2594 = vrot.lane.b32.xlu0 %v2592, 64
    %v2595 = vpop.permute.xlu0 %2594
    %v2597 = vmul.f32 %v2579, %v2595
    %v2598 = vpack.c.bf16 %v2597, %v2597
    %2600 = vrot.lane.b32.xlu0 %v2598, 32
    %v2601 = vpop.permute.xlu0 %2600
    %v2603 = vsel %vm127, %v2601, 0
    %2605 = vmatprep.subr.bf16.mxu0 0
    %2606 = vmatpush1.bf16.msra.mxu0 0
    %2607 = vmatprep.subr.bf16.mxu0 0
    %2608 = vmatpush1.bf16.msra.mxu0 0
    %2609 = vmatprep.subr.bf16.mxu0 0
    %2610 = vmatpush1.bf16.msra.mxu0 0
    %2611 = vmatprep.subr.bf16.mxu0 0
    %2612 = vmatpush1.bf16.msra.mxu0 0
    %2613 = vmatprep.subr.bf16.mxu0 0
    %2614 = vmatpush1.bf16.msra.mxu0 0
    %2615 = vmatprep.subr.bf16.mxu0 0
    %2616 = vmatpush1.bf16.msra.mxu0 0
    %2617 = vmatprep.subr.bf16.mxu0 0
    %2618 = vmatpush1.bf16.msra.mxu0 %v2163
    %2619 = vmatprep.subr.bf16.mxu0 0
    %2620 = vmatpush1.bf16.msra.mxu0 %v2162
    %2621 = vmatprep.subr.bf16.mxu0 0
    %2622 = vmatpush2.bf16.msra.mxu0 0
    %2623 = vmatprep.subr.bf16.mxu0 0
    %2624 = vmatpush2.bf16.msra.mxu0 0
    %2625 = vmatprep.subr.bf16.mxu0 0
    %2626 = vmatpush2.bf16.msra.mxu0 0
    %2627 = vmatprep.subr.bf16.mxu0 0
    %2628 = vmatpush2.bf16.msra.mxu0 0
    %2629 = vmatprep.subr.bf16.mxu0 0
    %2630 = vmatpush2.bf16.msra.mxu0 0
    %2631 = vmatprep.subr.bf16.mxu0 0
    %2632 = vmatpush2.bf16.msra.mxu0 0
    %2633 = vmatprep.subr.bf16.mxu0 0
    %2634 = vmatpush2.bf16.msra.mxu0 0
    %2635 = vmatprep.subr.bf16.mxu0 0
    %2636 = vmatpush2.bf16.msra.mxu0 0
    %2637 = vmatprep.mubr.bf16.mxu0 0
    %2638 = vmatmul.mubr.bf16.gmra.mxu0 %v2603
    %v2639 = vpop.f32.mrf.mxu0
    %v2640 = vadd.f32 0.0, %v2639
    %v2641 = vpop.f32.mrf.mxu0
    %v2642 = vpop.f32.mrf.mxu0
    %v2643 = vpop.f32.mrf.mxu0
    %2644 = vdwg.mxu0
    %v2645 = vadd.f32 %v2130, %v2640
    %v2646 = vxor.u32 %v2645, 2147483648
    %v2647 = vmul.f32 %v2646, 1.442695
    %v2648 = vpow.pop %v2647
    %v2649 = vadd.f32 %v2648, 1.0
    %v2650 = vrcp.pop %v2649
    %v2651 = vmul.f32 1.0, %v2650
    %v2652 = vtanh.pop %v2645
    %v2653 = vmul.f32 %v2651, %v2591
    %2655 = vrot.lane.b32.xlu0 %v2652, 64
    %v2656 = vpop.permute.xlu0 %2655
    %v2658 = vmul.f32 %v2651, %v2656
    %2660 = vrot.lane.b32.xlu0 %v2658, 32
    %v2661 = vpop.permute.xlu0 %2660
    %v2663 = vadd.f32 %v2653, %v2661
    %v2664 = vtanh.pop %v2663
    %2666 = vrot.lane.b32.xlu0 %v2664, 64
    %v2667 = vpop.permute.xlu0 %2666
    %v2669 = vmul.f32 %v2651, %v2667
    %v2670 = vxor.u32 %v2131, 2147483648
    %v2671 = vmul.f32 %v2670, 1.442695
    %v2672 = vpow.pop %v2671
    %v2673 = vadd.f32 %v2672, 1.0
    %v2674 = vrcp.pop %v2673
    %v2675 = vmul.f32 1.0, %v2674
    %v2676 = vtanh.pop %v2131
    %2678 = vrot.lane.b32.xlu0 %v2676, 64
    %v2679 = vpop.permute.xlu0 %2678
    %v2681 = vmul.f32 %v2675, %v2679
    %v2682 = vtanh.pop %v2681
    %2684 = vrot.lane.b32.xlu0 %v2682, 96
    %v2685 = vpop.permute.xlu0 %2684
    %v2687 = vmul.f32 %v2675, %v2685
    %v2688 = vld [vmem:[%s11] sm:$0xf]
    %v2689 = vld [vmem:[%s11 + $0x4] sm:$0xf]
    %v2690 = vld [vmem:[%s11 + $0x8] sm:$0xf]
    %v2691 = vld [vmem:[%s11 + $0xc] sm:$0xf]
    %v2692 = vld [vmem:[%s12] sm:$0xf]
    %v2693 = vld [vmem:[%s12 + $0x4] sm:$0xf]
    %v2694 = vld [vmem:[%s12 + $0x8] sm:$0xf]
    %v2695 = vld [vmem:[%s12 + $0xc] sm:$0xf]
    %v2696 = vld [vmem:[%s13] sm:$0x1]
    %v2697 = vpack.c.bf16 %v2669, %v2669
    %v2698 = vpack.c.bf16 %v2687, %v2687
    %2700 = vrot.lane.b32.xlu0 %v2698, 32
    %v2701 = vpop.permute.xlu0 %2700
    %v2706 = vunpack.c.l.b16 %v2692
    %v2707 = vunpack.c.l.b16 %v2693
    %v2708 = vunpack.c.l.b16 %v2694
    %v2709 = vunpack.c.l.b16 %v2695
    %v2710 = vpack.c.b16 %v2707, %v2706
    %v2711 = vpack.c.b16 %v2709, %v2708
    %v2715 = vsel %vm127, %v2701, 0
    %2717 = vmatprep.subr.bf16.mxu0 0
    %2718 = vmatpush1.bf16.msra.mxu0 0
    %2719 = vmatprep.subr.bf16.mxu0 0
    %2720 = vmatpush1.bf16.msra.mxu0 0
    %2721 = vmatprep.subr.bf16.mxu0 0
    %2722 = vmatpush1.bf16.msra.mxu0 0
    %2723 = vmatprep.subr.bf16.mxu0 0
    %2724 = vmatpush1.bf16.msra.mxu0 0
    %2725 = vmatprep.subr.bf16.mxu0 0
    %2726 = vmatpush1.bf16.msra.mxu0 0
    %2727 = vmatprep.subr.bf16.mxu0 0
    %2728 = vmatpush1.bf16.msra.mxu0 0
    %2729 = vmatprep.subr.bf16.mxu0 0
    %2730 = vmatpush1.bf16.msra.mxu0 %v2711
    %2731 = vmatprep.subr.bf16.mxu0 0
    %2732 = vmatpush1.bf16.msra.mxu0 %v2710
    %2733 = vmatprep.subr.bf16.mxu0 0
    %2734 = vmatpush2.bf16.msra.mxu0 0
    %2735 = vmatprep.subr.bf16.mxu0 0
    %2736 = vmatpush2.bf16.msra.mxu0 0
    %2737 = vmatprep.subr.bf16.mxu0 0
    %2738 = vmatpush2.bf16.msra.mxu0 0
    %2739 = vmatprep.subr.bf16.mxu0 0
    %2740 = vmatpush2.bf16.msra.mxu0 0
    %2741 = vmatprep.subr.bf16.mxu0 0
    %2742 = vmatpush2.bf16.msra.mxu0 0
    %2743 = vmatprep.subr.bf16.mxu0 0
    %2744 = vmatpush2.bf16.msra.mxu0 0
    %2745 = vmatprep.subr.bf16.mxu0 0
    %2746 = vmatpush2.bf16.msra.mxu0 0
    %2747 = vmatprep.subr.bf16.mxu0 0
    %2748 = vmatpush2.bf16.msra.mxu0 0
    %2749 = vmatprep.mubr.bf16.mxu0 0
    %2750 = vmatmul.mubr.bf16.gmra.mxu0 %v2715
    %v2751 = vpop.f32.mrf.mxu0
    %v2752 = vadd.f32 0.0, %v2751
    %v2753 = vpop.f32.mrf.mxu0
    %v2754 = vpop.f32.mrf.mxu0
    %v2755 = vpop.f32.mrf.mxu0
    %2756 = vdwg.mxu0
    %2758 = vrot.lane.b32.xlu0 %v2697, 32
    %v2759 = vpop.permute.xlu0 %2758
    %v2764 = vunpack.c.l.b16 %v2688
    %v2765 = vunpack.c.l.b16 %v2689
    %v2766 = vunpack.c.l.b16 %v2690
    %v2767 = vunpack.c.l.b16 %v2691
    %v2768 = vpack.c.b16 %v2765, %v2764
    %v2769 = vpack.c.b16 %v2767, %v2766
    %v2773 = vsel %vm127, %v2759, 0
    %2775 = vmatprep.subr.bf16.mxu0 0
    %2776 = vmatpush1.bf16.msra.mxu0 0
    %2777 = vmatprep.subr.bf16.mxu0 0
    %2778 = vmatpush1.bf16.msra.mxu0 0
    %2779 = vmatprep.subr.bf16.mxu0 0
    %2780 = vmatpush1.bf16.msra.mxu0 0
    %2781 = vmatprep.subr.bf16.mxu0 0
    %2782 = vmatpush1.bf16.msra.mxu0 0
    %2783 = vmatprep.subr.bf16.mxu0 0
    %2784 = vmatpush1.bf16.msra.mxu0 0
    %2785 = vmatprep.subr.bf16.mxu0 0
    %2786 = vmatpush1.bf16.msra.mxu0 0
    %2787 = vmatprep.subr.bf16.mxu0 0
    %2788 = vmatpush1.bf16.msra.mxu0 %v2769
    %2789 = vmatprep.subr.bf16.mxu0 0
    %2790 = vmatpush1.bf16.msra.mxu0 %v2768
    %2791 = vmatprep.subr.bf16.mxu0 0
    %2792 = vmatpush2.bf16.msra.mxu0 0
    %2793 = vmatprep.subr.bf16.mxu0 0
    %2794 = vmatpush2.bf16.msra.mxu0 0
    %2795 = vmatprep.subr.bf16.mxu0 0
    %2796 = vmatpush2.bf16.msra.mxu0 0
    %2797 = vmatprep.subr.bf16.mxu0 0
    %2798 = vmatpush2.bf16.msra.mxu0 0
    %2799 = vmatprep.subr.bf16.mxu0 0
    %2800 = vmatpush2.bf16.msra.mxu0 0
    %2801 = vmatprep.subr.bf16.mxu0 0
    %2802 = vmatpush2.bf16.msra.mxu0 0
    %2803 = vmatprep.subr.bf16.mxu0 0
    %2804 = vmatpush2.bf16.msra.mxu0 0
    %2805 = vmatprep.subr.bf16.mxu0 0
    %2806 = vmatpush2.bf16.msra.mxu0 0
    %2807 = vmatprep.mubr.bf16.mxu0 0
    %2808 = vmatmul.mubr.bf16.gmra.mxu0 %v2773
    %v2809 = vpop.f32.mrf.mxu0
    %v2810 = vadd.f32 %v2752, %v2809
    %v2811 = vpop.f32.mrf.mxu0
    %v2812 = vpop.f32.mrf.mxu0
    %v2813 = vpop.f32.mrf.mxu0
    %2814 = vdwg.mxu0
    %v2816 = vlaneseq
    %v2817 = vshrl.u32 %v2816, 7
    %v2818 = vsub.s32 0, %v2817
    %v2819 = vrot.slane %v2696, %v2818
    %v2821 = vadd.f32 %v2810, %v2819
    %vm2822 = vcmask 25600
    %2823 = vst.msk [vmem:[#allocation2] sm:$0x3] %vm2822, %v2821
    // Predicated region
    $region58: #{lstm_classifier_forward.1} parent=1 // pred_check
      _
    $region59: #{lstm_classifier_forward.1} parent=1 // pred_check_branch
      %2825 = sbr.rel (0) target = $region61
    $region60: #{lstm_classifier_forward.1} parent=1 // pred_region
      %s2827 = ssub.s32 32, 32
      %2828 = vsyncadd [#allocation3], %s2827
      %s2830 = sshll.u32 [#allocation2], 4
      %s2831 = int_to_ptr.vmem [resolvable:$true] %s2830
      %2833 = dma.vmem_to_hbm [thread:$0]  %s2831, 32, %s14, [#allocation3]
    $region61: #{lstm_classifier_forward.1} parent=1 // pred_fallthru
      _
    // Predicated region
    $region62: #{lstm_classifier_forward.1} parent=1 // pred_check
      _
    $region63: #{lstm_classifier_forward.1} parent=1 // pred_check_branch
      %2835 = sbr.rel (0) target = $region65
    $region64: #{lstm_classifier_forward.1} parent=1 // pred_region
      %2836 = dma.done [#allocation3], 32
    $region65: #{lstm_classifier_forward.1} parent=1 // pred_fallthru
      _
    %2837 = vsyncpa [#allocation3], 1

</llo_original>
